<compile_context>
chip_gen: v7x
topology: tpu7x:2x2x1
jax: 0.10.0
libtpu: 0.0.40
codegen_flags: <defaults>
</compile_context>

<pallas_src>
import functools
import math

import jax
import jax.numpy as jnp
from jax import lax
from jax.experimental import pallas as pl
from jax.experimental.pallas import tpu as pltpu

BN_EPS = 1e-5


# ----------------------------- hardware-aware constants -----------------------------

def _query_vmem_bytes():
    try:
        return int(pltpu.get_tpu_info().vmem_capacity_bytes)
    except Exception:
        return 64 * 1024 * 1024


_VMEM_BYTES = _query_vmem_bytes()
_VMEM_LIMIT = int(min(_VMEM_BYTES // 2, 64 * 1024 * 1024))

_TS_MAX = 1024     # M (batch*spatial) tile: kept large on every chip (matmul block < ~20 MiB)
_TK_MAX = 640      # K tile
_TN_MAX = 1536     # N tile: wide so project/expand convs re-stream the activation <= 2x
_DW_TC_MAX = 256   # depthwise channel tile


# ----------------------------- small helpers -----------------------------

def _p128(c):
    return ((c + 127) // 128) * 128


def _pick_tile(n, max_tile):
    """Largest tile <= max_tile that exactly divides n (n is a 128-multiple when > max_tile)."""
    if n <= max_tile:
        return n
    for m in range(max_tile // 128, 0, -1):
        if n % (m * 128) == 0:
            return m * 128
    return 128


def _sigmoid(x):
    # EUP exp + EUP approx reciprocal: keeps epilogues off the VALU iterative-divide path.
    return pl.reciprocal(1.0 + jnp.exp(-x), approx=True)


def _apply_act(y, act):
    if act == "silu":
        return y * _sigmoid(y)
    if act == "sigmoid":
        return _sigmoid(y)
    return y


def _vmem_spec():
    return pl.BlockSpec(memory_space=pltpu.MemorySpace.VMEM)


# ----------------------------- shared tiled matmul kernel -----------------------------

def _mm_kernel(*refs, act, has_gate, has_res):
    """o = act((sum_k (gate*x) @ w) * scale + bias [+ res]); f32 accumulator over the K grid."""
    i = 0
    x_ref = refs[i]; i += 1
    gate_ref = None
    if has_gate:
        gate_ref = refs[i]; i += 1
    w_ref, s_ref, b_ref = refs[i], refs[i + 1], refs[i + 2]; i += 3
    res_ref = None
    if has_res:
        res_ref = refs[i]; i += 1
    o_ref, acc_ref = refs[i], refs[i + 1]

    kk = pl.program_id(3)

    @pl.when(kk == 0)
    def _():
        acc_ref[...] = jnp.zeros_like(acc_ref)

    x = x_ref[0]                                    # (TS, TK) bf16
    if has_gate:
        x = x * gate_ref[0]                         # fused SE rescale, (1, TK) broadcast
    acc_ref[...] += jnp.dot(x, w_ref[...], preferred_element_type=jnp.float32)

    @pl.when(kk == pl.num_programs(3) - 1)
    def _():
        y = acc_ref[...] * s_ref[...] + b_ref[...]  # folded eval-mode BatchNorm (f32)
        if has_res:
            y = y + res_ref[0].astype(jnp.float32)
        o_ref[0] = _apply_act(y, act).astype(o_ref.dtype)


def _matmul_call(x3, w, scale, bias, *, act, gate=None, res=None):
    """x3: (B,S,K) bf16; w: (K,N) bf16; scale/bias: (1,N) f32; gate: (B,1,K); res: (B,S,N).
    Un-gated calls are batch-merged into a single M axis for full-height MXU tiles."""
    b0, s0, k0 = x3.shape
    merged = gate is None
    if merged:
        x3 = x3.reshape(1, b0 * s0, k0)
        if res is not None:
            res = res.reshape(1, b0 * s0, res.shape[-1])
    b, s, k = x3.shape
    n = w.shape[1]
    ts = s if s <= _TS_MAX else _TS_MAX
    tk = _pick_tile(k, _TK_MAX)
    tn = _pick_tile(n, _TN_MAX)
    gs = pl.cdiv(s, ts)                 # edge tiles: OOB reads unused, OOB writes masked
    grid = (b, gs, n // tn, k // tk)

    in_specs = [pl.BlockSpec((1, ts, tk), lambda bb, ss, nn, kk: (bb, ss, kk))]
    operands = [x3]
    if gate is not None:
        in_specs.append(pl.BlockSpec((1, 1, tk), lambda bb, ss, nn, kk: (bb, 0, kk)))
        operands.append(gate)
    in_specs += [
        pl.BlockSpec((tk, tn), lambda bb, ss, nn, kk: (kk, nn)),
        pl.BlockSpec((1, tn), lambda bb, ss, nn, kk: (0, nn)),
        pl.BlockSpec((1, tn), lambda bb, ss, nn, kk: (0, nn)),
    ]
    operands += [w, scale, bias]
    if res is not None:
        in_specs.append(pl.BlockSpec((1, ts, tn), lambda bb, ss, nn, kk: (bb, ss, nn)))
        operands.append(res)

    # HBM traffic including re-streaming: x read once per N tile, w once per (batch, M tile).
    bytes_accessed = (2 * x3.size * (n // tn) + 2 * w.size * b * gs + 2 * b * s * n + 16 * n)
    if gate is not None:
        bytes_accessed += 2 * gate.size * gs * (n // tn)
    if res is not None:
        bytes_accessed += 2 * res.size
    flops = 2 * b * gs * ts * n * k

    out = pl.pallas_call(
        functools.partial(_mm_kernel, act=act,
                          has_gate=gate is not None, has_res=res is not None),
        out_shape=jax.ShapeDtypeStruct((b, s, n), jnp.bfloat16),
        grid_spec=pltpu.PrefetchScalarGridSpec(
            num_scalar_prefetch=0,
            grid=grid,
            in_specs=in_specs,
            out_specs=pl.BlockSpec((1, ts, tn), lambda bb, ss, nn, kk: (bb, ss, nn)),
            scratch_shapes=[pltpu.VMEM((ts, tn), jnp.float32)],
        ),
        compiler_params=pltpu.CompilerParams(
            dimension_semantics=("parallel", "parallel", "parallel", "arbitrary"),
            vmem_limit_bytes=_VMEM_LIMIT,
        ),
        cost_estimate=pl.CostEstimate(flops=flops, transcendentals=b * s * n,
                                      bytes_accessed=bytes_accessed),
    )(*operands)
    if merged:
        out = out.reshape(b0, s0, n)
    return out


# ----------------------------- matmul-based op wrappers -----------------------------

@functools.partial(jax.jit, static_argnames=("act",))
def conv1x1_bn(x, w, scale, bias, act):
    nb, h, wd, c = x.shape
    out = _matmul_call(x.reshape(nb, h * wd, c), w, scale, bias, act=act)
    return out.reshape(nb, h, wd, w.shape[1])


@jax.jit
def project_conv(x, gate, w, scale, bias):
    nb, h, wd, c = x.shape
    out = _matmul_call(x.reshape(nb, h * wd, c), w, scale, bias, act="none",
                       gate=gate.reshape(nb, 1, c))
    return out.reshape(nb, h, wd, w.shape[1])


@jax.jit
def project_conv_res(x, gate, w, scale, bias, res):
    nb, h, wd, c = x.shape
    cout = w.shape[1]
    out = _matmul_call(x.reshape(nb, h * wd, c), w, scale, bias, act="none",
                       gate=gate.reshape(nb, 1, c), res=res.reshape(nb, h * wd, cout))
    return out.reshape(nb, h, wd, cout)


@functools.partial(jax.jit, static_argnames=("act",))
def linear(x2, w, b, act):
    scale = jnp.ones((1, w.shape[1]), jnp.float32)
    out = _matmul_call(x2[None], w, scale, b, act=act)
    return out[0]


@jax.jit
def stem_conv(x, w, scale, bias):
    """3x3 / stride-2 / pad-1 stem conv + folded BN + SiLU via the shared MXU matmul."""
    # TODO(synk): the 9-tap patch tensor is still materialized by XLA (~2.25x the input);
    # an in-kernel halo'd patch build would remove that HBM round trip entirely.
    nb, h, wd, c = x.shape
    cout = w.shape[1]
    kdim = w.shape[0]                       # 27 real taps padded to 32 lanes (was 128)
    xp = jnp.pad(x, ((0, 0), (1, 1), (1, 1), (0, 0)))
    ho, wo = (h + 1) // 2, (wd + 1) // 2
    taps = [xp[:, dh:dh + 2 * ho - 1:2, dw:dw + 2 * wo - 1:2, :]
            for dh in range(3) for dw in range(3)]
    taps.append(jnp.zeros((nb, ho, wo, kdim - 9 * c), x.dtype))
    patches = jnp.concatenate(taps, axis=-1).reshape(nb, ho * wo, kdim)
    out = _matmul_call(patches, w, scale, bias, act="silu")
    return out.reshape(nb, ho, wo, cout)


# ----------------------------- head 1x1 conv + fused global average pool -----------------------------

def _head_gap_kernel(x_ref, w_ref, s_ref, b_ref, p_ref, acc_ref, *, inv_hw, s_total, ts):
    ss = pl.program_id(2)
    kk = pl.program_id(3)

    @pl.when(kk == 0)
    def _():
        acc_ref[...] = jnp.zeros_like(acc_ref)

    acc_ref[...] += jnp.dot(x_ref[0], w_ref[...], preferred_element_type=jnp.float32)

    @pl.when(jnp.logical_and(ss == 0, kk == 0))
    def _():
        p_ref[...] = jnp.zeros_like(p_ref)

    @pl.when(kk == pl.num_programs(3) - 1)
    def _():
        y = acc_ref[...] * s_ref[...] + b_ref[...]          # folded eval-mode BatchNorm
        y = y * _sigmoid(y)                                  # SiLU
        if s_total % ts != 0:                                # mask rows of the partial edge tile
            rows = lax.broadcasted_iota(jnp.int32, y.shape, 0) + ss * ts
            y = jnp.where(rows < s_total, y, 0.0)
        p_ref[0] += jnp.sum(y, axis=0, keepdims=True) * inv_hw


@jax.jit
def head_conv_gap(x, w, scale, bias):
    """Head 1x1 conv + BN + SiLU with global average pooling fused into the epilogue.
    Only the (N, 2560) pooled vector is written; the full head activation never hits HBM."""
    nb, h, wd, c = x.shape
    s = h * wd
    n = w.shape[1]
    k = w.shape[0]
    ts = s if s <= _TS_MAX else _TS_MAX
    tk = _pick_tile(k, _TK_MAX)
    tn = _pick_tile(n, _TN_MAX)
    gs = pl.cdiv(s, ts)
    grid = (nb, n // tn, gs, k // tk)       # pooled output resident across the inner (ss, kk)
    x3 = x.reshape(nb, s, c)
    bytes_accessed = 2 * x3.size * (n // tn) + 2 * w.size * nb * gs + 4 * nb * n
    pooled = pl.pallas_call(
        functools.partial(_head_gap_kernel, inv_hw=1.0 / s, s_total=s, ts=ts),
        out_shape=jax.ShapeDtypeStruct((nb, 1, n), jnp.float32),
        grid_spec=pltpu.PrefetchScalarGridSpec(
            num_scalar_prefetch=0,
            grid=grid,
            in_specs=[
                pl.BlockSpec((1, ts, tk), lambda bb, nn, ss, kk: (bb, ss, kk)),
                pl.BlockSpec((tk, tn), lambda bb, nn, ss, kk: (kk, nn)),
                pl.BlockSpec((1, tn), lambda bb, nn, ss, kk: (0, nn)),
                pl.BlockSpec((1, tn), lambda bb, nn, ss, kk: (0, nn)),
            ],
            out_specs=pl.BlockSpec((1, 1, tn), lambda bb, nn, ss, kk: (bb, 0, nn)),
            scratch_shapes=[pltpu.VMEM((ts, tn), jnp.float32)],
        ),
        compiler_params=pltpu.CompilerParams(
            dimension_semantics=("parallel", "parallel", "arbitrary", "arbitrary"),
            vmem_limit_bytes=_VMEM_LIMIT,
        ),
        cost_estimate=pl.CostEstimate(flops=2 * nb * gs * ts * n * k,
                                      transcendentals=nb * s * n,
                                      bytes_accessed=bytes_accessed),
    )(x3, w, scale, bias)
    return pooled.reshape(nb, n)


# ----------------------------- depthwise conv (+ fused SE squeeze) -----------------------------

def _dw_kernel(x_ref, w_ref, s_ref, b_ref, y_ref, p_ref, *, k, stride, ho, wo):
    """Depthwise kxk conv (direct strided output via phase-decimated input) + BN + SiLU, plus
    per-(batch, channel) sums of the activated output (SE squeeze) as a fused epilogue.
    Each tap is loaded straight from the ref — no whole-block f32 temporary."""
    tc = x_ref.shape[-1]
    acc = jnp.zeros((ho, wo, tc), jnp.float32)
    for dh in range(k):
        for dw in range(k):
            p = (dh % stride) * stride + (dw % stride)
            oh, ow = dh // stride, dw // stride
            tap = x_ref[p, pl.ds(oh, ho), pl.ds(ow, wo), :].astype(jnp.float32)
            acc = acc + tap * w_ref[dh * k + dw]
    y = acc * s_ref[0] + b_ref[0]                   # folded eval-mode BatchNorm
    y = y * _sigmoid(y)                             # SiLU
    y_ref[0] = y.astype(y_ref.dtype)
    p_ref[0, 0] = jnp.sum(jnp.sum(y, axis=0), axis=0)


@functools.partial(jax.jit, static_argnames=("k", "stride", "pt", "pb"))
def _dw_call(x, w, scale, bias, k, stride, pt, pb):
    """Depthwise conv + BN + SiLU + SE-squeeze sums on a (possibly row-chunked) input slab.
    pt/pb: zero rows to add above/below (this chunk's share of the conv padding)."""
    nb, h, wd, c = x.shape
    pad = (k - 1) // 2
    xp = jnp.pad(x, ((0, 0), (pt, pb), (pad, pad), (0, 0)))
    hp, wp = h + pt + pb, wd + 2 * pad
    ho = (hp - k) // stride + 1
    wo = (wp - k) // stride + 1
    if stride == 1:
        phases = xp
        npf = 1
        hph, wph = hp, wp
    else:
        # TODO(synk): this phase-decimation is still an XLA-side copy of the padded activation;
        # in-kernel strided (pl.ds stride=2) tap loads would remove it.
        hp2, wp2 = -(-hp // 2) * 2, -(-wp // 2) * 2
        xp = jnp.pad(xp, ((0, 0), (0, hp2 - hp), (0, wp2 - wp), (0, 0)))
        phases = jnp.stack([xp[:, ph::2, pw::2, :] for ph in range(2) for pw in range(2)],
                           axis=1)
        npf = 4
        hph, wph = hp2 // 2, wp2 // 2
        phases = phases.reshape(nb * npf, hph, wph, c)
    tc = _pick_tile(c, _DW_TC_MAX)

    y, psum = pl.pallas_call(
        functools.partial(_dw_kernel, k=k, stride=stride, ho=ho, wo=wo),
        out_shape=(jax.ShapeDtypeStruct((nb, ho, wo, c), jnp.bfloat16),
                   jax.ShapeDtypeStruct((nb, 1, c), jnp.float32)),
        grid_spec=pltpu.PrefetchScalarGridSpec(
            num_scalar_prefetch=0,
            grid=(nb, c // tc),
            in_specs=[
                pl.BlockSpec((npf, hph, wph, tc), lambda b, cb: (b, 0, 0, cb)),
                pl.BlockSpec((k * k, tc), lambda b, cb: (0, cb)),
                pl.BlockSpec((1, tc), lambda b, cb: (0, cb)),
                pl.BlockSpec((1, tc), lambda b, cb: (0, cb)),
            ],
            out_specs=[
                pl.BlockSpec((1, ho, wo, tc), lambda b, cb: (b, 0, 0, cb)),
                pl.BlockSpec((1, 1, tc), lambda b, cb: (b, 0, cb)),
            ],
        ),
        compiler_params=pltpu.CompilerParams(
            dimension_semantics=("parallel", "parallel"),
            vmem_limit_bytes=_VMEM_LIMIT,
        ),
    )(phases, w, scale, bias)
    return y, psum


def _dw_rows_per_chunk(ho, wo, wp, tc, k, stride, budget):
    """Output rows per chunk so the double-buffered depthwise blocks stay under `budget`."""
    def vmem_bytes(r):
        in_rows = r * stride + (k - stride)
        return 2 * 2 * in_rows * wp * tc + 2 * 2 * r * wo * tc + 4 * r * wo * tc
    r = ho
    while r > 8 and vmem_bytes(r) > budget:
        r -= 8
    return max(r, 8)


def depthwise_conv_bn_silu_pool(x, w, scale, bias, k, stride):
    """Depthwise conv + BN + SiLU + SE-squeeze; row-chunks the spatial extent when the
    whole-spatial block would overflow VMEM (real-resolution inputs, esp. v7x 64 MiB)."""
    nb, h, wd, c = x.shape
    pad = (k - 1) // 2
    ho = (h + 2 * pad - k) // stride + 1
    wp = wd + 2 * pad
    wo = (wp - k) // stride + 1
    tc = _pick_tile(c, _DW_TC_MAX)
    r = _dw_rows_per_chunk(ho, wo, wp, tc, k, stride, budget=_VMEM_LIMIT // 2)
    if r >= ho:
        return _dw_call(x, w, scale, bias, k=k, stride=stride, pt=pad, pb=pad)
    # TODO(synk): wrapper-level row chunks still cost one slice copy per chunk; an in-kernel
    # halo'd row pipeline (manual DMA) would stream the activation exactly once.
    n_chunks = -(-ho // r)
    r = -(-ho // n_chunks)
    ys, ps = [], None
    for ci in range(n_chunks):
        o0 = ci * r
        o1 = min(ho, o0 + r)
        i0 = o0 * stride - pad
        i1 = (o1 - 1) * stride - pad + k
        pt = max(0, -i0)
        pb = max(0, i1 - h)
        xs = x[:, max(0, i0):min(h, i1), :, :]
        yc, pc = _dw_call(xs, w, scale, bias, k=k, stride=stride, pt=pt, pb=pb)
        ys.append(yc)
        ps = pc if ps is None else ps + pc
    return jnp.concatenate(ys, axis=1), ps


# ----------------------------- SE gate -----------------------------

def _se_kernel(p_ref, w1_ref, b1_ref, w2_ref, b2_ref, g_ref, *, inv_hw):
    pooled = p_ref[...] * inv_hw                                     # (NB, Cexp) f32
    z = jnp.dot(pooled.astype(jnp.bfloat16), w1_ref[...],
                preferred_element_type=jnp.float32) + b1_ref[...]
    z = z * _sigmoid(z)                                              # SiLU
    g = jnp.dot(z.astype(jnp.bfloat16), w2_ref[...],
                preferred_element_type=jnp.float32) + b2_ref[...]
    g_ref[...] = _sigmoid(g).astype(g_ref.dtype)


@functools.partial(jax.jit, static_argnames=("inv_hw",))
def se_gate(psum, w1, b1, w2, b2, inv_hw):
    nb, _, c = psum.shape
    return pl.pallas_call(
        functools.partial(_se_kernel, inv_hw=inv_hw),
        out_shape=jax.ShapeDtypeStruct((nb, c), jnp.bfloat16),
        in_specs=[_vmem_spec()] * 5,
        out_specs=_vmem_spec(),
        compiler_params=pltpu.CompilerParams(vmem_limit_bytes=_VMEM_LIMIT),
    )(psum.reshape(nb, c), w1, b1, w2, b2)


# ----------------------------- EfficientNet-B7 config & params -----------------------------

# torchvision efficientnet_b7 (width_mult=2.0, depth_mult=3.1) scaled stage config:
# (expand_ratio, kernel, stride, in_ch, out_ch, num_layers)
B7_STAGES = [
    (1, 3, 1, 64, 32, 4),
    (6, 3, 2, 32, 48, 7),
    (6, 5, 2, 48, 80, 7),
    (6, 3, 2, 80, 160, 10),
    (6, 5, 1, 160, 224, 10),
    (6, 5, 2, 224, 384, 13),
    (6, 3, 1, 384, 640, 4),
]
STEM_OUT = 64
HEAD_OUT = 2560


def _normal(key, shape, fan_in):
    return jax.random.normal(key, shape, jnp.float32) * (1.0 / math.sqrt(fan_in))


def _mm_weight(key, cin, cout, cin_pad=None):
    """Fan-in-scaled weight, zero-padded to lane-dense sizes (padded rows/cols are zero), bf16."""
    cin_pad = _p128(cin) if cin_pad is None else cin_pad
    w = _normal(key, (cin, cout), cin)
    w = jnp.pad(w, ((0, cin_pad - cin), (0, _p128(cout) - cout)))
    return w.astype(jnp.bfloat16)


def _bn_fold(c):
    """Eval-mode BatchNorm folded into scale/bias (gamma=1, beta=0, rm=0, rv=1 synthetic stats)."""
    cp = _p128(c)
    scale = jnp.zeros((1, cp), jnp.float32).at[:, :c].set(1.0 / math.sqrt(1.0 + BN_EPS))
    bias = jnp.zeros((1, cp), jnp.float32)
    return scale, bias


def init_params(key):
    keys = iter(jax.random.split(key, 1024))
    params = {}
    s, b = _bn_fold(STEM_OUT)
    params["stem"] = dict(w=_mm_weight(next(keys), 27, STEM_OUT, cin_pad=32), scale=s, bias=b)

    blocks = []
    for (e, k, st, cin, cout, n_layers) in B7_STAGES:
        for i in range(n_layers):
            bin_ = cin if i == 0 else cout
            stride = st if i == 0 else 1
            exp = bin_ * e
            sq = max(1, bin_ // 4)
            exp_p = _p128(exp)
            blk = dict(meta=(k, stride, (stride == 1 and bin_ == cout)))
            if e != 1:
                sc, bi = _bn_fold(exp)
                blk["expand"] = dict(w=_mm_weight(next(keys), bin_, exp), scale=sc, bias=bi)
            scd, bid = _bn_fold(exp)
            wd = _normal(next(keys), (k * k, exp), k * k)
            blk["dw"] = dict(w=jnp.pad(wd, ((0, 0), (0, exp_p - exp))), scale=scd, bias=bid)
            blk["se"] = dict(w1=_mm_weight(next(keys), exp, sq),
                             b1=jnp.zeros((1, _p128(sq)), jnp.float32),
                             w2=_mm_weight(next(keys), sq, exp),
                             b2=jnp.zeros((1, exp_p), jnp.float32))
            scp, bip = _bn_fold(cout)
            blk["project"] = dict(w=_mm_weight(next(keys), exp, cout), scale=scp, bias=bip)
            blocks.append(blk)
    params["blocks"] = blocks

    s, b = _bn_fold(HEAD_OUT)
    params["head"] = dict(w=_mm_weight(next(keys), 640, HEAD_OUT), scale=s, bias=b)
    params["fc1"] = dict(w=_mm_weight(next(keys), HEAD_OUT, 512),
                         b=jnp.zeros((1, 512), jnp.float32))
    params["fc2"] = dict(w=_mm_weight(next(keys), 512, 1),
                         b=jnp.zeros((1, _p128(1)), jnp.float32))
    return params


# ----------------------------- forward pass -----------------------------

def mbconv(x, blk):
    k, stride, use_res = blk["meta"]
    inp = x
    if "expand" in blk:
        x = conv1x1_bn(x, blk["expand"]["w"], blk["expand"]["scale"], blk["expand"]["bias"],
                       act="silu")
    x, psum = depthwise_conv_bn_silu_pool(x, blk["dw"]["w"], blk["dw"]["scale"],
                                          blk["dw"]["bias"], k=k, stride=stride)
    ho, wo = x.shape[1], x.shape[2]
    gate = se_gate(psum, blk["se"]["w1"], blk["se"]["b1"], blk["se"]["w2"], blk["se"]["b2"],
                   inv_hw=1.0 / (ho * wo))
    # TODO(synk): StochasticDepth is identity in eval mode; training-mode row-drop not implemented.
    if use_res:
        return project_conv_res(x, gate, blk["project"]["w"], blk["project"]["scale"],
                                blk["project"]["bias"], inp)
    return project_conv(x, gate, blk["project"]["w"], blk["project"]["scale"],
                        blk["project"]["bias"])


def efficientnet_forward(params, x_nchw):
    # NCHW (PyTorch) -> NHWC internally (channels on the TPU lane axis); bf16 activations.
    x = jnp.transpose(x_nchw, (0, 2, 3, 1)).astype(jnp.bfloat16)
    p = params
    x = stem_conv(x, p["stem"]["w"], p["stem"]["scale"], p["stem"]["bias"])
    for blk in p["blocks"]:
        x = mbconv(x, blk)
    pooled = head_conv_gap(x, p["head"]["w"], p["head"]["scale"], p["head"]["bias"])  # (N, 2560)
    x = linear(pooled.astype(jnp.bfloat16), p["fc1"]["w"], p["fc1"]["b"], act="none")
    # TODO(synk): Dropout(0.5) is identity in eval mode; training-mode mask not implemented.
    x = linear(x, p["fc2"]["w"], p["fc2"]["b"], act="sigmoid")    # Linear(512, 1) + .sigmoid()
    return x[:, :1].astype(jnp.float32)                           # drop zero-padded output lanes


if __name__ == "__main__":
    key = jax.random.PRNGKey(0)
    pkey, xkey = jax.random.split(key)
    params = init_params(pkey)
    x = jax.random.normal(xkey, (2, 3, 64, 64), jnp.float32)      # small NCHW image batch
    out = efficientnet_forward(params, x)
    out = jax.block_until_ready(out)
    assert out.shape == (2, 1) and out.dtype == jnp.float32
    print("KERNEL_OK")
</pallas_src>

<mosaic_0001>
module attributes {stable_mosaic.version = 11 : i64} {
  func.func @_mm_kernel(%arg0: i32, %arg1: i32, %arg2: i32, %arg3: i32, %arg4: memref<1x1024x32xbf16, #tpu.memory_space<vmem>>, %arg5: memref<32x128xbf16, #tpu.memory_space<vmem>>, %arg6: memref<1x128xf32, #tpu.memory_space<vmem>>, %arg7: memref<1x128xf32, #tpu.memory_space<vmem>>, %arg8: memref<1x1024x128xbf16, #tpu.memory_space<vmem>>, %arg9: memref<1024x128xf32, #tpu.memory_space<vmem>>) attributes {dimension_semantics = [#tpu.dimension_semantics<parallel>, #tpu.dimension_semantics<parallel>, #tpu.dimension_semantics<parallel>, #tpu.dimension_semantics<arbitrary>], iteration_bounds = array<i64: 1, 2, 1, 1>, scalar_prefetch = 0 : i64, scratch_operands = 1 : i64, tpu.core_type = #tpu.core_type<tc>, window_params = [{transform_indices = @transform_0, window_bounds = array<i64: 1, 1024, 32>}, {transform_indices = @transform_1, window_bounds = array<i64: 32, 128>}, {transform_indices = @transform_2, window_bounds = array<i64: 1, 128>}, {transform_indices = @transform_3, window_bounds = array<i64: 1, 128>}, {transform_indices = @transform_4, window_bounds = array<i64: 1, 1024, 128>}]} {
    %c0_i32 = arith.constant 0 : i32
    %0 = arith.cmpi eq, %arg3, %c0_i32 : i32
    %1 = arith.extui %0 : i1 to i32
    %c0_i32_0 = arith.constant 0 : i32
    %2 = arith.cmpi ne, %1, %c0_i32_0 : i32
    scf.if %2 {
      %cst_11 = arith.constant 0.000000e+00 : f32
      %13 = vector.broadcast %cst_11 : f32 to vector<1024x128xf32>
      %c0_12 = arith.constant 0 : index
      %c0_13 = arith.constant 0 : index
      %14 = vector.load %arg9[%c0_12, %c0_13] : memref<1024x128xf32, #tpu.memory_space<vmem>>, vector<1024x128xf32>
      tpu.vector_store %arg9[%c0_12, %c0_13], %13 {strides = array<i32>} : memref<1024x128xf32, #tpu.memory_space<vmem>>, vector<1024x128xf32>,
    } else {
    }
    %c0 = arith.constant 0 : index
    %c0_1 = arith.constant 0 : index
    %c0_2 = arith.constant 0 : index
    %3 = vector.load %arg4[%c0, %c0_1, %c0_2] : memref<1x1024x32xbf16, #tpu.memory_space<vmem>>, vector<1x1024x32xbf16>
    %4 = vector.shape_cast %3 : vector<1x1024x32xbf16> to vector<1024x32xbf16>
    %c0_3 = arith.constant 0 : index
    %c0_4 = arith.constant 0 : index
    %5 = vector.load %arg9[%c0_3, %c0_4] : memref<1024x128xf32, #tpu.memory_space<vmem>>, vector<1024x128xf32>
    %c0_5 = arith.constant 0 : index
    %c0_6 = arith.constant 0 : index
    %6 = vector.load %arg5[%c0_5, %c0_6] : memref<32x128xbf16, #tpu.memory_space<vmem>>, vector<32x128xbf16>
    %cst = arith.constant dense<0.000000e+00> : vector<1024x128xf32>
    %7 = tpu.matmul %4, %6, %cst {dimension_numbers = #tpu.dot_dimension_numbers<[1], [0], [0], [1], [0, 0, 1, 1], [], []>} : vector<1024x32xbf16>, vector<32x128xbf16>, vector<1024x128xf32> -> vector<1024x128xf32>
    %8 = arith.addf %5, %7 : vector<1024x128xf32>
    %c0_7 = arith.constant 0 : index
    %c0_8 = arith.constant 0 : index
    %9 = vector.load %arg9[%c0_7, %c0_8] : memref<1024x128xf32, #tpu.memory_space<vmem>>, vector<1024x128xf32>
    tpu.vector_store %arg9[%c0_7, %c0_8], %8 {strides = array<i32>} : memref<1024x128xf32, #tpu.memory_space<vmem>>, vector<1024x128xf32>,
    %c0_i32_9 = arith.constant 0 : i32
    %10 = arith.cmpi eq, %arg3, %c0_i32_9 : i32
    %11 = arith.extui %10 : i1 to i32
    %c0_i32_10 = arith.constant 0 : i32
    %12 = arith.cmpi ne, %11, %c0_i32_10 : i32
    scf.if %12 {
      %c0_11 = arith.constant 0 : index
      %c0_12 = arith.constant 0 : index
      %13 = vector.load %arg9[%c0_11, %c0_12] : memref<1024x128xf32, #tpu.memory_space<vmem>>, vector<1024x128xf32>
      %c0_13 = arith.constant 0 : index
      %c0_14 = arith.constant 0 : index
      %14 = vector.load %arg6[%c0_13, %c0_14] : memref<1x128xf32, #tpu.memory_space<vmem>>, vector<1x128xf32>
      %15 = vector.broadcast %14 : vector<1x128xf32> to vector<1024x128xf32>
      %16 = arith.mulf %13, %15 : vector<1024x128xf32>
      %c0_15 = arith.constant 0 : index
      %c0_16 = arith.constant 0 : index
      %17 = vector.load %arg7[%c0_15, %c0_16] : memref<1x128xf32, #tpu.memory_space<vmem>>, vector<1x128xf32>
      %18 = vector.broadcast %17 : vector<1x128xf32> to vector<1024x128xf32>
      %19 = arith.addf %16, %18 : vector<1024x128xf32>
      %cst_17 = arith.constant 0.000000e+00 : f32
      %20 = vector.broadcast %cst_17 : f32 to vector<1024x128xf32>
      %21 = arith.subf %20, %19 : vector<1024x128xf32>
      %22 = math.exp %21 : vector<1024x128xf32>
      %cst_18 = arith.constant 1.000000e+00 : f32
      %23 = vector.broadcast %cst_18 : f32 to vector<1024x128xf32>
      %24 = arith.addf %23, %22 : vector<1024x128xf32>
      %25 = tpu.reciprocal %24 {approx = true} : vector<1024x128xf32> -> vector<1024x128xf32>
      %26 = arith.mulf %19, %25 : vector<1024x128xf32>
      %27 = arith.truncf %26 : vector<1024x128xf32> to vector<1024x128xbf16>
      %c0_19 = arith.constant 0 : index
      %c0_20 = arith.constant 0 : index
      %c0_21 = arith.constant 0 : index
      %28 = vector.load %arg8[%c0_19, %c0_20, %c0_21] : memref<1x1024x128xbf16, #tpu.memory_space<vmem>>, vector<1x1024x128xbf16>
      %29 = vector.shape_cast %28 : vector<1x1024x128xbf16> to vector<1024x128xbf16>
      %30 = vector.shape_cast %27 : vector<1024x128xbf16> to vector<1x1024x128xbf16>
      tpu.vector_store %arg8[%c0_19, %c0_20, %c0_21], %30 {strides = array<i32>} : memref<1x1024x128xbf16, #tpu.memory_space<vmem>>, vector<1x1024x128xbf16>,
    } else {
    }
    return
  }
  func.func @transform_0(%arg0: i32, %arg1: i32, %arg2: i32, %arg3: i32) -> (i32, i32, i32) {
    %c0_i32 = arith.constant 0 : i32
    return %arg0, %arg1, %arg3 : i32, i32, i32
  }
  func.func @transform_1(%arg0: i32, %arg1: i32, %arg2: i32, %arg3: i32) -> (i32, i32) {
    %c0_i32 = arith.constant 0 : i32
    return %arg3, %arg2 : i32, i32
  }
  func.func @transform_2(%arg0: i32, %arg1: i32, %arg2: i32, %arg3: i32) -> (i32, i32) {
    %c0_i32 = arith.constant 0 : i32
    %c0_i32_0 = arith.constant 0 : i32
    return %c0_i32, %arg2 : i32, i32
  }
  func.func @transform_3(%arg0: i32, %arg1: i32, %arg2: i32, %arg3: i32) -> (i32, i32) {
    %c0_i32 = arith.constant 0 : i32
    %c0_i32_0 = arith.constant 0 : i32
    return %c0_i32, %arg2 : i32, i32
  }
  func.func @transform_4(%arg0: i32, %arg1: i32, %arg2: i32, %arg3: i32) -> (i32, i32, i32) {
    %c0_i32 = arith.constant 0 : i32
    return %arg0, %arg1, %arg2 : i32, i32, i32
  }
}

</mosaic_0001>

<llo_original>
// kernel: stem_conv.1
$region0: #{stem_conv.1}
  #allocation0 [shape = 'u32[]', space=smem, size = 0x4, offset = 0x4, fixed_abs, tag = 'smem constant byte address 0x4 - core index']
  #allocation1 [shape = 'u32[144,128]{1,0:T(1,128)}', space=vmem, size = 0x12000, scoped, tag = 'internal scratch']
  #allocation2 [shape = 'f32[1024,128]{1,0:T(8,128)}', space=vmem, size = 0x80000, scoped, tag = 'scratch operand']
  %s0 = inlined_call_operand.vmem [shape: bf16[1,2048,32], index: 0, kind: input, shape index: {}]
  %s1 = inlined_call_operand.vmem [shape: bf16[32,128], index: 1, kind: input, shape index: {}]
  %s2 = inlined_call_operand.vmem [shape: f32[1,128], index: 2, kind: input, shape index: {}]
  %s3 = inlined_call_operand.vmem [shape: f32[1,128], index: 3, kind: input, shape index: {}]
  %s4 = inlined_call_operand.hbm [shape: bf16[1,2048,128], index: 4, kind: output, shape index: {}]
  %s5 = sld [smem:[#allocation0]]
  $region57: #{stem_conv.1} parent=0
    _
  %s7 = ssub.s32 1, %s5
  %s8 = scalar_select 0, %s7, %s5
  $region1: #{stem_conv.1} parent=0
    #allocation3 [shape = 'u8[524288]{0}', space=vmem, size = 0x80000, scoped, tag = 'output window, operand 0']
    #allocation4 [shape = 's32[2]{0}', space=sflag, size = 0x8, scoped, tag = 'scoped memory for stem_conv.1']
    %9 = vsyncpa [#allocation4], 0
    %s10 = scalar_lea.sflag [#allocation4], 1
    %11 = vsyncpa %s10, 0
    loop: start=0, step=1, limit=4
    $region2: #{stem_conv.1} parent=1 // loop_pre_header
      _
    $region3: #{stem_conv.1} parent=1 // loop_header
      %s13 = sphi 0, %s17
      %p14 = scmp.ge.s32.totalorder %s13, 4
      %s20 = sphi 0, %s46
      %s21 = sphi 0, %s42
      %s22 = sphi 0, %s38
      %s23 = sphi 0, %s34
      %s24 = sphi 0, %s20
      %s25 = sphi 0, %s21
      %s26 = sphi 0, %s22
      %s27 = sphi 0, %s23
      %s28 = sphi 0, %s24
      %s29 = sphi 0, %s25
      %s30 = sphi 0, %s26
      %s31 = sphi 0, %s27
      %s53 = sphi 0, %s55
      %s56 = sphi 0, %s53
      %s57 = sphi 0, %s56
      %s73 = sphi 0, %s57
      %s81 = sphi 0, %s83
      %s84 = sphi 0, %s81
      %s85 = sphi 0, %s84
      %s101 = sphi 0, %s85
      %s107 = sphi 0, %s109
      %s110 = sphi 0, %s107
      %s111 = sphi 0, %s110
      %s127 = sphi 0, %s111
      %s133 = sphi 0, %s135
      %s136 = sphi 0, %s133
      %s137 = sphi 0, %s136
      %s153 = sphi 0, %s137
      %s163 = sphi 0, %s165
      %s166 = sphi 0, %s163
      %s167 = sphi 0, %s166
      %s183 = sphi 0, %s167
    $region4: #{stem_conv.1} parent=1 // loop_header_branch
      %16 = sbr.rel (%p14) target = $region8
    $region5: #{stem_conv.1} parent=1 // loop_body
      %s18 = ssub.s32 %s13, 1
      %s19 = ssub.s32 %s13, 2
      %s32 = sadd.s32 1, %s23
      %p33 = scmp.ge.s32.totalorder %s32, 1
      %s34 = scalar_select %p33, 0, %s32
      %s35 = sadd.s32 1, %s22
      %s36 = scalar_select %p33, %s35, %s22
      %p37 = scmp.ge.s32.totalorder %s36, 1
      %s38 = scalar_select %p37, 0, %s36
      %s39 = sadd.s32 1, %s21
      %s40 = scalar_select %p37, %s39, %s21
      %p41 = scmp.ge.s32.totalorder %s40, 2
      %s42 = scalar_select %p41, 0, %s40
      %s43 = sadd.s32 1, %s20
      %s44 = scalar_select %p41, %s43, %s20
      %p45 = scmp.ge.s32.totalorder %s44, 1
      %s46 = scalar_select %p45, 0, %s44
      %s47 = ssub.s32 %s20, %s46
      %s48 = ssub.s32 %s21, %s42
      %s49 = sor.u32 %s47, %s48
      %s50 = ssub.s32 %s23, %s34
      %s51 = sor.u32 %s49, %s50
      %p52 = scmp.eq.s32.totalorder %s51, 0
      %s54 = sadd.s32 %s53, 1
      %s55 = scalar_select %p52, %s53, %s54
      %p58 = pneg %p52
      %p59 = scmp.eq.s32.totalorder %s13, 1
      %p60 = por %p58, %p59
      %p61 = scmp.ne.s32.totalorder %s53, %s56
      %p62 = scmp.eq.s32.totalorder %s13, 0
      %p63 = por %p61, %p62
      %p64 = scmp.ne.s32.totalorder %s53, %s56
      %p65 = scmp.eq.s32.totalorder %s18, 1
      %p66 = por %p64, %p65
      %p67 = scmp.ne.s32.totalorder %s56, %s57
      %p68 = scmp.eq.s32.totalorder %s18, 0
      %p69 = por %p67, %p68
      %p70 = scmp.ne.s32.totalorder %s56, %s57
      %p71 = scmp.eq.s32.totalorder %s19, 1
      %p72 = por %p70, %p71
      %p74 = scmp.ne.s32.totalorder %s57, %s73
      %p75 = scmp.eq.s32.totalorder %s19, 0
      %p76 = por %p74, %p75
      %s77 = ssub.s32 %s23, %s34
      %s78 = ssub.s32 %s22, %s38
      %s79 = sor.u32 %s77, %s78
      %p80 = scmp.eq.s32.totalorder %s79, 0
      %s82 = sadd.s32 %s81, 1
      %s83 = scalar_select %p80, %s81, %s82
      %p86 = pneg %p80
      %p87 = scmp.eq.s32.totalorder %s13, 1
      %p88 = por %p86, %p87
      %p89 = scmp.ne.s32.totalorder %s81, %s84
      %p90 = scmp.eq.s32.totalorder %s13, 0
      %p91 = por %p89, %p90
      %p92 = scmp.ne.s32.totalorder %s81, %s84
      %p93 = scmp.eq.s32.totalorder %s18, 1
      %p94 = por %p92, %p93
      %p95 = scmp.ne.s32.totalorder %s84, %s85
      %p96 = scmp.eq.s32.totalorder %s18, 0
      %p97 = por %p95, %p96
      %p98 = scmp.ne.s32.totalorder %s84, %s85
      %p99 = scmp.eq.s32.totalorder %s19, 1
      %p100 = por %p98, %p99
      %p102 = scmp.ne.s32.totalorder %s85, %s101
      %p103 = scmp.eq.s32.totalorder %s19, 0
      %p104 = por %p102, %p103
      %s105 = ssub.s32 %s22, %s38
      %p106 = scmp.eq.s32.totalorder %s105, 0
      %s108 = sadd.s32 %s107, 1
      %s109 = scalar_select %p106, %s107, %s108
      %p112 = pneg %p106
      %p113 = scmp.eq.s32.totalorder %s13, 1
      %p114 = por %p112, %p113
      %p115 = scmp.ne.s32.totalorder %s107, %s110
      %p116 = scmp.eq.s32.totalorder %s13, 0
      %p117 = por %p115, %p116
      %p118 = scmp.ne.s32.totalorder %s107, %s110
      %p119 = scmp.eq.s32.totalorder %s18, 1
      %p120 = por %p118, %p119
      %p121 = scmp.ne.s32.totalorder %s110, %s111
      %p122 = scmp.eq.s32.totalorder %s18, 0
      %p123 = por %p121, %p122
      %p124 = scmp.ne.s32.totalorder %s110, %s111
      %p125 = scmp.eq.s32.totalorder %s19, 1
      %p126 = por %p124, %p125
      %p128 = scmp.ne.s32.totalorder %s111, %s127
      %p129 = scmp.eq.s32.totalorder %s19, 0
      %p130 = por %p128, %p129
      %s131 = ssub.s32 %s22, %s38
      %p132 = scmp.eq.s32.totalorder %s131, 0
      %s134 = sadd.s32 %s133, 1
      %s135 = scalar_select %p132, %s133, %s134
      %p138 = pneg %p132
      %p139 = scmp.eq.s32.totalorder %s13, 1
      %p140 = por %p138, %p139
      %p141 = scmp.ne.s32.totalorder %s133, %s136
      %p142 = scmp.eq.s32.totalorder %s13, 0
      %p143 = por %p141, %p142
      %p144 = scmp.ne.s32.totalorder %s133, %s136
      %p145 = scmp.eq.s32.totalorder %s18, 1
      %p146 = por %p144, %p145
      %p147 = scmp.ne.s32.totalorder %s136, %s137
      %p148 = scmp.eq.s32.totalorder %s18, 0
      %p149 = por %p147, %p148
      %p150 = scmp.ne.s32.totalorder %s136, %s137
      %p151 = scmp.eq.s32.totalorder %s19, 1
      %p152 = por %p150, %p151
      %p154 = scmp.ne.s32.totalorder %s137, %s153
      %p155 = scmp.eq.s32.totalorder %s19, 0
      %p156 = por %p154, %p155
      %s157 = ssub.s32 %s20, %s46
      %s158 = ssub.s32 %s21, %s42
      %s159 = sor.u32 %s157, %s158
      %s160 = ssub.s32 %s22, %s38
      %s161 = sor.u32 %s159, %s160
      %p162 = scmp.eq.s32.totalorder %s161, 0
      %s164 = sadd.s32 %s163, 1
      %s165 = scalar_select %p162, %s163, %s164
      %p168 = pneg %p162
      %p169 = scmp.eq.s32.totalorder %s13, 1
      %p170 = por %p168, %p169
      %p171 = scmp.ne.s32.totalorder %s163, %s166
      %p172 = scmp.eq.s32.totalorder %s13, 0
      %p173 = por %p171, %p172
      %p174 = scmp.ne.s32.totalorder %s163, %s166
      %p175 = scmp.eq.s32.totalorder %s18, 1
      %p176 = por %p174, %p175
      %p177 = scmp.ne.s32.totalorder %s166, %s167
      %p178 = scmp.eq.s32.totalorder %s18, 0
      %p179 = por %p177, %p178
      %p180 = scmp.ne.s32.totalorder %s166, %s167
      %p181 = scmp.eq.s32.totalorder %s19, 1
      %p182 = por %p180, %p181
      %p184 = scmp.ne.s32.totalorder %s167, %s183
      %p185 = scmp.eq.s32.totalorder %s19, 0
      %p186 = por %p184, %p185
      %p187 = scmp.le.s32.totalorder 1, %s13
      %p188 = scmp.lt.s32.totalorder %s13, 3
      %p189 = pnand %p187, %p188
      %p190 = pneg %p189
      // Predicated region
      $region9: #{stem_conv.1} parent=5 // pred_check
        _
      $region10: #{stem_conv.1} parent=5 // pred_check_branch
        %192 = sbr.rel (%p189) target = $region12
      $region11: #{stem_conv.1} parent=5 // pred_region
        %s193 = ssub.s32 %s13, 1
        // Predicated region
        $region13: #{stem_conv.1} parent=11 // pred_check
          %p194 = pneg %p97
        $region14: #{stem_conv.1} parent=11 // pred_check_branch
          %196 = sbr.rel (%p194) target = $region16
        $region15: #{stem_conv.1} parent=11 // pred_region
          %s197 = smul.u32 4, %s27
          %p198 = scmp.lt.s32.totalorder %s197, 3
          %s199 = scalar_select %p198, %s197, 3
          %p200 = scmp.lt.s32.totalorder %s26, 0
          %s201 = scalar_select %p200, %s26, 0
          %s202 = sadd.s32 %s201, %s199
          %s203 = smul.addr %s202, 4
          %s204 = scalar_lea.vmem %s1, %s203
          %s205 = smul.u32 4, %s27
        $region16: #{stem_conv.1} parent=11 // pred_fallthru
          _
        // Predicated region
        $region17: #{stem_conv.1} parent=11 // pred_check
          %p206 = pneg %p123
        $region18: #{stem_conv.1} parent=11 // pred_check_branch
          %208 = sbr.rel (%p206) target = $region20
        $region19: #{stem_conv.1} parent=11 // pred_region
          %p209 = scmp.lt.s32.totalorder %s26, 0
          %s210 = scalar_select %p209, %s26, 0
          %s211 = scalar_lea.vmem %s2, %s210
        $region20: #{stem_conv.1} parent=11 // pred_fallthru
          _
        // Predicated region
        $region21: #{stem_conv.1} parent=11 // pred_check
          %p212 = pneg %p149
        $region22: #{stem_conv.1} parent=11 // pred_check_branch
          %214 = sbr.rel (%p212) target = $region24
        $region23: #{stem_conv.1} parent=11 // pred_region
          %p215 = scmp.lt.s32.totalorder %s26, 0
          %s216 = scalar_select %p215, %s26, 0
          %s217 = scalar_lea.vmem %s3, %s216
        $region24: #{stem_conv.1} parent=11 // pred_fallthru
          _
      $region12: #{stem_conv.1} parent=5 // pred_fallthru
        _
      %p218 = scmp.lt.s32.totalorder %s13, 2
      // Predicated region
      $region25: #{stem_conv.1} parent=5 // pred_check
        %p219 = pneg %p218
      $region26: #{stem_conv.1} parent=5 // pred_check_branch
        %221 = sbr.rel (%p219) target = $region28
      $region27: #{stem_conv.1} parent=5 // pred_region
        // Predicated region
        $region29: #{stem_conv.1} parent=27 // pred_check
          %p222 = pneg %p63
        $region30: #{stem_conv.1} parent=27 // pred_check_branch
          %224 = sbr.rel (%p222) target = $region32
        $region31: #{stem_conv.1} parent=27 // pred_region
          %s225 = smul.u32 128, %s21
          %p226 = scmp.lt.s32.totalorder %s20, 0
          %s227 = scalar_select %p226, %s20, 0
          %p228 = scmp.lt.s32.totalorder %s225, 255
          %s229 = scalar_select %p228, %s225, 255
          %p230 = scmp.lt.s32.totalorder %s23, 0
          %s231 = scalar_select %p230, %s23, 0
          %s232 = sadd.s32 %s231, %s229
          %s233 = smul.addr %s227, 256
          %s234 = sadd.s32 %s232, %s233
          %s235 = smul.addr %s234, 4
          %s236 = scalar_lea.vmem %s0, %s235
          %s237 = smul.u32 128, %s21
        $region32: #{stem_conv.1} parent=27 // pred_fallthru
          _
      $region28: #{stem_conv.1} parent=5 // pred_fallthru
        _
      %p238 = scmp.le.s32.totalorder 1, %s13
      %p239 = scmp.lt.s32.totalorder %s13, 3
      %p240 = pnand %p238, %p239
      %p241 = pneg %p240
      // Predicated region
      $region33: #{stem_conv.1} parent=5 // pred_check
        _
      $region34: #{stem_conv.1} parent=5 // pred_check_branch
        %243 = sbr.rel (%p240) target = $region36
      $region35: #{stem_conv.1} parent=5 // pred_region
        %s244 = ssub.s32 %s13, 1
        %s245 = smul.u32 128, %s25
        %p246 = scmp.lt.s32.totalorder %s24, 0
        %s247 = scalar_select %p246, %s24, 0
        %p248 = scmp.lt.s32.totalorder %s245, 255
        %s249 = scalar_select %p248, %s245, 255
        %p250 = scmp.lt.s32.totalorder %s27, 0
        %s251 = scalar_select %p250, %s27, 0
        %s252 = sadd.s32 %s251, %s249
        %s253 = smul.addr %s247, 256
        %s254 = sadd.s32 %s252, %s253
        %s255 = smul.addr %s254, 4
        %s256 = scalar_lea.vmem %s0, %s255
        %p257 = pneg %p69
        %p258 = pneg %p66
        %s259 = smul.u32 4, %s27
        %p260 = scmp.lt.s32.totalorder %s259, 3
        %s261 = scalar_select %p260, %s259, 3
        %p262 = scmp.lt.s32.totalorder %s26, 0
        %s263 = scalar_select %p262, %s26, 0
        %s264 = sadd.s32 %s263, %s261
        %s265 = smul.addr %s264, 4
        %s266 = scalar_lea.vmem %s1, %s265
        %p267 = pneg %p97
        %p268 = pneg %p94
        %p269 = scmp.lt.s32.totalorder %s26, 0
        %s270 = scalar_select %p269, %s26, 0
        %s271 = scalar_lea.vmem %s2, %s270
        %p272 = pneg %p123
        %p273 = pneg %p120
        %p274 = scmp.lt.s32.totalorder %s26, 0
        %s275 = scalar_select %p274, %s26, 0
        %s276 = scalar_lea.vmem %s3, %s275
        %p277 = pneg %p149
        %p278 = pneg %p146
        %p279 = pneg %p179
        %p280 = pneg %p176
        %s281 = sand.u32 %s166, 1
        %s282 = scalar_lea.sflag [#allocation4], %s281
        %s283 = sand.u32 %s166, 1
        %s284 = smul.addr %s283, 512
        %s285 = scalar_lea.vmem [#allocation3], %s284
        %s286 = smul.u32 128, %s25
        %p287 = scmp.lt.s32.totalorder %s24, 0
        %s288 = scalar_select %p287, %s24, 0
        %p289 = scmp.lt.s32.totalorder %s286, 255
        %s290 = scalar_select %p289, %s286, 255
        %p291 = scmp.lt.s32.totalorder %s27, 0
        %s292 = scalar_select %p291, %s27, 0
        %s293 = sadd.s32 %s292, %s290
        %s294 = smul.addr %s288, 256
        %s295 = sadd.s32 %s293, %s294
        %s296 = smul.addr %s295, 4
        %s297 = scalar_lea.vmem %s0, %s296
        %s298 = smul.u32 128, %s25
        %s299 = smul.u32 4, %s27
        %p300 = scmp.lt.s32.totalorder %s299, 3
        %s301 = scalar_select %p300, %s299, 3
        %p302 = scmp.lt.s32.totalorder %s26, 0
        %s303 = scalar_select %p302, %s26, 0
        %s304 = sadd.s32 %s303, %s301
        %s305 = smul.addr %s304, 4
        %s306 = scalar_lea.vmem %s1, %s305
        %s307 = smul.u32 4, %s27
        %p308 = scmp.lt.s32.totalorder %s26, 0
        %s309 = scalar_select %p308, %s26, 0
        %s310 = scalar_lea.vmem %s2, %s309
        %p311 = scmp.lt.s32.totalorder %s26, 0
        %s312 = scalar_select %p311, %s26, 0
        %s313 = scalar_lea.vmem %s3, %s312
        %s314 = smul.u32 128, %s25
        %p316 = scmp.eq.s32.totalorder %s27, 0
        // Predicated region
        $region37: #{stem_conv.1} parent=35 // pred_check
          %p317 = pneg %p316
        $region38: #{stem_conv.1} parent=35 // pred_check_branch
          %319 = sbr.rel (%p317) target = $region40
        $region39: #{stem_conv.1} parent=35 // pred_region
          %320 = vst [vmem:[#allocation2] sm:$0xff] 0.0
          %321 = vst [vmem:[#allocation2 + $0x8] sm:$0xff] 0.0
          %322 = vst [vmem:[#allocation2 + $0x10] sm:$0xff] 0.0
          %323 = vst [vmem:[#allocation2 + $0x18] sm:$0xff] 0.0
          %324 = vst [vmem:[#allocation2 + $0x20] sm:$0xff] 0.0
          %325 = vst [vmem:[#allocation2 + $0x28] sm:$0xff] 0.0
          %326 = vst [vmem:[#allocation2 + $0x30] sm:$0xff] 0.0
          %327 = vst [vmem:[#allocation2 + $0x38] sm:$0xff] 0.0
          %328 = vst [vmem:[#allocation2 + $0x40] sm:$0xff] 0.0
          %329 = vst [vmem:[#allocation2 + $0x48] sm:$0xff] 0.0
          %330 = vst [vmem:[#allocation2 + $0x50] sm:$0xff] 0.0
          %331 = vst [vmem:[#allocation2 + $0x58] sm:$0xff] 0.0
          %332 = vst [vmem:[#allocation2 + $0x60] sm:$0xff] 0.0
          %333 = vst [vmem:[#allocation2 + $0x68] sm:$0xff] 0.0
          %334 = vst [vmem:[#allocation2 + $0x70] sm:$0xff] 0.0
          %335 = vst [vmem:[#allocation2 + $0x78] sm:$0xff] 0.0
          %336 = vst [vmem:[#allocation2 + $0x80] sm:$0xff] 0.0
          %337 = vst [vmem:[#allocation2 + $0x88] sm:$0xff] 0.0
          %338 = vst [vmem:[#allocation2 + $0x90] sm:$0xff] 0.0
          %339 = vst [vmem:[#allocation2 + $0x98] sm:$0xff] 0.0
          %340 = vst [vmem:[#allocation2 + $0xa0] sm:$0xff] 0.0
          %341 = vst [vmem:[#allocation2 + $0xa8] sm:$0xff] 0.0
          %342 = vst [vmem:[#allocation2 + $0xb0] sm:$0xff] 0.0
          %343 = vst [vmem:[#allocation2 + $0xb8] sm:$0xff] 0.0
          %344 = vst [vmem:[#allocation2 + $0xc0] sm:$0xff] 0.0
          %345 = vst [vmem:[#allocation2 + $0xc8] sm:$0xff] 0.0
          %346 = vst [vmem:[#allocation2 + $0xd0] sm:$0xff] 0.0
          %347 = vst [vmem:[#allocation2 + $0xd8] sm:$0xff] 0.0
          %348 = vst [vmem:[#allocation2 + $0xe0] sm:$0xff] 0.0
          %349 = vst [vmem:[#allocation2 + $0xe8] sm:$0xff] 0.0
          %350 = vst [vmem:[#allocation2 + $0xf0] sm:$0xff] 0.0
          %351 = vst [vmem:[#allocation2 + $0xf8] sm:$0xff] 0.0
          %352 = vst [vmem:[#allocation2 + $0x100] sm:$0xff] 0.0
          %353 = vst [vmem:[#allocation2 + $0x108] sm:$0xff] 0.0
          %354 = vst [vmem:[#allocation2 + $0x110] sm:$0xff] 0.0
          %355 = vst [vmem:[#allocation2 + $0x118] sm:$0xff] 0.0
          %356 = vst [vmem:[#allocation2 + $0x120] sm:$0xff] 0.0
          %357 = vst [vmem:[#allocation2 + $0x128] sm:$0xff] 0.0
          %358 = vst [vmem:[#allocation2 + $0x130] sm:$0xff] 0.0
          %359 = vst [vmem:[#allocation2 + $0x138] sm:$0xff] 0.0
          %360 = vst [vmem:[#allocation2 + $0x140] sm:$0xff] 0.0
          %361 = vst [vmem:[#allocation2 + $0x148] sm:$0xff] 0.0
          %362 = vst [vmem:[#allocation2 + $0x150] sm:$0xff] 0.0
          %363 = vst [vmem:[#allocation2 + $0x158] sm:$0xff] 0.0
          %364 = vst [vmem:[#allocation2 + $0x160] sm:$0xff] 0.0
          %365 = vst [vmem:[#allocation2 + $0x168] sm:$0xff] 0.0
          %366 = vst [vmem:[#allocation2 + $0x170] sm:$0xff] 0.0
          %367 = vst [vmem:[#allocation2 + $0x178] sm:$0xff] 0.0
          %368 = vst [vmem:[#allocation2 + $0x180] sm:$0xff] 0.0
          %369 = vst [vmem:[#allocation2 + $0x188] sm:$0xff] 0.0
          %370 = vst [vmem:[#allocation2 + $0x190] sm:$0xff] 0.0
          %371 = vst [vmem:[#allocation2 + $0x198] sm:$0xff] 0.0
          %372 = vst [vmem:[#allocation2 + $0x1a0] sm:$0xff] 0.0
          %373 = vst [vmem:[#allocation2 + $0x1a8] sm:$0xff] 0.0
          %374 = vst [vmem:[#allocation2 + $0x1b0] sm:$0xff] 0.0
          %375 = vst [vmem:[#allocation2 + $0x1b8] sm:$0xff] 0.0
          %376 = vst [vmem:[#allocation2 + $0x1c0] sm:$0xff] 0.0
          %377 = vst [vmem:[#allocation2 + $0x1c8] sm:$0xff] 0.0
          %378 = vst [vmem:[#allocation2 + $0x1d0] sm:$0xff] 0.0
          %379 = vst [vmem:[#allocation2 + $0x1d8] sm:$0xff] 0.0
          %380 = vst [vmem:[#allocation2 + $0x1e0] sm:$0xff] 0.0
          %381 = vst [vmem:[#allocation2 + $0x1e8] sm:$0xff] 0.0
          %382 = vst [vmem:[#allocation2 + $0x1f0] sm:$0xff] 0.0
          %383 = vst [vmem:[#allocation2 + $0x1f8] sm:$0xff] 0.0
          %384 = vst [vmem:[#allocation2 + $0x200] sm:$0xff] 0.0
          %385 = vst [vmem:[#allocation2 + $0x208] sm:$0xff] 0.0
          %386 = vst [vmem:[#allocation2 + $0x210] sm:$0xff] 0.0
          %387 = vst [vmem:[#allocation2 + $0x218] sm:$0xff] 0.0
          %388 = vst [vmem:[#allocation2 + $0x220] sm:$0xff] 0.0
          %389 = vst [vmem:[#allocation2 + $0x228] sm:$0xff] 0.0
          %390 = vst [vmem:[#allocation2 + $0x230] sm:$0xff] 0.0
          %391 = vst [vmem:[#allocation2 + $0x238] sm:$0xff] 0.0
          %392 = vst [vmem:[#allocation2 + $0x240] sm:$0xff] 0.0
          %393 = vst [vmem:[#allocation2 + $0x248] sm:$0xff] 0.0
          %394 = vst [vmem:[#allocation2 + $0x250] sm:$0xff] 0.0
          %395 = vst [vmem:[#allocation2 + $0x258] sm:$0xff] 0.0
          %396 = vst [vmem:[#allocation2 + $0x260] sm:$0xff] 0.0
          %397 = vst [vmem:[#allocation2 + $0x268] sm:$0xff] 0.0
          %398 = vst [vmem:[#allocation2 + $0x270] sm:$0xff] 0.0
          %399 = vst [vmem:[#allocation2 + $0x278] sm:$0xff] 0.0
          %400 = vst [vmem:[#allocation2 + $0x280] sm:$0xff] 0.0
          %401 = vst [vmem:[#allocation2 + $0x288] sm:$0xff] 0.0
          %402 = vst [vmem:[#allocation2 + $0x290] sm:$0xff] 0.0
          %403 = vst [vmem:[#allocation2 + $0x298] sm:$0xff] 0.0
          %404 = vst [vmem:[#allocation2 + $0x2a0] sm:$0xff] 0.0
          %405 = vst [vmem:[#allocation2 + $0x2a8] sm:$0xff] 0.0
          %406 = vst [vmem:[#allocation2 + $0x2b0] sm:$0xff] 0.0
          %407 = vst [vmem:[#allocation2 + $0x2b8] sm:$0xff] 0.0
          %408 = vst [vmem:[#allocation2 + $0x2c0] sm:$0xff] 0.0
          %409 = vst [vmem:[#allocation2 + $0x2c8] sm:$0xff] 0.0
          %410 = vst [vmem:[#allocation2 + $0x2d0] sm:$0xff] 0.0
          %411 = vst [vmem:[#allocation2 + $0x2d8] sm:$0xff] 0.0
          %412 = vst [vmem:[#allocation2 + $0x2e0] sm:$0xff] 0.0
          %413 = vst [vmem:[#allocation2 + $0x2e8] sm:$0xff] 0.0
          %414 = vst [vmem:[#allocation2 + $0x2f0] sm:$0xff] 0.0
          %415 = vst [vmem:[#allocation2 + $0x2f8] sm:$0xff] 0.0
          %416 = vst [vmem:[#allocation2 + $0x300] sm:$0xff] 0.0
          %417 = vst [vmem:[#allocation2 + $0x308] sm:$0xff] 0.0
          %418 = vst [vmem:[#allocation2 + $0x310] sm:$0xff] 0.0
          %419 = vst [vmem:[#allocation2 + $0x318] sm:$0xff] 0.0
          %420 = vst [vmem:[#allocation2 + $0x320] sm:$0xff] 0.0
          %421 = vst [vmem:[#allocation2 + $0x328] sm:$0xff] 0.0
          %422 = vst [vmem:[#allocation2 + $0x330] sm:$0xff] 0.0
          %423 = vst [vmem:[#allocation2 + $0x338] sm:$0xff] 0.0
          %424 = vst [vmem:[#allocation2 + $0x340] sm:$0xff] 0.0
          %425 = vst [vmem:[#allocation2 + $0x348] sm:$0xff] 0.0
          %426 = vst [vmem:[#allocation2 + $0x350] sm:$0xff] 0.0
          %427 = vst [vmem:[#allocation2 + $0x358] sm:$0xff] 0.0
          %428 = vst [vmem:[#allocation2 + $0x360] sm:$0xff] 0.0
          %429 = vst [vmem:[#allocation2 + $0x368] sm:$0xff] 0.0
          %430 = vst [vmem:[#allocation2 + $0x370] sm:$0xff] 0.0
          %431 = vst [vmem:[#allocation2 + $0x378] sm:$0xff] 0.0
          %432 = vst [vmem:[#allocation2 + $0x380] sm:$0xff] 0.0
          %433 = vst [vmem:[#allocation2 + $0x388] sm:$0xff] 0.0
          %434 = vst [vmem:[#allocation2 + $0x390] sm:$0xff] 0.0
          %435 = vst [vmem:[#allocation2 + $0x398] sm:$0xff] 0.0
          %436 = vst [vmem:[#allocation2 + $0x3a0] sm:$0xff] 0.0
          %437 = vst [vmem:[#allocation2 + $0x3a8] sm:$0xff] 0.0
          %438 = vst [vmem:[#allocation2 + $0x3b0] sm:$0xff] 0.0
          %439 = vst [vmem:[#allocation2 + $0x3b8] sm:$0xff] 0.0
          %440 = vst [vmem:[#allocation2 + $0x3c0] sm:$0xff] 0.0
          %441 = vst [vmem:[#allocation2 + $0x3c8] sm:$0xff] 0.0
          %442 = vst [vmem:[#allocation2 + $0x3d0] sm:$0xff] 0.0
          %443 = vst [vmem:[#allocation2 + $0x3d8] sm:$0xff] 0.0
          %444 = vst [vmem:[#allocation2 + $0x3e0] sm:$0xff] 0.0
          %445 = vst [vmem:[#allocation2 + $0x3e8] sm:$0xff] 0.0
          %446 = vst [vmem:[#allocation2 + $0x3f0] sm:$0xff] 0.0
          %447 = vst [vmem:[#allocation2 + $0x3f8] sm:$0xff] 0.0
        $region40: #{stem_conv.1} parent=35 // pred_fallthru
          _
        %v448 = vld [vmem:[%s297] sm:$0xf]
        %v449 = vld [vmem:[%s297 + $0x4] sm:$0xf]
        %v450 = vld [vmem:[%s297 + $0x8] sm:$0xf]
        %v451 = vld [vmem:[%s297 + $0xc] sm:$0xf]
        %v452 = vld [vmem:[%s297 + $0x10] sm:$0xf]
        %v453 = vld [vmem:[%s297 + $0x14] sm:$0xf]
        %v454 = vld [vmem:[%s297 + $0x18] sm:$0xf]
        %v455 = vld [vmem:[%s297 + $0x1c] sm:$0xf]
        %v456 = vld [vmem:[%s297 + $0x20] sm:$0xf]
        %v457 = vld [vmem:[%s297 + $0x24] sm:$0xf]
        %v458 = vld [vmem:[%s297 + $0x28] sm:$0xf]
        %v459 = vld [vmem:[%s297 + $0x2c] sm:$0xf]
        %v460 = vld [vmem:[%s297 + $0x30] sm:$0xf]
        %v461 = vld [vmem:[%s297 + $0x34] sm:$0xf]
        %v462 = vld [vmem:[%s297 + $0x38] sm:$0xf]
        %v463 = vld [vmem:[%s297 + $0x3c] sm:$0xf]
        %v464 = vld [vmem:[%s297 + $0x40] sm:$0xf]
        %v465 = vld [vmem:[%s297 + $0x44] sm:$0xf]
        %v466 = vld [vmem:[%s297 + $0x48] sm:$0xf]
        %v467 = vld [vmem:[%s297 + $0x4c] sm:$0xf]
        %v468 = vld [vmem:[%s297 + $0x50] sm:$0xf]
        %v469 = vld [vmem:[%s297 + $0x54] sm:$0xf]
        %v470 = vld [vmem:[%s297 + $0x58] sm:$0xf]
        %v471 = vld [vmem:[%s297 + $0x5c] sm:$0xf]
        %v472 = vld [vmem:[%s297 + $0x60] sm:$0xf]
        %v473 = vld [vmem:[%s297 + $0x64] sm:$0xf]
        %v474 = vld [vmem:[%s297 + $0x68] sm:$0xf]
        %v475 = vld [vmem:[%s297 + $0x6c] sm:$0xf]
        %v476 = vld [vmem:[%s297 + $0x70] sm:$0xf]
        %v477 = vld [vmem:[%s297 + $0x74] sm:$0xf]
        %v478 = vld [vmem:[%s297 + $0x78] sm:$0xf]
        %v479 = vld [vmem:[%s297 + $0x7c] sm:$0xf]
        %v480 = vld [vmem:[%s297 + $0x80] sm:$0xf]
        %v481 = vld [vmem:[%s297 + $0x84] sm:$0xf]
        %v482 = vld [vmem:[%s297 + $0x88] sm:$0xf]
        %v483 = vld [vmem:[%s297 + $0x8c] sm:$0xf]
        %v484 = vld [vmem:[%s297 + $0x90] sm:$0xf]
        %v485 = vld [vmem:[%s297 + $0x94] sm:$0xf]
        %v486 = vld [vmem:[%s297 + $0x98] sm:$0xf]
        %v487 = vld [vmem:[%s297 + $0x9c] sm:$0xf]
        %v488 = vld [vmem:[%s297 + $0xa0] sm:$0xf]
        %v489 = vld [vmem:[%s297 + $0xa4] sm:$0xf]
        %v490 = vld [vmem:[%s297 + $0xa8] sm:$0xf]
        %v491 = vld [vmem:[%s297 + $0xac] sm:$0xf]
        %v492 = vld [vmem:[%s297 + $0xb0] sm:$0xf]
        %v493 = vld [vmem:[%s297 + $0xb4] sm:$0xf]
        %v494 = vld [vmem:[%s297 + $0xb8] sm:$0xf]
        %v495 = vld [vmem:[%s297 + $0xbc] sm:$0xf]
        %v496 = vld [vmem:[%s297 + $0xc0] sm:$0xf]
        %v497 = vld [vmem:[%s297 + $0xc4] sm:$0xf]
        %v498 = vld [vmem:[%s297 + $0xc8] sm:$0xf]
        %v499 = vld [vmem:[%s297 + $0xcc] sm:$0xf]
        %v500 = vld [vmem:[%s297 + $0xd0] sm:$0xf]
        %v501 = vld [vmem:[%s297 + $0xd4] sm:$0xf]
        %v502 = vld [vmem:[%s297 + $0xd8] sm:$0xf]
        %v503 = vld [vmem:[%s297 + $0xdc] sm:$0xf]
        %v504 = vld [vmem:[%s297 + $0xe0] sm:$0xf]
        %v505 = vld [vmem:[%s297 + $0xe4] sm:$0xf]
        %v506 = vld [vmem:[%s297 + $0xe8] sm:$0xf]
        %v507 = vld [vmem:[%s297 + $0xec] sm:$0xf]
        %v508 = vld [vmem:[%s297 + $0xf0] sm:$0xf]
        %v509 = vld [vmem:[%s297 + $0xf4] sm:$0xf]
        %v510 = vld [vmem:[%s297 + $0xf8] sm:$0xf]
        %v511 = vld [vmem:[%s297 + $0xfc] sm:$0xf]
        %v512 = vld [vmem:[%s297 + $0x100] sm:$0xf]
        %v513 = vld [vmem:[%s297 + $0x104] sm:$0xf]
        %v514 = vld [vmem:[%s297 + $0x108] sm:$0xf]
        %v515 = vld [vmem:[%s297 + $0x10c] sm:$0xf]
        %v516 = vld [vmem:[%s297 + $0x110] sm:$0xf]
        %v517 = vld [vmem:[%s297 + $0x114] sm:$0xf]
        %v518 = vld [vmem:[%s297 + $0x118] sm:$0xf]
        %v519 = vld [vmem:[%s297 + $0x11c] sm:$0xf]
        %v520 = vld [vmem:[%s297 + $0x120] sm:$0xf]
        %v521 = vld [vmem:[%s297 + $0x124] sm:$0xf]
        %v522 = vld [vmem:[%s297 + $0x128] sm:$0xf]
        %v523 = vld [vmem:[%s297 + $0x12c] sm:$0xf]
        %v524 = vld [vmem:[%s297 + $0x130] sm:$0xf]
        %v525 = vld [vmem:[%s297 + $0x134] sm:$0xf]
        %v526 = vld [vmem:[%s297 + $0x138] sm:$0xf]
        %v527 = vld [vmem:[%s297 + $0x13c] sm:$0xf]
        %v528 = vld [vmem:[%s297 + $0x140] sm:$0xf]
        %v529 = vld [vmem:[%s297 + $0x144] sm:$0xf]
        %v530 = vld [vmem:[%s297 + $0x148] sm:$0xf]
        %v531 = vld [vmem:[%s297 + $0x14c] sm:$0xf]
        %v532 = vld [vmem:[%s297 + $0x150] sm:$0xf]
        %v533 = vld [vmem:[%s297 + $0x154] sm:$0xf]
        %v534 = vld [vmem:[%s297 + $0x158] sm:$0xf]
        %v535 = vld [vmem:[%s297 + $0x15c] sm:$0xf]
        %v536 = vld [vmem:[%s297 + $0x160] sm:$0xf]
        %v537 = vld [vmem:[%s297 + $0x164] sm:$0xf]
        %v538 = vld [vmem:[%s297 + $0x168] sm:$0xf]
        %v539 = vld [vmem:[%s297 + $0x16c] sm:$0xf]
        %v540 = vld [vmem:[%s297 + $0x170] sm:$0xf]
        %v541 = vld [vmem:[%s297 + $0x174] sm:$0xf]
        %v542 = vld [vmem:[%s297 + $0x178] sm:$0xf]
        %v543 = vld [vmem:[%s297 + $0x17c] sm:$0xf]
        %v544 = vld [vmem:[%s297 + $0x180] sm:$0xf]
        %v545 = vld [vmem:[%s297 + $0x184] sm:$0xf]
        %v546 = vld [vmem:[%s297 + $0x188] sm:$0xf]
        %v547 = vld [vmem:[%s297 + $0x18c] sm:$0xf]
        %v548 = vld [vmem:[%s297 + $0x190] sm:$0xf]
        %v549 = vld [vmem:[%s297 + $0x194] sm:$0xf]
        %v550 = vld [vmem:[%s297 + $0x198] sm:$0xf]
        %v551 = vld [vmem:[%s297 + $0x19c] sm:$0xf]
        %v552 = vld [vmem:[%s297 + $0x1a0] sm:$0xf]
        %v553 = vld [vmem:[%s297 + $0x1a4] sm:$0xf]
        %v554 = vld [vmem:[%s297 + $0x1a8] sm:$0xf]
        %v555 = vld [vmem:[%s297 + $0x1ac] sm:$0xf]
        %v556 = vld [vmem:[%s297 + $0x1b0] sm:$0xf]
        %v557 = vld [vmem:[%s297 + $0x1b4] sm:$0xf]
        %v558 = vld [vmem:[%s297 + $0x1b8] sm:$0xf]
        %v559 = vld [vmem:[%s297 + $0x1bc] sm:$0xf]
        %v560 = vld [vmem:[%s297 + $0x1c0] sm:$0xf]
        %v561 = vld [vmem:[%s297 + $0x1c4] sm:$0xf]
        %v562 = vld [vmem:[%s297 + $0x1c8] sm:$0xf]
        %v563 = vld [vmem:[%s297 + $0x1cc] sm:$0xf]
        %v564 = vld [vmem:[%s297 + $0x1d0] sm:$0xf]
        %v565 = vld [vmem:[%s297 + $0x1d4] sm:$0xf]
        %v566 = vld [vmem:[%s297 + $0x1d8] sm:$0xf]
        %v567 = vld [vmem:[%s297 + $0x1dc] sm:$0xf]
        %v568 = vld [vmem:[%s297 + $0x1e0] sm:$0xf]
        %v569 = vld [vmem:[%s297 + $0x1e4] sm:$0xf]
        %v570 = vld [vmem:[%s297 + $0x1e8] sm:$0xf]
        %v571 = vld [vmem:[%s297 + $0x1ec] sm:$0xf]
        %v572 = vld [vmem:[%s297 + $0x1f0] sm:$0xf]
        %v573 = vld [vmem:[%s297 + $0x1f4] sm:$0xf]
        %v574 = vld [vmem:[%s297 + $0x1f8] sm:$0xf]
        %v575 = vld [vmem:[%s297 + $0x1fc] sm:$0xf]
        %v576 = vld [vmem:[#allocation2] sm:$0xff]
        %v577 = vld [vmem:[#allocation2 + $0x8] sm:$0xff]
        %v578 = vld [vmem:[#allocation2 + $0x10] sm:$0xff]
        %v579 = vld [vmem:[#allocation2 + $0x18] sm:$0xff]
        %v580 = vld [vmem:[#allocation2 + $0x20] sm:$0xff]
        %v581 = vld [vmem:[#allocation2 + $0x28] sm:$0xff]
        %v582 = vld [vmem:[#allocation2 + $0x30] sm:$0xff]
        %v583 = vld [vmem:[#allocation2 + $0x38] sm:$0xff]
        %v584 = vld [vmem:[#allocation2 + $0x40] sm:$0xff]
        %v585 = vld [vmem:[#allocation2 + $0x48] sm:$0xff]
        %v586 = vld [vmem:[#allocation2 + $0x50] sm:$0xff]
        %v587 = vld [vmem:[#allocation2 + $0x58] sm:$0xff]
        %v588 = vld [vmem:[#allocation2 + $0x60] sm:$0xff]
        %v589 = vld [vmem:[#allocation2 + $0x68] sm:$0xff]
        %v590 = vld [vmem:[#allocation2 + $0x70] sm:$0xff]
        %v591 = vld [vmem:[#allocation2 + $0x78] sm:$0xff]
        %v592 = vld [vmem:[#allocation2 + $0x80] sm:$0xff]
        %v593 = vld [vmem:[#allocation2 + $0x88] sm:$0xff]
        %v594 = vld [vmem:[#allocation2 + $0x90] sm:$0xff]
        %v595 = vld [vmem:[#allocation2 + $0x98] sm:$0xff]
        %v596 = vld [vmem:[#allocation2 + $0xa0] sm:$0xff]
        %v597 = vld [vmem:[#allocation2 + $0xa8] sm:$0xff]
        %v598 = vld [vmem:[#allocation2 + $0xb0] sm:$0xff]
        %v599 = vld [vmem:[#allocation2 + $0xb8] sm:$0xff]
        %v600 = vld [vmem:[#allocation2 + $0xc0] sm:$0xff]
        %v601 = vld [vmem:[#allocation2 + $0xc8] sm:$0xff]
        %v602 = vld [vmem:[#allocation2 + $0xd0] sm:$0xff]
        %v603 = vld [vmem:[#allocation2 + $0xd8] sm:$0xff]
        %v604 = vld [vmem:[#allocation2 + $0xe0] sm:$0xff]
        %v605 = vld [vmem:[#allocation2 + $0xe8] sm:$0xff]
        %v606 = vld [vmem:[#allocation2 + $0xf0] sm:$0xff]
        %v607 = vld [vmem:[#allocation2 + $0xf8] sm:$0xff]
        %v608 = vld [vmem:[#allocation2 + $0x100] sm:$0xff]
        %v609 = vld [vmem:[#allocation2 + $0x108] sm:$0xff]
        %v610 = vld [vmem:[#allocation2 + $0x110] sm:$0xff]
        %v611 = vld [vmem:[#allocation2 + $0x118] sm:$0xff]
        %v612 = vld [vmem:[#allocation2 + $0x120] sm:$0xff]
        %v613 = vld [vmem:[#allocation2 + $0x128] sm:$0xff]
        %v614 = vld [vmem:[#allocation2 + $0x130] sm:$0xff]
        %v615 = vld [vmem:[#allocation2 + $0x138] sm:$0xff]
        %v616 = vld [vmem:[#allocation2 + $0x140] sm:$0xff]
        %v617 = vld [vmem:[#allocation2 + $0x148] sm:$0xff]
        %v618 = vld [vmem:[#allocation2 + $0x150] sm:$0xff]
        %v619 = vld [vmem:[#allocation2 + $0x158] sm:$0xff]
        %v620 = vld [vmem:[#allocation2 + $0x160] sm:$0xff]
        %v621 = vld [vmem:[#allocation2 + $0x168] sm:$0xff]
        %v622 = vld [vmem:[#allocation2 + $0x170] sm:$0xff]
        %v623 = vld [vmem:[#allocation2 + $0x178] sm:$0xff]
        %v624 = vld [vmem:[#allocation2 + $0x180] sm:$0xff]
        %v625 = vld [vmem:[#allocation2 + $0x188] sm:$0xff]
        %v626 = vld [vmem:[#allocation2 + $0x190] sm:$0xff]
        %v627 = vld [vmem:[#allocation2 + $0x198] sm:$0xff]
        %v628 = vld [vmem:[#allocation2 + $0x1a0] sm:$0xff]
        %v629 = vld [vmem:[#allocation2 + $0x1a8] sm:$0xff]
        %v630 = vld [vmem:[#allocation2 + $0x1b0] sm:$0xff]
        %v631 = vld [vmem:[#allocation2 + $0x1b8] sm:$0xff]
        %v632 = vld [vmem:[#allocation2 + $0x1c0] sm:$0xff]
        %v633 = vld [vmem:[#allocation2 + $0x1c8] sm:$0xff]
        %v634 = vld [vmem:[#allocation2 + $0x1d0] sm:$0xff]
        %v635 = vld [vmem:[#allocation2 + $0x1d8] sm:$0xff]
        %v636 = vld [vmem:[#allocation2 + $0x1e0] sm:$0xff]
        %v637 = vld [vmem:[#allocation2 + $0x1e8] sm:$0xff]
        %v638 = vld [vmem:[#allocation2 + $0x1f0] sm:$0xff]
        %v639 = vld [vmem:[#allocation2 + $0x1f8] sm:$0xff]
        %v640 = vld [vmem:[#allocation2 + $0x200] sm:$0xff]
        %v641 = vld [vmem:[#allocation2 + $0x208] sm:$0xff]
        %v642 = vld [vmem:[#allocation2 + $0x210] sm:$0xff]
        %v643 = vld [vmem:[#allocation2 + $0x218] sm:$0xff]
        %v644 = vld [vmem:[#allocation2 + $0x220] sm:$0xff]
        %v645 = vld [vmem:[#allocation2 + $0x228] sm:$0xff]
        %v646 = vld [vmem:[#allocation2 + $0x230] sm:$0xff]
        %v647 = vld [vmem:[#allocation2 + $0x238] sm:$0xff]
        %v648 = vld [vmem:[#allocation2 + $0x240] sm:$0xff]
        %v649 = vld [vmem:[#allocation2 + $0x248] sm:$0xff]
        %v650 = vld [vmem:[#allocation2 + $0x250] sm:$0xff]
        %v651 = vld [vmem:[#allocation2 + $0x258] sm:$0xff]
        %v652 = vld [vmem:[#allocation2 + $0x260] sm:$0xff]
        %v653 = vld [vmem:[#allocation2 + $0x268] sm:$0xff]
        %v654 = vld [vmem:[#allocation2 + $0x270] sm:$0xff]
        %v655 = vld [vmem:[#allocation2 + $0x278] sm:$0xff]
        %v656 = vld [vmem:[#allocation2 + $0x280] sm:$0xff]
        %v657 = vld [vmem:[#allocation2 + $0x288] sm:$0xff]
        %v658 = vld [vmem:[#allocation2 + $0x290] sm:$0xff]
        %v659 = vld [vmem:[#allocation2 + $0x298] sm:$0xff]
        %v660 = vld [vmem:[#allocation2 + $0x2a0] sm:$0xff]
        %v661 = vld [vmem:[#allocation2 + $0x2a8] sm:$0xff]
        %v662 = vld [vmem:[#allocation2 + $0x2b0] sm:$0xff]
        %v663 = vld [vmem:[#allocation2 + $0x2b8] sm:$0xff]
        %v664 = vld [vmem:[#allocation2 + $0x2c0] sm:$0xff]
        %v665 = vld [vmem:[#allocation2 + $0x2c8] sm:$0xff]
        %v666 = vld [vmem:[#allocation2 + $0x2d0] sm:$0xff]
        %v667 = vld [vmem:[#allocation2 + $0x2d8] sm:$0xff]
        %v668 = vld [vmem:[#allocation2 + $0x2e0] sm:$0xff]
        %v669 = vld [vmem:[#allocation2 + $0x2e8] sm:$0xff]
        %v670 = vld [vmem:[#allocation2 + $0x2f0] sm:$0xff]
        %v671 = vld [vmem:[#allocation2 + $0x2f8] sm:$0xff]
        %v672 = vld [vmem:[#allocation2 + $0x300] sm:$0xff]
        %v673 = vld [vmem:[#allocation2 + $0x308] sm:$0xff]
        %v674 = vld [vmem:[#allocation2 + $0x310] sm:$0xff]
        %v675 = vld [vmem:[#allocation2 + $0x318] sm:$0xff]
        %v676 = vld [vmem:[#allocation2 + $0x320] sm:$0xff]
        %v677 = vld [vmem:[#allocation2 + $0x328] sm:$0xff]
        %v678 = vld [vmem:[#allocation2 + $0x330] sm:$0xff]
        %v679 = vld [vmem:[#allocation2 + $0x338] sm:$0xff]
        %v680 = vld [vmem:[#allocation2 + $0x340] sm:$0xff]
        %v681 = vld [vmem:[#allocation2 + $0x348] sm:$0xff]
        %v682 = vld [vmem:[#allocation2 + $0x350] sm:$0xff]
        %v683 = vld [vmem:[#allocation2 + $0x358] sm:$0xff]
        %v684 = vld [vmem:[#allocation2 + $0x360] sm:$0xff]
        %v685 = vld [vmem:[#allocation2 + $0x368] sm:$0xff]
        %v686 = vld [vmem:[#allocation2 + $0x370] sm:$0xff]
        %v687 = vld [vmem:[#allocation2 + $0x378] sm:$0xff]
        %v688 = vld [vmem:[#allocation2 + $0x380] sm:$0xff]
        %v689 = vld [vmem:[#allocation2 + $0x388] sm:$0xff]
        %v690 = vld [vmem:[#allocation2 + $0x390] sm:$0xff]
        %v691 = vld [vmem:[#allocation2 + $0x398] sm:$0xff]
        %v692 = vld [vmem:[#allocation2 + $0x3a0] sm:$0xff]
        %v693 = vld [vmem:[#allocation2 + $0x3a8] sm:$0xff]
        %v694 = vld [vmem:[#allocation2 + $0x3b0] sm:$0xff]
        %v695 = vld [vmem:[#allocation2 + $0x3b8] sm:$0xff]
        %v696 = vld [vmem:[#allocation2 + $0x3c0] sm:$0xff]
        %v697 = vld [vmem:[#allocation2 + $0x3c8] sm:$0xff]
        %v698 = vld [vmem:[#allocation2 + $0x3d0] sm:$0xff]
        %v699 = vld [vmem:[#allocation2 + $0x3d8] sm:$0xff]
        %v700 = vld [vmem:[#allocation2 + $0x3e0] sm:$0xff]
        %v701 = vld [vmem:[#allocation2 + $0x3e8] sm:$0xff]
        %v702 = vld [vmem:[#allocation2 + $0x3f0] sm:$0xff]
        %v703 = vld [vmem:[#allocation2 + $0x3f8] sm:$0xff]
        %v704 = vld [vmem:[%s306] sm:$0xf]
        %v705 = vld [vmem:[%s306 + $0x4] sm:$0xf]
        %v706 = vld [vmem:[%s306 + $0x8] sm:$0xf]
        %v707 = vld [vmem:[%s306 + $0xc] sm:$0xf]
        %v836 = vunpack.c.l.b16 %v448
        %v837 = vunpack.c.l.b16 %v449
        %v838 = vunpack.c.l.b16 %v450
        %v839 = vunpack.c.l.b16 %v451
        %v840 = vunpack.c.l.b16 %v452
        %v841 = vunpack.c.l.b16 %v453
        %v842 = vunpack.c.l.b16 %v454
        %v843 = vunpack.c.l.b16 %v455
        %v844 = vunpack.c.l.b16 %v456
        %v845 = vunpack.c.l.b16 %v457
        %v846 = vunpack.c.l.b16 %v458
        %v847 = vunpack.c.l.b16 %v459
        %v848 = vunpack.c.l.b16 %v460
        %v849 = vunpack.c.l.b16 %v461
        %v850 = vunpack.c.l.b16 %v462
        %v851 = vunpack.c.l.b16 %v463
        %v852 = vunpack.c.l.b16 %v464
        %v853 = vunpack.c.l.b16 %v465
        %v854 = vunpack.c.l.b16 %v466
        %v855 = vunpack.c.l.b16 %v467
        %v856 = vunpack.c.l.b16 %v468
        %v857 = vunpack.c.l.b16 %v469
        %v858 = vunpack.c.l.b16 %v470
        %v859 = vunpack.c.l.b16 %v471
        %v860 = vunpack.c.l.b16 %v472
        %v861 = vunpack.c.l.b16 %v473
        %v862 = vunpack.c.l.b16 %v474
        %v863 = vunpack.c.l.b16 %v475
        %v864 = vunpack.c.l.b16 %v476
        %v865 = vunpack.c.l.b16 %v477
        %v866 = vunpack.c.l.b16 %v478
        %v867 = vunpack.c.l.b16 %v479
        %v868 = vunpack.c.l.b16 %v480
        %v869 = vunpack.c.l.b16 %v481
        %v870 = vunpack.c.l.b16 %v482
        %v871 = vunpack.c.l.b16 %v483
        %v872 = vunpack.c.l.b16 %v484
        %v873 = vunpack.c.l.b16 %v485
        %v874 = vunpack.c.l.b16 %v486
        %v875 = vunpack.c.l.b16 %v487
        %v876 = vunpack.c.l.b16 %v488
        %v877 = vunpack.c.l.b16 %v489
        %v878 = vunpack.c.l.b16 %v490
        %v879 = vunpack.c.l.b16 %v491
        %v880 = vunpack.c.l.b16 %v492
        %v881 = vunpack.c.l.b16 %v493
        %v882 = vunpack.c.l.b16 %v494
        %v883 = vunpack.c.l.b16 %v495
        %v884 = vunpack.c.l.b16 %v496
        %v885 = vunpack.c.l.b16 %v497
        %v886 = vunpack.c.l.b16 %v498
        %v887 = vunpack.c.l.b16 %v499
        %v888 = vunpack.c.l.b16 %v500
        %v889 = vunpack.c.l.b16 %v501
        %v890 = vunpack.c.l.b16 %v502
        %v891 = vunpack.c.l.b16 %v503
        %v892 = vunpack.c.l.b16 %v504
        %v893 = vunpack.c.l.b16 %v505
        %v894 = vunpack.c.l.b16 %v506
        %v895 = vunpack.c.l.b16 %v507
        %v896 = vunpack.c.l.b16 %v508
        %v897 = vunpack.c.l.b16 %v509
        %v898 = vunpack.c.l.b16 %v510
        %v899 = vunpack.c.l.b16 %v511
        %v900 = vunpack.c.l.b16 %v512
        %v901 = vunpack.c.l.b16 %v513
        %v902 = vunpack.c.l.b16 %v514
        %v903 = vunpack.c.l.b16 %v515
        %v904 = vunpack.c.l.b16 %v516
        %v905 = vunpack.c.l.b16 %v517
        %v906 = vunpack.c.l.b16 %v518
        %v907 = vunpack.c.l.b16 %v519
        %v908 = vunpack.c.l.b16 %v520
        %v909 = vunpack.c.l.b16 %v521
        %v910 = vunpack.c.l.b16 %v522
        %v911 = vunpack.c.l.b16 %v523
        %v912 = vunpack.c.l.b16 %v524
        %v913 = vunpack.c.l.b16 %v525
        %v914 = vunpack.c.l.b16 %v526
        %v915 = vunpack.c.l.b16 %v527
        %v916 = vunpack.c.l.b16 %v528
        %v917 = vunpack.c.l.b16 %v529
        %v918 = vunpack.c.l.b16 %v530
        %v919 = vunpack.c.l.b16 %v531
        %v920 = vunpack.c.l.b16 %v532
        %v921 = vunpack.c.l.b16 %v533
        %v922 = vunpack.c.l.b16 %v534
        %v923 = vunpack.c.l.b16 %v535
        %v924 = vunpack.c.l.b16 %v536
        %v925 = vunpack.c.l.b16 %v537
        %v926 = vunpack.c.l.b16 %v538
        %v927 = vunpack.c.l.b16 %v539
        %v928 = vunpack.c.l.b16 %v540
        %v929 = vunpack.c.l.b16 %v541
        %v930 = vunpack.c.l.b16 %v542
        %v931 = vunpack.c.l.b16 %v543
        %v932 = vunpack.c.l.b16 %v544
        %v933 = vunpack.c.l.b16 %v545
        %v934 = vunpack.c.l.b16 %v546
        %v935 = vunpack.c.l.b16 %v547
        %v936 = vunpack.c.l.b16 %v548
        %v937 = vunpack.c.l.b16 %v549
        %v938 = vunpack.c.l.b16 %v550
        %v939 = vunpack.c.l.b16 %v551
        %v940 = vunpack.c.l.b16 %v552
        %v941 = vunpack.c.l.b16 %v553
        %v942 = vunpack.c.l.b16 %v554
        %v943 = vunpack.c.l.b16 %v555
        %v944 = vunpack.c.l.b16 %v556
        %v945 = vunpack.c.l.b16 %v557
        %v946 = vunpack.c.l.b16 %v558
        %v947 = vunpack.c.l.b16 %v559
        %v948 = vunpack.c.l.b16 %v560
        %v949 = vunpack.c.l.b16 %v561
        %v950 = vunpack.c.l.b16 %v562
        %v951 = vunpack.c.l.b16 %v563
        %v952 = vunpack.c.l.b16 %v564
        %v953 = vunpack.c.l.b16 %v565
        %v954 = vunpack.c.l.b16 %v566
        %v955 = vunpack.c.l.b16 %v567
        %v956 = vunpack.c.l.b16 %v568
        %v957 = vunpack.c.l.b16 %v569
        %v958 = vunpack.c.l.b16 %v570
        %v959 = vunpack.c.l.b16 %v571
        %v960 = vunpack.c.l.b16 %v572
        %v961 = vunpack.c.l.b16 %v573
        %v962 = vunpack.c.l.b16 %v574
        %v963 = vunpack.c.l.b16 %v575
        %v964 = vpack.c.b16 %v837, %v836
        %v965 = vpack.c.b16 %v839, %v838
        %v966 = vpack.c.b16 %v841, %v840
        %v967 = vpack.c.b16 %v843, %v842
        %v968 = vpack.c.b16 %v845, %v844
        %v969 = vpack.c.b16 %v847, %v846
        %v970 = vpack.c.b16 %v849, %v848
        %v971 = vpack.c.b16 %v851, %v850
        %v972 = vpack.c.b16 %v853, %v852
        %v973 = vpack.c.b16 %v855, %v854
        %v974 = vpack.c.b16 %v857, %v856
        %v975 = vpack.c.b16 %v859, %v858
        %v976 = vpack.c.b16 %v861, %v860
        %v977 = vpack.c.b16 %v863, %v862
        %v978 = vpack.c.b16 %v865, %v864
        %v979 = vpack.c.b16 %v867, %v866
        %v980 = vpack.c.b16 %v869, %v868
        %v981 = vpack.c.b16 %v871, %v870
        %v982 = vpack.c.b16 %v873, %v872
        %v983 = vpack.c.b16 %v875, %v874
        %v984 = vpack.c.b16 %v877, %v876
        %v985 = vpack.c.b16 %v879, %v878
        %v986 = vpack.c.b16 %v881, %v880
        %v987 = vpack.c.b16 %v883, %v882
        %v988 = vpack.c.b16 %v885, %v884
        %v989 = vpack.c.b16 %v887, %v886
        %v990 = vpack.c.b16 %v889, %v888
        %v991 = vpack.c.b16 %v891, %v890
        %v992 = vpack.c.b16 %v893, %v892
        %v993 = vpack.c.b16 %v895, %v894
        %v994 = vpack.c.b16 %v897, %v896
        %v995 = vpack.c.b16 %v899, %v898
        %v996 = vpack.c.b16 %v901, %v900
        %v997 = vpack.c.b16 %v903, %v902
        %v998 = vpack.c.b16 %v905, %v904
        %v999 = vpack.c.b16 %v907, %v906
        %v1000 = vpack.c.b16 %v909, %v908
        %v1001 = vpack.c.b16 %v911, %v910
        %v1002 = vpack.c.b16 %v913, %v912
        %v1003 = vpack.c.b16 %v915, %v914
        %v1004 = vpack.c.b16 %v917, %v916
        %v1005 = vpack.c.b16 %v919, %v918
        %v1006 = vpack.c.b16 %v921, %v920
        %v1007 = vpack.c.b16 %v923, %v922
        %v1008 = vpack.c.b16 %v925, %v924
        %v1009 = vpack.c.b16 %v927, %v926
        %v1010 = vpack.c.b16 %v929, %v928
        %v1011 = vpack.c.b16 %v931, %v930
        %v1012 = vpack.c.b16 %v933, %v932
        %v1013 = vpack.c.b16 %v935, %v934
        %v1014 = vpack.c.b16 %v937, %v936
        %v1015 = vpack.c.b16 %v939, %v938
        %v1016 = vpack.c.b16 %v941, %v940
        %v1017 = vpack.c.b16 %v943, %v942
        %v1018 = vpack.c.b16 %v945, %v944
        %v1019 = vpack.c.b16 %v947, %v946
        %v1020 = vpack.c.b16 %v949, %v948
        %v1021 = vpack.c.b16 %v951, %v950
        %v1022 = vpack.c.b16 %v953, %v952
        %v1023 = vpack.c.b16 %v955, %v954
        %v1024 = vpack.c.b16 %v957, %v956
        %v1025 = vpack.c.b16 %v959, %v958
        %v1026 = vpack.c.b16 %v961, %v960
        %v1027 = vpack.c.b16 %v963, %v962
        %v1032 = vunpack.c.l.b16 %v704
        %v1033 = vunpack.c.l.b16 %v705
        %v1034 = vunpack.c.l.b16 %v706
        %v1035 = vunpack.c.l.b16 %v707
        %v1036 = vpack.c.b16 %v1033, %v1032
        %v1037 = vpack.c.b16 %v1035, %v1034
        %vm1040 = vcmask 261120
        %v1042 = vsel %vm1040, %v964, 0
        %v1045 = vsel %vm1040, %v965, 0
        %v1048 = vsel %vm1040, %v966, 0
        %v1051 = vsel %vm1040, %v967, 0
        %v1054 = vsel %vm1040, %v968, 0
        %v1057 = vsel %vm1040, %v969, 0
        %v1060 = vsel %vm1040, %v970, 0
        %v1063 = vsel %vm1040, %v971, 0
        %v1066 = vsel %vm1040, %v972, 0
        %v1069 = vsel %vm1040, %v973, 0
        %v1072 = vsel %vm1040, %v974, 0
        %v1075 = vsel %vm1040, %v975, 0
        %v1078 = vsel %vm1040, %v976, 0
        %v1081 = vsel %vm1040, %v977, 0
        %v1084 = vsel %vm1040, %v978, 0
        %v1087 = vsel %vm1040, %v979, 0
        %v1090 = vsel %vm1040, %v980, 0
        %v1093 = vsel %vm1040, %v981, 0
        %v1096 = vsel %vm1040, %v982, 0
        %v1099 = vsel %vm1040, %v983, 0
        %v1102 = vsel %vm1040, %v984, 0
        %v1105 = vsel %vm1040, %v985, 0
        %v1108 = vsel %vm1040, %v986, 0
        %v1111 = vsel %vm1040, %v987, 0
        %v1114 = vsel %vm1040, %v988, 0
        %v1117 = vsel %vm1040, %v989, 0
        %v1120 = vsel %vm1040, %v990, 0
        %v1123 = vsel %vm1040, %v991, 0
        %v1126 = vsel %vm1040, %v992, 0
        %v1129 = vsel %vm1040, %v993, 0
        %v1132 = vsel %vm1040, %v994, 0
        %v1135 = vsel %vm1040, %v995, 0
        %v1138 = vsel %vm1040, %v996, 0
        %v1141 = vsel %vm1040, %v997, 0
        %v1144 = vsel %vm1040, %v998, 0
        %v1147 = vsel %vm1040, %v999, 0
        %v1150 = vsel %vm1040, %v1000, 0
        %v1153 = vsel %vm1040, %v1001, 0
        %v1156 = vsel %vm1040, %v1002, 0
        %v1159 = vsel %vm1040, %v1003, 0
        %v1162 = vsel %vm1040, %v1004, 0
        %v1165 = vsel %vm1040, %v1005, 0
        %v1168 = vsel %vm1040, %v1006, 0
        %v1171 = vsel %vm1040, %v1007, 0
        %v1174 = vsel %vm1040, %v1008, 0
        %v1177 = vsel %vm1040, %v1009, 0
        %v1180 = vsel %vm1040, %v1010, 0
        %v1183 = vsel %vm1040, %v1011, 0
        %v1186 = vsel %vm1040, %v1012, 0
        %v1189 = vsel %vm1040, %v1013, 0
        %v1192 = vsel %vm1040, %v1014, 0
        %v1195 = vsel %vm1040, %v1015, 0
        %v1198 = vsel %vm1040, %v1016, 0
        %v1201 = vsel %vm1040, %v1017, 0
        %v1204 = vsel %vm1040, %v1018, 0
        %v1207 = vsel %vm1040, %v1019, 0
        %v1210 = vsel %vm1040, %v1020, 0
        %v1213 = vsel %vm1040, %v1021, 0
        %v1216 = vsel %vm1040, %v1022, 0
        %v1219 = vsel %vm1040, %v1023, 0
        %v1222 = vsel %vm1040, %v1024, 0
        %v1225 = vsel %vm1040, %v1025, 0
        %v1228 = vsel %vm1040, %v1026, 0
        %v1231 = vsel %vm1040, %v1027, 0
        %1233 = vmatprep.subr.bf16.mxu0 0
        %1234 = vmatpush1.bf16.msra.mxu0 %v1036
        %1235 = vmatprep.subr.bf16.mxu0 0
        %1236 = vmatpush1.bf16.msra.mxu0 %v1037
        %1237 = vmatprep.subr.bf16.mxu0 0
        %1238 = vmatpush1.bf16.msra.mxu0 0
        %1239 = vmatprep.subr.bf16.mxu0 0
        %1240 = vmatpush1.bf16.msra.mxu0 0
        %1241 = vmatprep.subr.bf16.mxu0 0
        %1242 = vmatpush1.bf16.msra.mxu0 0
        %1243 = vmatprep.subr.bf16.mxu0 0
        %1244 = vmatpush1.bf16.msra.mxu0 0
        %1245 = vmatprep.subr.bf16.mxu0 0
        %1246 = vmatpush1.bf16.msra.mxu0 0
        %1247 = vmatprep.subr.bf16.mxu0 0
        %1248 = vmatpush1.bf16.msra.mxu0 0
        %1249 = vmatprep.subr.bf16.mxu0 0
        %1250 = vmatpush1.bf16.msra.mxu0 0
        %1251 = vmatprep.subr.bf16.mxu0 0
        %1252 = vmatpush1.bf16.msra.mxu0 0
        %1253 = vmatprep.subr.bf16.mxu0 0
        %1254 = vmatpush1.bf16.msra.mxu0 0
        %1255 = vmatprep.subr.bf16.mxu0 0
        %1256 = vmatpush1.bf16.msra.mxu0 0
        %1257 = vmatprep.subr.bf16.mxu0 0
        %1258 = vmatpush1.bf16.msra.mxu0 0
        %1259 = vmatprep.subr.bf16.mxu0 0
        %1260 = vmatpush1.bf16.msra.mxu0 0
        %1261 = vmatprep.subr.bf16.mxu0 0
        %1262 = vmatpush1.bf16.msra.mxu0 0
        %1263 = vmatprep.subr.bf16.mxu0 0
        %1264 = vmatpush1.bf16.msra.mxu0 0
        %1265 = vmatprep.mubr.bf16.mxu0 0
        %1266 = vmatmul.mubr.bf16.gmra.mrb[0].mxu0 %v1042
        %v1267 = vpop.f32.mrb[0].mxu0
        %v1268 = vadd.f32 0.0, %v1267
        %v1269 = vpop.f32.mrb[0].mxu0
        %v1270 = vpop.f32.mrb[0].mxu0
        %v1271 = vadd.f32 0.0, %v1270
        %v1272 = vpop.f32.mrb[0].mxu0
        %1273 = vmatprep.mubr.bf16.mxu0 0
        %1274 = vmatmul.mubr.bf16.gmra.mrb[0].mxu0 %v1045
        %v1275 = vpop.f32.mrb[0].mxu0
        %v1276 = vadd.f32 0.0, %v1275
        %v1277 = vpop.f32.mrb[0].mxu0
        %v1278 = vpop.f32.mrb[0].mxu0
        %v1279 = vadd.f32 0.0, %v1278
        %v1280 = vpop.f32.mrb[0].mxu0
        %1281 = vmatprep.mubr.bf16.mxu0 0
        %1282 = vmatmul.mubr.bf16.gmra.mrb[0].mxu0 %v1048
        %v1283 = vpop.f32.mrb[0].mxu0
        %v1284 = vadd.f32 0.0, %v1283
        %v1285 = vpop.f32.mrb[0].mxu0
        %v1286 = vpop.f32.mrb[0].mxu0
        %v1287 = vadd.f32 0.0, %v1286
        %v1288 = vpop.f32.mrb[0].mxu0
        %1289 = vmatprep.mubr.bf16.mxu0 0
        %1290 = vmatmul.mubr.bf16.gmra.mrb[0].mxu0 %v1051
        %v1291 = vpop.f32.mrb[0].mxu0
        %v1292 = vadd.f32 0.0, %v1291
        %v1293 = vpop.f32.mrb[0].mxu0
        %v1294 = vpop.f32.mrb[0].mxu0
        %v1295 = vadd.f32 0.0, %v1294
        %v1296 = vpop.f32.mrb[0].mxu0
        %1297 = vmatprep.mubr.bf16.mxu0 0
        %1298 = vmatmul.mubr.bf16.gmra.mrb[0].mxu0 %v1054
        %v1299 = vpop.f32.mrb[0].mxu0
        %v1300 = vadd.f32 0.0, %v1299
        %v1301 = vpop.f32.mrb[0].mxu0
        %v1302 = vpop.f32.mrb[0].mxu0
        %v1303 = vadd.f32 0.0, %v1302
        %v1304 = vpop.f32.mrb[0].mxu0
        %1305 = vmatprep.mubr.bf16.mxu0 0
        %1306 = vmatmul.mubr.bf16.gmra.mrb[0].mxu0 %v1057
        %v1307 = vpop.f32.mrb[0].mxu0
        %v1308 = vadd.f32 0.0, %v1307
        %v1309 = vpop.f32.mrb[0].mxu0
        %v1310 = vpop.f32.mrb[0].mxu0
        %v1311 = vadd.f32 0.0, %v1310
        %v1312 = vpop.f32.mrb[0].mxu0
        %1313 = vmatprep.mubr.bf16.mxu0 0
        %1314 = vmatmul.mubr.bf16.gmra.mrb[0].mxu0 %v1060
        %v1315 = vpop.f32.mrb[0].mxu0
        %v1316 = vadd.f32 0.0, %v1315
        %v1317 = vpop.f32.mrb[0].mxu0
        %v1318 = vpop.f32.mrb[0].mxu0
        %v1319 = vadd.f32 0.0, %v1318
        %v1320 = vpop.f32.mrb[0].mxu0
        %1321 = vmatprep.mubr.bf16.mxu0 0
        %1322 = vmatmul.mubr.bf16.gmra.mrb[0].mxu0 %v1063
        %v1323 = vpop.f32.mrb[0].mxu0
        %v1324 = vadd.f32 0.0, %v1323
        %v1325 = vpop.f32.mrb[0].mxu0
        %v1326 = vpop.f32.mrb[0].mxu0
        %v1327 = vadd.f32 0.0, %v1326
        %v1328 = vpop.f32.mrb[0].mxu0
        %1329 = vmatprep.mubr.bf16.mxu0 0
        %1330 = vmatmul.mubr.bf16.gmra.mrb[0].mxu0 %v1066
        %v1331 = vpop.f32.mrb[0].mxu0
        %v1332 = vadd.f32 0.0, %v1331
        %v1333 = vpop.f32.mrb[0].mxu0
        %v1334 = vpop.f32.mrb[0].mxu0
        %v1335 = vadd.f32 0.0, %v1334
        %v1336 = vpop.f32.mrb[0].mxu0
        %1337 = vmatprep.mubr.bf16.mxu0 0
        %1338 = vmatmul.mubr.bf16.gmra.mrb[0].mxu0 %v1069
        %v1339 = vpop.f32.mrb[0].mxu0
        %v1340 = vadd.f32 0.0, %v1339
        %v1341 = vpop.f32.mrb[0].mxu0
        %v1342 = vpop.f32.mrb[0].mxu0
        %v1343 = vadd.f32 0.0, %v1342
        %v1344 = vpop.f32.mrb[0].mxu0
        %1345 = vmatprep.mubr.bf16.mxu0 0
        %1346 = vmatmul.mubr.bf16.gmra.mrb[0].mxu0 %v1072
        %v1347 = vpop.f32.mrb[0].mxu0
        %v1348 = vadd.f32 0.0, %v1347
        %v1349 = vpop.f32.mrb[0].mxu0
        %v1350 = vpop.f32.mrb[0].mxu0
        %v1351 = vadd.f32 0.0, %v1350
        %v1352 = vpop.f32.mrb[0].mxu0
        %1353 = vmatprep.mubr.bf16.mxu0 0
        %1354 = vmatmul.mubr.bf16.gmra.mrb[0].mxu0 %v1075
        %v1355 = vpop.f32.mrb[0].mxu0
        %v1356 = vadd.f32 0.0, %v1355
        %v1357 = vpop.f32.mrb[0].mxu0
        %v1358 = vpop.f32.mrb[0].mxu0
        %v1359 = vadd.f32 0.0, %v1358
        %v1360 = vpop.f32.mrb[0].mxu0
        %1361 = vmatprep.mubr.bf16.mxu0 0
        %1362 = vmatmul.mubr.bf16.gmra.mrb[0].mxu0 %v1078
        %v1363 = vpop.f32.mrb[0].mxu0
        %v1364 = vadd.f32 0.0, %v1363
        %v1365 = vpop.f32.mrb[0].mxu0
        %v1366 = vpop.f32.mrb[0].mxu0
        %v1367 = vadd.f32 0.0, %v1366
        %v1368 = vpop.f32.mrb[0].mxu0
        %1369 = vmatprep.mubr.bf16.mxu0 0
        %1370 = vmatmul.mubr.bf16.gmra.mrb[0].mxu0 %v1081
        %v1371 = vpop.f32.mrb[0].mxu0
        %v1372 = vadd.f32 0.0, %v1371
        %v1373 = vpop.f32.mrb[0].mxu0
        %v1374 = vpop.f32.mrb[0].mxu0
        %v1375 = vadd.f32 0.0, %v1374
        %v1376 = vpop.f32.mrb[0].mxu0
        %1377 = vmatprep.mubr.bf16.mxu0 0
        %1378 = vmatmul.mubr.bf16.gmra.mrb[0].mxu0 %v1084
        %v1379 = vpop.f32.mrb[0].mxu0
        %v1380 = vadd.f32 0.0, %v1379
        %v1381 = vpop.f32.mrb[0].mxu0
        %v1382 = vpop.f32.mrb[0].mxu0
        %v1383 = vadd.f32 0.0, %v1382
        %v1384 = vpop.f32.mrb[0].mxu0
        %1385 = vmatprep.mubr.bf16.mxu0 0
        %1386 = vmatmul.mubr.bf16.gmra.mrb[0].mxu0 %v1087
        %v1387 = vpop.f32.mrb[0].mxu0
        %v1388 = vadd.f32 0.0, %v1387
        %v1389 = vpop.f32.mrb[0].mxu0
        %v1390 = vpop.f32.mrb[0].mxu0
        %v1391 = vadd.f32 0.0, %v1390
        %v1392 = vpop.f32.mrb[0].mxu0
        %1393 = vmatprep.mubr.bf16.mxu0 0
        %1394 = vmatmul.mubr.bf16.gmra.mrb[0].mxu0 %v1090
        %v1395 = vpop.f32.mrb[0].mxu0
        %v1396 = vadd.f32 0.0, %v1395
        %v1397 = vpop.f32.mrb[0].mxu0
        %v1398 = vpop.f32.mrb[0].mxu0
        %v1399 = vadd.f32 0.0, %v1398
        %v1400 = vpop.f32.mrb[0].mxu0
        %1401 = vmatprep.mubr.bf16.mxu0 0
        %1402 = vmatmul.mubr.bf16.gmra.mrb[0].mxu0 %v1093
        %v1403 = vpop.f32.mrb[0].mxu0
        %v1404 = vadd.f32 0.0, %v1403
        %v1405 = vpop.f32.mrb[0].mxu0
        %v1406 = vpop.f32.mrb[0].mxu0
        %v1407 = vadd.f32 0.0, %v1406
        %v1408 = vpop.f32.mrb[0].mxu0
        %1409 = vmatprep.mubr.bf16.mxu0 0
        %1410 = vmatmul.mubr.bf16.gmra.mrb[0].mxu0 %v1096
        %v1411 = vpop.f32.mrb[0].mxu0
        %v1412 = vadd.f32 0.0, %v1411
        %v1413 = vpop.f32.mrb[0].mxu0
        %v1414 = vpop.f32.mrb[0].mxu0
        %v1415 = vadd.f32 0.0, %v1414
        %v1416 = vpop.f32.mrb[0].mxu0
        %1417 = vmatprep.mubr.bf16.mxu0 0
        %1418 = vmatmul.mubr.bf16.gmra.mrb[0].mxu0 %v1099
        %v1419 = vpop.f32.mrb[0].mxu0
        %v1420 = vadd.f32 0.0, %v1419
        %v1421 = vpop.f32.mrb[0].mxu0
        %v1422 = vpop.f32.mrb[0].mxu0
        %v1423 = vadd.f32 0.0, %v1422
        %v1424 = vpop.f32.mrb[0].mxu0
        %1425 = vmatprep.mubr.bf16.mxu0 0
        %1426 = vmatmul.mubr.bf16.gmra.mrb[0].mxu0 %v1102
        %v1427 = vpop.f32.mrb[0].mxu0
        %v1428 = vadd.f32 0.0, %v1427
        %v1429 = vpop.f32.mrb[0].mxu0
        %v1430 = vpop.f32.mrb[0].mxu0
        %v1431 = vadd.f32 0.0, %v1430
        %v1432 = vpop.f32.mrb[0].mxu0
        %1433 = vmatprep.mubr.bf16.mxu0 0
        %1434 = vmatmul.mubr.bf16.gmra.mrb[0].mxu0 %v1105
        %v1435 = vpop.f32.mrb[0].mxu0
        %v1436 = vadd.f32 0.0, %v1435
        %v1437 = vpop.f32.mrb[0].mxu0
        %v1438 = vpop.f32.mrb[0].mxu0
        %v1439 = vadd.f32 0.0, %v1438
        %v1440 = vpop.f32.mrb[0].mxu0
        %1441 = vmatprep.mubr.bf16.mxu0 0
        %1442 = vmatmul.mubr.bf16.gmra.mrb[0].mxu0 %v1108
        %v1443 = vpop.f32.mrb[0].mxu0
        %v1444 = vadd.f32 0.0, %v1443
        %v1445 = vpop.f32.mrb[0].mxu0
        %v1446 = vpop.f32.mrb[0].mxu0
        %v1447 = vadd.f32 0.0, %v1446
        %v1448 = vpop.f32.mrb[0].mxu0
        %1449 = vmatprep.mubr.bf16.mxu0 0
        %1450 = vmatmul.mubr.bf16.gmra.mrb[0].mxu0 %v1111
        %v1451 = vpop.f32.mrb[0].mxu0
        %v1452 = vadd.f32 0.0, %v1451
        %v1453 = vpop.f32.mrb[0].mxu0
        %v1454 = vpop.f32.mrb[0].mxu0
        %v1455 = vadd.f32 0.0, %v1454
        %v1456 = vpop.f32.mrb[0].mxu0
        %1457 = vmatprep.mubr.bf16.mxu0 0
        %1458 = vmatmul.mubr.bf16.gmra.mrb[0].mxu0 %v1114
        %v1459 = vpop.f32.mrb[0].mxu0
        %v1460 = vadd.f32 0.0, %v1459
        %v1461 = vpop.f32.mrb[0].mxu0
        %v1462 = vpop.f32.mrb[0].mxu0
        %v1463 = vadd.f32 0.0, %v1462
        %v1464 = vpop.f32.mrb[0].mxu0
        %1465 = vmatprep.mubr.bf16.mxu0 0
        %1466 = vmatmul.mubr.bf16.gmra.mrb[0].mxu0 %v1117
        %v1467 = vpop.f32.mrb[0].mxu0
        %v1468 = vadd.f32 0.0, %v1467
        %v1469 = vpop.f32.mrb[0].mxu0
        %v1470 = vpop.f32.mrb[0].mxu0
        %v1471 = vadd.f32 0.0, %v1470
        %v1472 = vpop.f32.mrb[0].mxu0
        %1473 = vmatprep.mubr.bf16.mxu0 0
        %1474 = vmatmul.mubr.bf16.gmra.mrb[0].mxu0 %v1120
        %v1475 = vpop.f32.mrb[0].mxu0
        %v1476 = vadd.f32 0.0, %v1475
        %v1477 = vpop.f32.mrb[0].mxu0
        %v1478 = vpop.f32.mrb[0].mxu0
        %v1479 = vadd.f32 0.0, %v1478
        %v1480 = vpop.f32.mrb[0].mxu0
        %1481 = vmatprep.mubr.bf16.mxu0 0
        %1482 = vmatmul.mubr.bf16.gmra.mrb[0].mxu0 %v1123
        %v1483 = vpop.f32.mrb[0].mxu0
        %v1484 = vadd.f32 0.0, %v1483
        %v1485 = vpop.f32.mrb[0].mxu0
        %v1486 = vpop.f32.mrb[0].mxu0
        %v1487 = vadd.f32 0.0, %v1486
        %v1488 = vpop.f32.mrb[0].mxu0
        %1489 = vmatprep.mubr.bf16.mxu0 0
        %1490 = vmatmul.mubr.bf16.gmra.mrb[0].mxu0 %v1126
        %v1491 = vpop.f32.mrb[0].mxu0
        %v1492 = vadd.f32 0.0, %v1491
        %v1493 = vpop.f32.mrb[0].mxu0
        %v1494 = vpop.f32.mrb[0].mxu0
        %v1495 = vadd.f32 0.0, %v1494
        %v1496 = vpop.f32.mrb[0].mxu0
        %1497 = vmatprep.mubr.bf16.mxu0 0
        %1498 = vmatmul.mubr.bf16.gmra.mrb[0].mxu0 %v1129
        %v1499 = vpop.f32.mrb[0].mxu0
        %v1500 = vadd.f32 0.0, %v1499
        %v1501 = vpop.f32.mrb[0].mxu0
        %v1502 = vpop.f32.mrb[0].mxu0
        %v1503 = vadd.f32 0.0, %v1502
        %v1504 = vpop.f32.mrb[0].mxu0
        %1505 = vmatprep.mubr.bf16.mxu0 0
        %1506 = vmatmul.mubr.bf16.gmra.mrb[0].mxu0 %v1132
        %v1507 = vpop.f32.mrb[0].mxu0
        %v1508 = vadd.f32 0.0, %v1507
        %v1509 = vpop.f32.mrb[0].mxu0
        %v1510 = vpop.f32.mrb[0].mxu0
        %v1511 = vadd.f32 0.0, %v1510
        %v1512 = vpop.f32.mrb[0].mxu0
        %1513 = vmatprep.mubr.bf16.mxu0 0
        %1514 = vmatmul.mubr.bf16.gmra.mrb[0].mxu0 %v1135
        %v1515 = vpop.f32.mrb[0].mxu0
        %v1516 = vadd.f32 0.0, %v1515
        %v1517 = vpop.f32.mrb[0].mxu0
        %v1518 = vpop.f32.mrb[0].mxu0
        %v1519 = vadd.f32 0.0, %v1518
        %v1520 = vpop.f32.mrb[0].mxu0
        %1521 = vmatprep.mubr.bf16.mxu0 0
        %1522 = vmatmul.mubr.bf16.gmra.mrb[0].mxu0 %v1138
        %v1523 = vpop.f32.mrb[0].mxu0
        %v1524 = vadd.f32 0.0, %v1523
        %v1525 = vpop.f32.mrb[0].mxu0
        %v1526 = vpop.f32.mrb[0].mxu0
        %v1527 = vadd.f32 0.0, %v1526
        %v1528 = vpop.f32.mrb[0].mxu0
        %1529 = vmatprep.mubr.bf16.mxu0 0
        %1530 = vmatmul.mubr.bf16.gmra.mrb[0].mxu0 %v1141
        %v1531 = vpop.f32.mrb[0].mxu0
        %v1532 = vadd.f32 0.0, %v1531
        %v1533 = vpop.f32.mrb[0].mxu0
        %v1534 = vpop.f32.mrb[0].mxu0
        %v1535 = vadd.f32 0.0, %v1534
        %v1536 = vpop.f32.mrb[0].mxu0
        %1537 = vmatprep.mubr.bf16.mxu0 0
        %1538 = vmatmul.mubr.bf16.gmra.mrb[0].mxu0 %v1144
        %v1539 = vpop.f32.mrb[0].mxu0
        %v1540 = vadd.f32 0.0, %v1539
        %v1541 = vpop.f32.mrb[0].mxu0
        %v1542 = vpop.f32.mrb[0].mxu0
        %v1543 = vadd.f32 0.0, %v1542
        %v1544 = vpop.f32.mrb[0].mxu0
        %1545 = vmatprep.mubr.bf16.mxu0 0
        %1546 = vmatmul.mubr.bf16.gmra.mrb[0].mxu0 %v1147
        %v1547 = vpop.f32.mrb[0].mxu0
        %v1548 = vadd.f32 0.0, %v1547
        %v1549 = vpop.f32.mrb[0].mxu0
        %v1550 = vpop.f32.mrb[0].mxu0
        %v1551 = vadd.f32 0.0, %v1550
        %v1552 = vpop.f32.mrb[0].mxu0
        %1553 = vmatprep.mubr.bf16.mxu0 0
        %1554 = vmatmul.mubr.bf16.gmra.mrb[0].mxu0 %v1150
        %v1555 = vpop.f32.mrb[0].mxu0
        %v1556 = vadd.f32 0.0, %v1555
        %v1557 = vpop.f32.mrb[0].mxu0
        %v1558 = vpop.f32.mrb[0].mxu0
        %v1559 = vadd.f32 0.0, %v1558
        %v1560 = vpop.f32.mrb[0].mxu0
        %1561 = vmatprep.mubr.bf16.mxu0 0
        %1562 = vmatmul.mubr.bf16.gmra.mrb[0].mxu0 %v1153
        %v1563 = vpop.f32.mrb[0].mxu0
        %v1564 = vadd.f32 0.0, %v1563
        %v1565 = vpop.f32.mrb[0].mxu0
        %v1566 = vpop.f32.mrb[0].mxu0
        %v1567 = vadd.f32 0.0, %v1566
        %v1568 = vpop.f32.mrb[0].mxu0
        %1569 = vmatprep.mubr.bf16.mxu0 0
        %1570 = vmatmul.mubr.bf16.gmra.mrb[0].mxu0 %v1156
        %v1571 = vpop.f32.mrb[0].mxu0
        %v1572 = vadd.f32 0.0, %v1571
        %v1573 = vpop.f32.mrb[0].mxu0
        %v1574 = vpop.f32.mrb[0].mxu0
        %v1575 = vadd.f32 0.0, %v1574
        %v1576 = vpop.f32.mrb[0].mxu0
        %1577 = vmatprep.mubr.bf16.mxu0 0
        %1578 = vmatmul.mubr.bf16.gmra.mrb[0].mxu0 %v1159
        %v1579 = vpop.f32.mrb[0].mxu0
        %v1580 = vadd.f32 0.0, %v1579
        %v1581 = vpop.f32.mrb[0].mxu0
        %v1582 = vpop.f32.mrb[0].mxu0
        %v1583 = vadd.f32 0.0, %v1582
        %v1584 = vpop.f32.mrb[0].mxu0
        %1585 = vmatprep.mubr.bf16.mxu0 0
        %1586 = vmatmul.mubr.bf16.gmra.mrb[0].mxu0 %v1162
        %v1587 = vpop.f32.mrb[0].mxu0
        %v1588 = vadd.f32 0.0, %v1587
        %v1589 = vpop.f32.mrb[0].mxu0
        %v1590 = vpop.f32.mrb[0].mxu0
        %v1591 = vadd.f32 0.0, %v1590
        %v1592 = vpop.f32.mrb[0].mxu0
        %1593 = vmatprep.mubr.bf16.mxu0 0
        %1594 = vmatmul.mubr.bf16.gmra.mrb[0].mxu0 %v1165
        %v1595 = vpop.f32.mrb[0].mxu0
        %v1596 = vadd.f32 0.0, %v1595
        %v1597 = vpop.f32.mrb[0].mxu0
        %v1598 = vpop.f32.mrb[0].mxu0
        %v1599 = vadd.f32 0.0, %v1598
        %v1600 = vpop.f32.mrb[0].mxu0
        %1601 = vmatprep.mubr.bf16.mxu0 0
        %1602 = vmatmul.mubr.bf16.gmra.mrb[0].mxu0 %v1168
        %v1603 = vpop.f32.mrb[0].mxu0
        %v1604 = vadd.f32 0.0, %v1603
        %v1605 = vpop.f32.mrb[0].mxu0
        %v1606 = vpop.f32.mrb[0].mxu0
        %v1607 = vadd.f32 0.0, %v1606
        %v1608 = vpop.f32.mrb[0].mxu0
        %1609 = vmatprep.mubr.bf16.mxu0 0
        %1610 = vmatmul.mubr.bf16.gmra.mrb[0].mxu0 %v1171
        %v1611 = vpop.f32.mrb[0].mxu0
        %v1612 = vadd.f32 0.0, %v1611
        %v1613 = vpop.f32.mrb[0].mxu0
        %v1614 = vpop.f32.mrb[0].mxu0
        %v1615 = vadd.f32 0.0, %v1614
        %v1616 = vpop.f32.mrb[0].mxu0
        %1617 = vmatprep.mubr.bf16.mxu0 0
        %1618 = vmatmul.mubr.bf16.gmra.mrb[0].mxu0 %v1174
        %v1619 = vpop.f32.mrb[0].mxu0
        %v1620 = vadd.f32 0.0, %v1619
        %v1621 = vpop.f32.mrb[0].mxu0
        %v1622 = vpop.f32.mrb[0].mxu0
        %v1623 = vadd.f32 0.0, %v1622
        %v1624 = vpop.f32.mrb[0].mxu0
        %1625 = vmatprep.mubr.bf16.mxu0 0
        %1626 = vmatmul.mubr.bf16.gmra.mrb[0].mxu0 %v1177
        %v1627 = vpop.f32.mrb[0].mxu0
        %v1628 = vadd.f32 0.0, %v1627
        %v1629 = vpop.f32.mrb[0].mxu0
        %v1630 = vpop.f32.mrb[0].mxu0
        %v1631 = vadd.f32 0.0, %v1630
        %v1632 = vpop.f32.mrb[0].mxu0
        %1633 = vmatprep.mubr.bf16.mxu0 0
        %1634 = vmatmul.mubr.bf16.gmra.mrb[0].mxu0 %v1180
        %v1635 = vpop.f32.mrb[0].mxu0
        %v1636 = vadd.f32 0.0, %v1635
        %v1637 = vpop.f32.mrb[0].mxu0
        %v1638 = vpop.f32.mrb[0].mxu0
        %v1639 = vadd.f32 0.0, %v1638
        %v1640 = vpop.f32.mrb[0].mxu0
        %1641 = vmatprep.mubr.bf16.mxu0 0
        %1642 = vmatmul.mubr.bf16.gmra.mrb[0].mxu0 %v1183
        %v1643 = vpop.f32.mrb[0].mxu0
        %v1644 = vadd.f32 0.0, %v1643
        %v1645 = vpop.f32.mrb[0].mxu0
        %v1646 = vpop.f32.mrb[0].mxu0
        %v1647 = vadd.f32 0.0, %v1646
        %v1648 = vpop.f32.mrb[0].mxu0
        %1649 = vmatprep.mubr.bf16.mxu0 0
        %1650 = vmatmul.mubr.bf16.gmra.mrb[0].mxu0 %v1186
        %v1651 = vpop.f32.mrb[0].mxu0
        %v1652 = vadd.f32 0.0, %v1651
        %v1653 = vpop.f32.mrb[0].mxu0
        %v1654 = vpop.f32.mrb[0].mxu0
        %v1655 = vadd.f32 0.0, %v1654
        %v1656 = vpop.f32.mrb[0].mxu0
        %1657 = vmatprep.mubr.bf16.mxu0 0
        %1658 = vmatmul.mubr.bf16.gmra.mrb[0].mxu0 %v1189
        %v1659 = vpop.f32.mrb[0].mxu0
        %v1660 = vadd.f32 0.0, %v1659
        %v1661 = vpop.f32.mrb[0].mxu0
        %v1662 = vpop.f32.mrb[0].mxu0
        %v1663 = vadd.f32 0.0, %v1662
        %v1664 = vpop.f32.mrb[0].mxu0
        %1665 = vmatprep.mubr.bf16.mxu0 0
        %1666 = vmatmul.mubr.bf16.gmra.mrb[0].mxu0 %v1192
        %v1667 = vpop.f32.mrb[0].mxu0
        %v1668 = vadd.f32 0.0, %v1667
        %v1669 = vpop.f32.mrb[0].mxu0
        %v1670 = vpop.f32.mrb[0].mxu0
        %v1671 = vadd.f32 0.0, %v1670
        %v1672 = vpop.f32.mrb[0].mxu0
        %1673 = vmatprep.mubr.bf16.mxu0 0
        %1674 = vmatmul.mubr.bf16.gmra.mrb[0].mxu0 %v1195
        %v1675 = vpop.f32.mrb[0].mxu0
        %v1676 = vadd.f32 0.0, %v1675
        %v1677 = vpop.f32.mrb[0].mxu0
        %v1678 = vpop.f32.mrb[0].mxu0
        %v1679 = vadd.f32 0.0, %v1678
        %v1680 = vpop.f32.mrb[0].mxu0
        %1681 = vmatprep.mubr.bf16.mxu0 0
        %1682 = vmatmul.mubr.bf16.gmra.mrb[0].mxu0 %v1198
        %v1683 = vpop.f32.mrb[0].mxu0
        %v1684 = vadd.f32 0.0, %v1683
        %v1685 = vpop.f32.mrb[0].mxu0
        %v1686 = vpop.f32.mrb[0].mxu0
        %v1687 = vadd.f32 0.0, %v1686
        %v1688 = vpop.f32.mrb[0].mxu0
        %1689 = vmatprep.mubr.bf16.mxu0 0
        %1690 = vmatmul.mubr.bf16.gmra.mrb[0].mxu0 %v1201
        %v1691 = vpop.f32.mrb[0].mxu0
        %v1692 = vadd.f32 0.0, %v1691
        %v1693 = vpop.f32.mrb[0].mxu0
        %v1694 = vpop.f32.mrb[0].mxu0
        %v1695 = vadd.f32 0.0, %v1694
        %v1696 = vpop.f32.mrb[0].mxu0
        %1697 = vmatprep.mubr.bf16.mxu0 0
        %1698 = vmatmul.mubr.bf16.gmra.mrb[0].mxu0 %v1204
        %v1699 = vpop.f32.mrb[0].mxu0
        %v1700 = vadd.f32 0.0, %v1699
        %v1701 = vpop.f32.mrb[0].mxu0
        %v1702 = vpop.f32.mrb[0].mxu0
        %v1703 = vadd.f32 0.0, %v1702
        %v1704 = vpop.f32.mrb[0].mxu0
        %1705 = vmatprep.mubr.bf16.mxu0 0
        %1706 = vmatmul.mubr.bf16.gmra.mrb[0].mxu0 %v1207
        %v1707 = vpop.f32.mrb[0].mxu0
        %v1708 = vadd.f32 0.0, %v1707
        %v1709 = vpop.f32.mrb[0].mxu0
        %v1710 = vpop.f32.mrb[0].mxu0
        %v1711 = vadd.f32 0.0, %v1710
        %v1712 = vpop.f32.mrb[0].mxu0
        %1713 = vmatprep.mubr.bf16.mxu0 0
        %1714 = vmatmul.mubr.bf16.gmra.mrb[0].mxu0 %v1210
        %v1715 = vpop.f32.mrb[0].mxu0
        %v1716 = vadd.f32 0.0, %v1715
        %v1717 = vpop.f32.mrb[0].mxu0
        %v1718 = vpop.f32.mrb[0].mxu0
        %v1719 = vadd.f32 0.0, %v1718
        %v1720 = vpop.f32.mrb[0].mxu0
        %1721 = vmatprep.mubr.bf16.mxu0 0
        %1722 = vmatmul.mubr.bf16.gmra.mrb[0].mxu0 %v1213
        %v1723 = vpop.f32.mrb[0].mxu0
        %v1724 = vadd.f32 0.0, %v1723
        %v1725 = vpop.f32.mrb[0].mxu0
        %v1726 = vpop.f32.mrb[0].mxu0
        %v1727 = vadd.f32 0.0, %v1726
        %v1728 = vpop.f32.mrb[0].mxu0
        %1729 = vmatprep.mubr.bf16.mxu0 0
        %1730 = vmatmul.mubr.bf16.gmra.mrb[0].mxu0 %v1216
        %v1731 = vpop.f32.mrb[0].mxu0
        %v1732 = vadd.f32 0.0, %v1731
        %v1733 = vpop.f32.mrb[0].mxu0
        %v1734 = vpop.f32.mrb[0].mxu0
        %v1735 = vadd.f32 0.0, %v1734
        %v1736 = vpop.f32.mrb[0].mxu0
        %1737 = vmatprep.mubr.bf16.mxu0 0
        %1738 = vmatmul.mubr.bf16.gmra.mrb[0].mxu0 %v1219
        %v1739 = vpop.f32.mrb[0].mxu0
        %v1740 = vadd.f32 0.0, %v1739
        %v1741 = vpop.f32.mrb[0].mxu0
        %v1742 = vpop.f32.mrb[0].mxu0
        %v1743 = vadd.f32 0.0, %v1742
        %v1744 = vpop.f32.mrb[0].mxu0
        %1745 = vmatprep.mubr.bf16.mxu0 0
        %1746 = vmatmul.mubr.bf16.gmra.mrb[0].mxu0 %v1222
        %v1747 = vpop.f32.mrb[0].mxu0
        %v1748 = vadd.f32 0.0, %v1747
        %v1749 = vpop.f32.mrb[0].mxu0
        %v1750 = vpop.f32.mrb[0].mxu0
        %v1751 = vadd.f32 0.0, %v1750
        %v1752 = vpop.f32.mrb[0].mxu0
        %1753 = vmatprep.mubr.bf16.mxu0 0
        %1754 = vmatmul.mubr.bf16.gmra.mrb[0].mxu0 %v1225
        %v1755 = vpop.f32.mrb[0].mxu0
        %v1756 = vadd.f32 0.0, %v1755
        %v1757 = vpop.f32.mrb[0].mxu0
        %v1758 = vpop.f32.mrb[0].mxu0
        %v1759 = vadd.f32 0.0, %v1758
        %v1760 = vpop.f32.mrb[0].mxu0
        %1761 = vmatprep.mubr.bf16.mxu0 0
        %1762 = vmatmul.mubr.bf16.gmra.mrb[0].mxu0 %v1228
        %v1763 = vpop.f32.mrb[0].mxu0
        %v1764 = vadd.f32 0.0, %v1763
        %v1765 = vpop.f32.mrb[0].mxu0
        %v1766 = vpop.f32.mrb[0].mxu0
        %v1767 = vadd.f32 0.0, %v1766
        %v1768 = vpop.f32.mrb[0].mxu0
        %1769 = vmatprep.mubr.bf16.mxu0 0
        %1770 = vmatmul.mubr.bf16.gmra.mrb[0].mxu0 %v1231
        %v1771 = vpop.f32.mrb[0].mxu0
        %v1772 = vadd.f32 0.0, %v1771
        %v1773 = vpop.f32.mrb[0].mxu0
        %v1774 = vpop.f32.mrb[0].mxu0
        %v1775 = vadd.f32 0.0, %v1774
        %v1776 = vpop.f32.mrb[0].mxu0
        %1777 = vdwg.mxu0
        %v1778 = vadd.f32 %v576, %v1268
        %v1779 = vadd.f32 %v577, %v1271
        %v1780 = vadd.f32 %v578, %v1276
        %v1781 = vadd.f32 %v579, %v1279
        %v1782 = vadd.f32 %v580, %v1284
        %v1783 = vadd.f32 %v581, %v1287
        %v1784 = vadd.f32 %v582, %v1292
        %v1785 = vadd.f32 %v583, %v1295
        %v1786 = vadd.f32 %v584, %v1300
        %v1787 = vadd.f32 %v585, %v1303
        %v1788 = vadd.f32 %v586, %v1308
        %v1789 = vadd.f32 %v587, %v1311
        %v1790 = vadd.f32 %v588, %v1316
        %v1791 = vadd.f32 %v589, %v1319
        %v1792 = vadd.f32 %v590, %v1324
        %v1793 = vadd.f32 %v591, %v1327
        %v1794 = vadd.f32 %v592, %v1332
        %v1795 = vadd.f32 %v593, %v1335
        %v1796 = vadd.f32 %v594, %v1340
        %v1797 = vadd.f32 %v595, %v1343
        %v1798 = vadd.f32 %v596, %v1348
        %v1799 = vadd.f32 %v597, %v1351
        %v1800 = vadd.f32 %v598, %v1356
        %v1801 = vadd.f32 %v599, %v1359
        %v1802 = vadd.f32 %v600, %v1364
        %v1803 = vadd.f32 %v601, %v1367
        %v1804 = vadd.f32 %v602, %v1372
        %v1805 = vadd.f32 %v603, %v1375
        %v1806 = vadd.f32 %v604, %v1380
        %v1807 = vadd.f32 %v605, %v1383
        %v1808 = vadd.f32 %v606, %v1388
        %v1809 = vadd.f32 %v607, %v1391
        %v1810 = vadd.f32 %v608, %v1396
        %v1811 = vadd.f32 %v609, %v1399
        %v1812 = vadd.f32 %v610, %v1404
        %v1813 = vadd.f32 %v611, %v1407
        %v1814 = vadd.f32 %v612, %v1412
        %v1815 = vadd.f32 %v613, %v1415
        %v1816 = vadd.f32 %v614, %v1420
        %v1817 = vadd.f32 %v615, %v1423
        %v1818 = vadd.f32 %v616, %v1428
        %v1819 = vadd.f32 %v617, %v1431
        %v1820 = vadd.f32 %v618, %v1436
        %v1821 = vadd.f32 %v619, %v1439
        %v1822 = vadd.f32 %v620, %v1444
        %v1823 = vadd.f32 %v621, %v1447
        %v1824 = vadd.f32 %v622, %v1452
        %v1825 = vadd.f32 %v623, %v1455
        %v1826 = vadd.f32 %v624, %v1460
        %v1827 = vadd.f32 %v625, %v1463
        %v1828 = vadd.f32 %v626, %v1468
        %v1829 = vadd.f32 %v627, %v1471
        %v1830 = vadd.f32 %v628, %v1476
        %v1831 = vadd.f32 %v629, %v1479
        %v1832 = vadd.f32 %v630, %v1484
        %v1833 = vadd.f32 %v631, %v1487
        %v1834 = vadd.f32 %v632, %v1492
        %v1835 = vadd.f32 %v633, %v1495
        %v1836 = vadd.f32 %v634, %v1500
        %v1837 = vadd.f32 %v635, %v1503
        %v1838 = vadd.f32 %v636, %v1508
        %v1839 = vadd.f32 %v637, %v1511
        %v1840 = vadd.f32 %v638, %v1516
        %v1841 = vadd.f32 %v639, %v1519
        %v1842 = vadd.f32 %v640, %v1524
        %v1843 = vadd.f32 %v641, %v1527
        %v1844 = vadd.f32 %v642, %v1532
        %v1845 = vadd.f32 %v643, %v1535
        %v1846 = vadd.f32 %v644, %v1540
        %v1847 = vadd.f32 %v645, %v1543
        %v1848 = vadd.f32 %v646, %v1548
        %v1849 = vadd.f32 %v647, %v1551
        %v1850 = vadd.f32 %v648, %v1556
        %v1851 = vadd.f32 %v649, %v1559
        %v1852 = vadd.f32 %v650, %v1564
        %v1853 = vadd.f32 %v651, %v1567
        %v1854 = vadd.f32 %v652, %v1572
        %v1855 = vadd.f32 %v653, %v1575
        %v1856 = vadd.f32 %v654, %v1580
        %v1857 = vadd.f32 %v655, %v1583
        %v1858 = vadd.f32 %v656, %v1588
        %v1859 = vadd.f32 %v657, %v1591
        %v1860 = vadd.f32 %v658, %v1596
        %v1861 = vadd.f32 %v659, %v1599
        %v1862 = vadd.f32 %v660, %v1604
        %v1863 = vadd.f32 %v661, %v1607
        %v1864 = vadd.f32 %v662, %v1612
        %v1865 = vadd.f32 %v663, %v1615
        %v1866 = vadd.f32 %v664, %v1620
        %v1867 = vadd.f32 %v665, %v1623
        %v1868 = vadd.f32 %v666, %v1628
        %v1869 = vadd.f32 %v667, %v1631
        %v1870 = vadd.f32 %v668, %v1636
        %v1871 = vadd.f32 %v669, %v1639
        %v1872 = vadd.f32 %v670, %v1644
        %v1873 = vadd.f32 %v671, %v1647
        %v1874 = vadd.f32 %v672, %v1652
        %v1875 = vadd.f32 %v673, %v1655
        %v1876 = vadd.f32 %v674, %v1660
        %v1877 = vadd.f32 %v675, %v1663
        %v1878 = vadd.f32 %v676, %v1668
        %v1879 = vadd.f32 %v677, %v1671
        %v1880 = vadd.f32 %v678, %v1676
        %v1881 = vadd.f32 %v679, %v1679
        %v1882 = vadd.f32 %v680, %v1684
        %v1883 = vadd.f32 %v681, %v1687
        %v1884 = vadd.f32 %v682, %v1692
        %v1885 = vadd.f32 %v683, %v1695
        %v1886 = vadd.f32 %v684, %v1700
        %v1887 = vadd.f32 %v685, %v1703
        %v1888 = vadd.f32 %v686, %v1708
        %v1889 = vadd.f32 %v687, %v1711
        %v1890 = vadd.f32 %v688, %v1716
        %v1891 = vadd.f32 %v689, %v1719
        %v1892 = vadd.f32 %v690, %v1724
        %v1893 = vadd.f32 %v691, %v1727
        %v1894 = vadd.f32 %v692, %v1732
        %v1895 = vadd.f32 %v693, %v1735
        %v1896 = vadd.f32 %v694, %v1740
        %v1897 = vadd.f32 %v695, %v1743
        %v1898 = vadd.f32 %v696, %v1748
        %v1899 = vadd.f32 %v697, %v1751
        %v1900 = vadd.f32 %v698, %v1756
        %v1901 = vadd.f32 %v699, %v1759
        %v1902 = vadd.f32 %v700, %v1764
        %v1903 = vadd.f32 %v701, %v1767
        %v1904 = vadd.f32 %v702, %v1772
        %v1905 = vadd.f32 %v703, %v1775
        %1906 = vst [vmem:[#allocation2] sm:$0xff] %v1778
        %1907 = vst [vmem:[#allocation2 + $0x8] sm:$0xff] %v1779
        %1908 = vst [vmem:[#allocation2 + $0x10] sm:$0xff] %v1780
        %1909 = vst [vmem:[#allocation2 + $0x18] sm:$0xff] %v1781
        %1910 = vst [vmem:[#allocation2 + $0x20] sm:$0xff] %v1782
        %1911 = vst [vmem:[#allocation2 + $0x28] sm:$0xff] %v1783
        %1912 = vst [vmem:[#allocation2 + $0x30] sm:$0xff] %v1784
        %1913 = vst [vmem:[#allocation2 + $0x38] sm:$0xff] %v1785
        %1914 = vst [vmem:[#allocation2 + $0x40] sm:$0xff] %v1786
        %1915 = vst [vmem:[#allocation2 + $0x48] sm:$0xff] %v1787
        %1916 = vst [vmem:[#allocation2 + $0x50] sm:$0xff] %v1788
        %1917 = vst [vmem:[#allocation2 + $0x58] sm:$0xff] %v1789
        %1918 = vst [vmem:[#allocation2 + $0x60] sm:$0xff] %v1790
        %1919 = vst [vmem:[#allocation2 + $0x68] sm:$0xff] %v1791
        %1920 = vst [vmem:[#allocation2 + $0x70] sm:$0xff] %v1792
        %1921 = vst [vmem:[#allocation2 + $0x78] sm:$0xff] %v1793
        %1922 = vst [vmem:[#allocation2 + $0x80] sm:$0xff] %v1794
        %1923 = vst [vmem:[#allocation2 + $0x88] sm:$0xff] %v1795
        %1924 = vst [vmem:[#allocation2 + $0x90] sm:$0xff] %v1796
        %1925 = vst [vmem:[#allocation2 + $0x98] sm:$0xff] %v1797
        %1926 = vst [vmem:[#allocation2 + $0xa0] sm:$0xff] %v1798
        %1927 = vst [vmem:[#allocation2 + $0xa8] sm:$0xff] %v1799
        %1928 = vst [vmem:[#allocation2 + $0xb0] sm:$0xff] %v1800
        %1929 = vst [vmem:[#allocation2 + $0xb8] sm:$0xff] %v1801
        %1930 = vst [vmem:[#allocation2 + $0xc0] sm:$0xff] %v1802
        %1931 = vst [vmem:[#allocation2 + $0xc8] sm:$0xff] %v1803
        %1932 = vst [vmem:[#allocation2 + $0xd0] sm:$0xff] %v1804
        %1933 = vst [vmem:[#allocation2 + $0xd8] sm:$0xff] %v1805
        %1934 = vst [vmem:[#allocation2 + $0xe0] sm:$0xff] %v1806
        %1935 = vst [vmem:[#allocation2 + $0xe8] sm:$0xff] %v1807
        %1936 = vst [vmem:[#allocation2 + $0xf0] sm:$0xff] %v1808
        %1937 = vst [vmem:[#allocation2 + $0xf8] sm:$0xff] %v1809
        %1938 = vst [vmem:[#allocation2 + $0x100] sm:$0xff] %v1810
        %1939 = vst [vmem:[#allocation2 + $0x108] sm:$0xff] %v1811
        %1940 = vst [vmem:[#allocation2 + $0x110] sm:$0xff] %v1812
        %1941 = vst [vmem:[#allocation2 + $0x118] sm:$0xff] %v1813
        %1942 = vst [vmem:[#allocation2 + $0x120] sm:$0xff] %v1814
        %1943 = vst [vmem:[#allocation2 + $0x128] sm:$0xff] %v1815
        %1944 = vst [vmem:[#allocation2 + $0x130] sm:$0xff] %v1816
        %1945 = vst [vmem:[#allocation2 + $0x138] sm:$0xff] %v1817
        %1946 = vst [vmem:[#allocation2 + $0x140] sm:$0xff] %v1818
        %1947 = vst [vmem:[#allocation2 + $0x148] sm:$0xff] %v1819
        %1948 = vst [vmem:[#allocation2 + $0x150] sm:$0xff] %v1820
        %1949 = vst [vmem:[#allocation2 + $0x158] sm:$0xff] %v1821
        %1950 = vst [vmem:[#allocation2 + $0x160] sm:$0xff] %v1822
        %1951 = vst [vmem:[#allocation2 + $0x168] sm:$0xff] %v1823
        %1952 = vst [vmem:[#allocation2 + $0x170] sm:$0xff] %v1824
        %1953 = vst [vmem:[#allocation2 + $0x178] sm:$0xff] %v1825
        %1954 = vst [vmem:[#allocation2 + $0x180] sm:$0xff] %v1826
        %1955 = vst [vmem:[#allocation2 + $0x188] sm:$0xff] %v1827
        %1956 = vst [vmem:[#allocation2 + $0x190] sm:$0xff] %v1828
        %1957 = vst [vmem:[#allocation2 + $0x198] sm:$0xff] %v1829
        %1958 = vst [vmem:[#allocation2 + $0x1a0] sm:$0xff] %v1830
        %1959 = vst [vmem:[#allocation2 + $0x1a8] sm:$0xff] %v1831
        %1960 = vst [vmem:[#allocation2 + $0x1b0] sm:$0xff] %v1832
        %1961 = vst [vmem:[#allocation2 + $0x1b8] sm:$0xff] %v1833
        %1962 = vst [vmem:[#allocation2 + $0x1c0] sm:$0xff] %v1834
        %1963 = vst [vmem:[#allocation2 + $0x1c8] sm:$0xff] %v1835
        %1964 = vst [vmem:[#allocation2 + $0x1d0] sm:$0xff] %v1836
        %1965 = vst [vmem:[#allocation2 + $0x1d8] sm:$0xff] %v1837
        %1966 = vst [vmem:[#allocation2 + $0x1e0] sm:$0xff] %v1838
        %1967 = vst [vmem:[#allocation2 + $0x1e8] sm:$0xff] %v1839
        %1968 = vst [vmem:[#allocation2 + $0x1f0] sm:$0xff] %v1840
        %1969 = vst [vmem:[#allocation2 + $0x1f8] sm:$0xff] %v1841
        %1970 = vst [vmem:[#allocation2 + $0x200] sm:$0xff] %v1842
        %1971 = vst [vmem:[#allocation2 + $0x208] sm:$0xff] %v1843
        %1972 = vst [vmem:[#allocation2 + $0x210] sm:$0xff] %v1844
        %1973 = vst [vmem:[#allocation2 + $0x218] sm:$0xff] %v1845
        %1974 = vst [vmem:[#allocation2 + $0x220] sm:$0xff] %v1846
        %1975 = vst [vmem:[#allocation2 + $0x228] sm:$0xff] %v1847
        %1976 = vst [vmem:[#allocation2 + $0x230] sm:$0xff] %v1848
        %1977 = vst [vmem:[#allocation2 + $0x238] sm:$0xff] %v1849
        %1978 = vst [vmem:[#allocation2 + $0x240] sm:$0xff] %v1850
        %1979 = vst [vmem:[#allocation2 + $0x248] sm:$0xff] %v1851
        %1980 = vst [vmem:[#allocation2 + $0x250] sm:$0xff] %v1852
        %1981 = vst [vmem:[#allocation2 + $0x258] sm:$0xff] %v1853
        %1982 = vst [vmem:[#allocation2 + $0x260] sm:$0xff] %v1854
        %1983 = vst [vmem:[#allocation2 + $0x268] sm:$0xff] %v1855
        %1984 = vst [vmem:[#allocation2 + $0x270] sm:$0xff] %v1856
        %1985 = vst [vmem:[#allocation2 + $0x278] sm:$0xff] %v1857
        %1986 = vst [vmem:[#allocation2 + $0x280] sm:$0xff] %v1858
        %1987 = vst [vmem:[#allocation2 + $0x288] sm:$0xff] %v1859
        %1988 = vst [vmem:[#allocation2 + $0x290] sm:$0xff] %v1860
        %1989 = vst [vmem:[#allocation2 + $0x298] sm:$0xff] %v1861
        %1990 = vst [vmem:[#allocation2 + $0x2a0] sm:$0xff] %v1862
        %1991 = vst [vmem:[#allocation2 + $0x2a8] sm:$0xff] %v1863
        %1992 = vst [vmem:[#allocation2 + $0x2b0] sm:$0xff] %v1864
        %1993 = vst [vmem:[#allocation2 + $0x2b8] sm:$0xff] %v1865
        %1994 = vst [vmem:[#allocation2 + $0x2c0] sm:$0xff] %v1866
        %1995 = vst [vmem:[#allocation2 + $0x2c8] sm:$0xff] %v1867
        %1996 = vst [vmem:[#allocation2 + $0x2d0] sm:$0xff] %v1868
        %1997 = vst [vmem:[#allocation2 + $0x2d8] sm:$0xff] %v1869
        %1998 = vst [vmem:[#allocation2 + $0x2e0] sm:$0xff] %v1870
        %1999 = vst [vmem:[#allocation2 + $0x2e8] sm:$0xff] %v1871
        %2000 = vst [vmem:[#allocation2 + $0x2f0] sm:$0xff] %v1872
        %2001 = vst [vmem:[#allocation2 + $0x2f8] sm:$0xff] %v1873
        %2002 = vst [vmem:[#allocation2 + $0x300] sm:$0xff] %v1874
        %2003 = vst [vmem:[#allocation2 + $0x308] sm:$0xff] %v1875
        %2004 = vst [vmem:[#allocation2 + $0x310] sm:$0xff] %v1876
        %2005 = vst [vmem:[#allocation2 + $0x318] sm:$0xff] %v1877
        %2006 = vst [vmem:[#allocation2 + $0x320] sm:$0xff] %v1878
        %2007 = vst [vmem:[#allocation2 + $0x328] sm:$0xff] %v1879
        %2008 = vst [vmem:[#allocation2 + $0x330] sm:$0xff] %v1880
        %2009 = vst [vmem:[#allocation2 + $0x338] sm:$0xff] %v1881
        %2010 = vst [vmem:[#allocation2 + $0x340] sm:$0xff] %v1882
        %2011 = vst [vmem:[#allocation2 + $0x348] sm:$0xff] %v1883
        %2012 = vst [vmem:[#allocation2 + $0x350] sm:$0xff] %v1884
        %2013 = vst [vmem:[#allocation2 + $0x358] sm:$0xff] %v1885
        %2014 = vst [vmem:[#allocation2 + $0x360] sm:$0xff] %v1886
        %2015 = vst [vmem:[#allocation2 + $0x368] sm:$0xff] %v1887
        %2016 = vst [vmem:[#allocation2 + $0x370] sm:$0xff] %v1888
        %2017 = vst [vmem:[#allocation2 + $0x378] sm:$0xff] %v1889
        %2018 = vst [vmem:[#allocation2 + $0x380] sm:$0xff] %v1890
        %2019 = vst [vmem:[#allocation2 + $0x388] sm:$0xff] %v1891
        %2020 = vst [vmem:[#allocation2 + $0x390] sm:$0xff] %v1892
        %2021 = vst [vmem:[#allocation2 + $0x398] sm:$0xff] %v1893
        %2022 = vst [vmem:[#allocation2 + $0x3a0] sm:$0xff] %v1894
        %2023 = vst [vmem:[#allocation2 + $0x3a8] sm:$0xff] %v1895
        %2024 = vst [vmem:[#allocation2 + $0x3b0] sm:$0xff] %v1896
        %2025 = vst [vmem:[#allocation2 + $0x3b8] sm:$0xff] %v1897
        %2026 = vst [vmem:[#allocation2 + $0x3c0] sm:$0xff] %v1898
        %2027 = vst [vmem:[#allocation2 + $0x3c8] sm:$0xff] %v1899
        %2028 = vst [vmem:[#allocation2 + $0x3d0] sm:$0xff] %v1900
        %2029 = vst [vmem:[#allocation2 + $0x3d8] sm:$0xff] %v1901
        %2030 = vst [vmem:[#allocation2 + $0x3e0] sm:$0xff] %v1902
        %2031 = vst [vmem:[#allocation2 + $0x3e8] sm:$0xff] %v1903
        %2032 = vst [vmem:[#allocation2 + $0x3f0] sm:$0xff] %v1904
        %2033 = vst [vmem:[#allocation2 + $0x3f8] sm:$0xff] %v1905
        // Predicated region
        $region41: #{stem_conv.1} parent=35 // pred_check
          %p2034 = pneg %p316
        $region42: #{stem_conv.1} parent=35 // pred_check_branch
          %2036 = sbr.rel (%p2034) target = $region44
        $region43: #{stem_conv.1} parent=35 // pred_region
          %v2037 = vld [vmem:[#allocation2] sm:$0xff]
          %v2038 = vld [vmem:[#allocation2 + $0x8] sm:$0xff]
          %v2039 = vld [vmem:[#allocation2 + $0x10] sm:$0xff]
          %v2040 = vld [vmem:[#allocation2 + $0x18] sm:$0xff]
          %v2041 = vld [vmem:[#allocation2 + $0x20] sm:$0xff]
          %v2042 = vld [vmem:[#allocation2 + $0x28] sm:$0xff]
          %v2043 = vld [vmem:[#allocation2 + $0x30] sm:$0xff]
          %v2044 = vld [vmem:[#allocation2 + $0x38] sm:$0xff]
          %v2045 = vld [vmem:[#allocation2 + $0x40] sm:$0xff]
          %v2046 = vld [vmem:[#allocation2 + $0x48] sm:$0xff]
          %v2047 = vld [vmem:[#allocation2 + $0x50] sm:$0xff]
          %v2048 = vld [vmem:[#allocation2 + $0x58] sm:$0xff]
          %v2049 = vld [vmem:[#allocation2 + $0x60] sm:$0xff]
          %v2050 = vld [vmem:[#allocation2 + $0x68] sm:$0xff]
          %v2051 = vld [vmem:[#allocation2 + $0x70] sm:$0xff]
          %v2052 = vld [vmem:[#allocation2 + $0x78] sm:$0xff]
          %v2053 = vld [vmem:[#allocation2 + $0x80] sm:$0xff]
          %v2054 = vld [vmem:[#allocation2 + $0x88] sm:$0xff]
          %v2055 = vld [vmem:[#allocation2 + $0x90] sm:$0xff]
          %v2056 = vld [vmem:[#allocation2 + $0x98] sm:$0xff]
          %v2057 = vld [vmem:[#allocation2 + $0xa0] sm:$0xff]
          %v2058 = vld [vmem:[#allocation2 + $0xa8] sm:$0xff]
          %v2059 = vld [vmem:[#allocation2 + $0xb0] sm:$0xff]
          %v2060 = vld [vmem:[#allocation2 + $0xb8] sm:$0xff]
          %v2061 = vld [vmem:[#allocation2 + $0xc0] sm:$0xff]
          %v2062 = vld [vmem:[#allocation2 + $0xc8] sm:$0xff]
          %v2063 = vld [vmem:[#allocation2 + $0xd0] sm:$0xff]
          %v2064 = vld [vmem:[#allocation2 + $0xd8] sm:$0xff]
          %v2065 = vld [vmem:[#allocation2 + $0xe0] sm:$0xff]
          %v2066 = vld [vmem:[#allocation2 + $0xe8] sm:$0xff]
          %v2067 = vld [vmem:[#allocation2 + $0xf0] sm:$0xff]
          %v2068 = vld [vmem:[#allocation2 + $0xf8] sm:$0xff]
          %v2069 = vld [vmem:[#allocation2 + $0x100] sm:$0xff]
          %v2070 = vld [vmem:[#allocation2 + $0x108] sm:$0xff]
          %v2071 = vld [vmem:[#allocation2 + $0x110] sm:$0xff]
          %v2072 = vld [vmem:[#allocation2 + $0x118] sm:$0xff]
          %v2073 = vld [vmem:[#allocation2 + $0x120] sm:$0xff]
          %v2074 = vld [vmem:[#allocation2 + $0x128] sm:$0xff]
          %v2075 = vld [vmem:[#allocation2 + $0x130] sm:$0xff]
          %v2076 = vld [vmem:[#allocation2 + $0x138] sm:$0xff]
          %v2077 = vld [vmem:[#allocation2 + $0x140] sm:$0xff]
          %v2078 = vld [vmem:[#allocation2 + $0x148] sm:$0xff]
          %v2079 = vld [vmem:[#allocation2 + $0x150] sm:$0xff]
          %v2080 = vld [vmem:[#allocation2 + $0x158] sm:$0xff]
          %v2081 = vld [vmem:[#allocation2 + $0x160] sm:$0xff]
          %v2082 = vld [vmem:[#allocation2 + $0x168] sm:$0xff]
          %v2083 = vld [vmem:[#allocation2 + $0x170] sm:$0xff]
          %v2084 = vld [vmem:[#allocation2 + $0x178] sm:$0xff]
          %v2085 = vld [vmem:[#allocation2 + $0x180] sm:$0xff]
          %v2086 = vld [vmem:[#allocation2 + $0x188] sm:$0xff]
          %v2087 = vld [vmem:[#allocation2 + $0x190] sm:$0xff]
          %v2088 = vld [vmem:[#allocation2 + $0x198] sm:$0xff]
          %v2089 = vld [vmem:[#allocation2 + $0x1a0] sm:$0xff]
          %v2090 = vld [vmem:[#allocation2 + $0x1a8] sm:$0xff]
          %v2091 = vld [vmem:[#allocation2 + $0x1b0] sm:$0xff]
          %v2092 = vld [vmem:[#allocation2 + $0x1b8] sm:$0xff]
          %v2093 = vld [vmem:[#allocation2 + $0x1c0] sm:$0xff]
          %v2094 = vld [vmem:[#allocation2 + $0x1c8] sm:$0xff]
          %v2095 = vld [vmem:[#allocation2 + $0x1d0] sm:$0xff]
          %v2096 = vld [vmem:[#allocation2 + $0x1d8] sm:$0xff]
          %v2097 = vld [vmem:[#allocation2 + $0x1e0] sm:$0xff]
          %v2098 = vld [vmem:[#allocation2 + $0x1e8] sm:$0xff]
          %v2099 = vld [vmem:[#allocation2 + $0x1f0] sm:$0xff]
          %v2100 = vld [vmem:[#allocation2 + $0x1f8] sm:$0xff]
          %v2101 = vld [vmem:[#allocation2 + $0x200] sm:$0xff]
          %v2102 = vld [vmem:[#allocation2 + $0x208] sm:$0xff]
          %v2103 = vld [vmem:[#allocation2 + $0x210] sm:$0xff]
          %v2104 = vld [vmem:[#allocation2 + $0x218] sm:$0xff]
          %v2105 = vld [vmem:[#allocation2 + $0x220] sm:$0xff]
          %v2106 = vld [vmem:[#allocation2 + $0x228] sm:$0xff]
          %v2107 = vld [vmem:[#allocation2 + $0x230] sm:$0xff]
          %v2108 = vld [vmem:[#allocation2 + $0x238] sm:$0xff]
          %v2109 = vld [vmem:[#allocation2 + $0x240] sm:$0xff]
          %v2110 = vld [vmem:[#allocation2 + $0x248] sm:$0xff]
          %v2111 = vld [vmem:[#allocation2 + $0x250] sm:$0xff]
          %v2112 = vld [vmem:[#allocation2 + $0x258] sm:$0xff]
          %v2113 = vld [vmem:[#allocation2 + $0x260] sm:$0xff]
          %v2114 = vld [vmem:[#allocation2 + $0x268] sm:$0xff]
          %v2115 = vld [vmem:[#allocation2 + $0x270] sm:$0xff]
          %v2116 = vld [vmem:[#allocation2 + $0x278] sm:$0xff]
          %v2117 = vld [vmem:[#allocation2 + $0x280] sm:$0xff]
          %v2118 = vld [vmem:[#allocation2 + $0x288] sm:$0xff]
          %v2119 = vld [vmem:[#allocation2 + $0x290] sm:$0xff]
          %v2120 = vld [vmem:[#allocation2 + $0x298] sm:$0xff]
          %v2121 = vld [vmem:[#allocation2 + $0x2a0] sm:$0xff]
          %v2122 = vld [vmem:[#allocation2 + $0x2a8] sm:$0xff]
          %v2123 = vld [vmem:[#allocation2 + $0x2b0] sm:$0xff]
          %v2124 = vld [vmem:[#allocation2 + $0x2b8] sm:$0xff]
          %v2125 = vld [vmem:[#allocation2 + $0x2c0] sm:$0xff]
          %v2126 = vld [vmem:[#allocation2 + $0x2c8] sm:$0xff]
          %v2127 = vld [vmem:[#allocation2 + $0x2d0] sm:$0xff]
          %v2128 = vld [vmem:[#allocation2 + $0x2d8] sm:$0xff]
          %v2129 = vld [vmem:[#allocation2 + $0x2e0] sm:$0xff]
          %v2130 = vld [vmem:[#allocation2 + $0x2e8] sm:$0xff]
          %v2131 = vld [vmem:[#allocation2 + $0x2f0] sm:$0xff]
          %v2132 = vld [vmem:[#allocation2 + $0x2f8] sm:$0xff]
          %v2133 = vld [vmem:[#allocation2 + $0x300] sm:$0xff]
          %v2134 = vld [vmem:[#allocation2 + $0x308] sm:$0xff]
          %v2135 = vld [vmem:[#allocation2 + $0x310] sm:$0xff]
          %v2136 = vld [vmem:[#allocation2 + $0x318] sm:$0xff]
          %v2137 = vld [vmem:[#allocation2 + $0x320] sm:$0xff]
          %v2138 = vld [vmem:[#allocation2 + $0x328] sm:$0xff]
          %v2139 = vld [vmem:[#allocation2 + $0x330] sm:$0xff]
          %v2140 = vld [vmem:[#allocation2 + $0x338] sm:$0xff]
          %v2141 = vld [vmem:[#allocation2 + $0x340] sm:$0xff]
          %v2142 = vld [vmem:[#allocation2 + $0x348] sm:$0xff]
          %v2143 = vld [vmem:[#allocation2 + $0x350] sm:$0xff]
          %v2144 = vld [vmem:[#allocation2 + $0x358] sm:$0xff]
          %v2145 = vld [vmem:[#allocation2 + $0x360] sm:$0xff]
          %v2146 = vld [vmem:[#allocation2 + $0x368] sm:$0xff]
          %v2147 = vld [vmem:[#allocation2 + $0x370] sm:$0xff]
          %v2148 = vld [vmem:[#allocation2 + $0x378] sm:$0xff]
          %v2149 = vld [vmem:[#allocation2 + $0x380] sm:$0xff]
          %v2150 = vld [vmem:[#allocation2 + $0x388] sm:$0xff]
          %v2151 = vld [vmem:[#allocation2 + $0x390] sm:$0xff]
          %v2152 = vld [vmem:[#allocation2 + $0x398] sm:$0xff]
          %v2153 = vld [vmem:[#allocation2 + $0x3a0] sm:$0xff]
          %v2154 = vld [vmem:[#allocation2 + $0x3a8] sm:$0xff]
          %v2155 = vld [vmem:[#allocation2 + $0x3b0] sm:$0xff]
          %v2156 = vld [vmem:[#allocation2 + $0x3b8] sm:$0xff]
          %v2157 = vld [vmem:[#allocation2 + $0x3c0] sm:$0xff]
          %v2158 = vld [vmem:[#allocation2 + $0x3c8] sm:$0xff]
          %v2159 = vld [vmem:[#allocation2 + $0x3d0] sm:$0xff]
          %v2160 = vld [vmem:[#allocation2 + $0x3d8] sm:$0xff]
          %v2161 = vld [vmem:[#allocation2 + $0x3e0] sm:$0xff]
          %v2162 = vld [vmem:[#allocation2 + $0x3e8] sm:$0xff]
          %v2163 = vld [vmem:[#allocation2 + $0x3f0] sm:$0xff]
          %v2164 = vld [vmem:[#allocation2 + $0x3f8] sm:$0xff]
          %v2165 = vld [vmem:[%s310] sm:$0x1]
          %v2167 = vlaneseq
          %v2168 = vshrl.u32 %v2167, 7
          %v2169 = vsub.s32 0, %v2168
          %v2170 = vrot.slane %v2165, %v2169
          %v2172 = vmul.f32 %v2037, %v2170
          %v2173 = vmul.f32 %v2038, %v2170
          %v2174 = vmul.f32 %v2039, %v2170
          %v2175 = vmul.f32 %v2040, %v2170
          %v2176 = vmul.f32 %v2041, %v2170
          %v2177 = vmul.f32 %v2042, %v2170
          %v2178 = vmul.f32 %v2043, %v2170
          %v2179 = vmul.f32 %v2044, %v2170
          %v2180 = vmul.f32 %v2045, %v2170
          %v2181 = vmul.f32 %v2046, %v2170
          %v2182 = vmul.f32 %v2047, %v2170
          %v2183 = vmul.f32 %v2048, %v2170
          %v2184 = vmul.f32 %v2049, %v2170
          %v2185 = vmul.f32 %v2050, %v2170
          %v2186 = vmul.f32 %v2051, %v2170
          %v2187 = vmul.f32 %v2052, %v2170
          %v2188 = vmul.f32 %v2053, %v2170
          %v2189 = vmul.f32 %v2054, %v2170
          %v2190 = vmul.f32 %v2055, %v2170
          %v2191 = vmul.f32 %v2056, %v2170
          %v2192 = vmul.f32 %v2057, %v2170
          %v2193 = vmul.f32 %v2058, %v2170
          %v2194 = vmul.f32 %v2059, %v2170
          %v2195 = vmul.f32 %v2060, %v2170
          %v2196 = vmul.f32 %v2061, %v2170
          %v2197 = vmul.f32 %v2062, %v2170
          %v2198 = vmul.f32 %v2063, %v2170
          %v2199 = vmul.f32 %v2064, %v2170
          %v2200 = vmul.f32 %v2065, %v2170
          %v2201 = vmul.f32 %v2066, %v2170
          %v2202 = vmul.f32 %v2067, %v2170
          %v2203 = vmul.f32 %v2068, %v2170
          %v2204 = vmul.f32 %v2069, %v2170
          %v2205 = vmul.f32 %v2070, %v2170
          %v2206 = vmul.f32 %v2071, %v2170
          %v2207 = vmul.f32 %v2072, %v2170
          %v2208 = vmul.f32 %v2073, %v2170
          %v2209 = vmul.f32 %v2074, %v2170
          %v2210 = vmul.f32 %v2075, %v2170
          %v2211 = vmul.f32 %v2076, %v2170
          %v2212 = vmul.f32 %v2077, %v2170
          %v2213 = vmul.f32 %v2078, %v2170
          %v2214 = vmul.f32 %v2079, %v2170
          %v2215 = vmul.f32 %v2080, %v2170
          %v2216 = vmul.f32 %v2081, %v2170
          %v2217 = vmul.f32 %v2082, %v2170
          %v2218 = vmul.f32 %v2083, %v2170
          %v2219 = vmul.f32 %v2084, %v2170
          %v2220 = vmul.f32 %v2085, %v2170
          %v2221 = vmul.f32 %v2086, %v2170
          %v2222 = vmul.f32 %v2087, %v2170
          %v2223 = vmul.f32 %v2088, %v2170
          %v2224 = vmul.f32 %v2089, %v2170
          %v2225 = vmul.f32 %v2090, %v2170
          %v2226 = vmul.f32 %v2091, %v2170
          %v2227 = vmul.f32 %v2092, %v2170
          %v2228 = vmul.f32 %v2093, %v2170
          %v2229 = vmul.f32 %v2094, %v2170
          %v2230 = vmul.f32 %v2095, %v2170
          %v2231 = vmul.f32 %v2096, %v2170
          %v2232 = vmul.f32 %v2097, %v2170
          %v2233 = vmul.f32 %v2098, %v2170
          %v2234 = vmul.f32 %v2099, %v2170
          %v2235 = vmul.f32 %v2100, %v2170
          %v2236 = vmul.f32 %v2101, %v2170
          %v2237 = vmul.f32 %v2102, %v2170
          %v2238 = vmul.f32 %v2103, %v2170
          %v2239 = vmul.f32 %v2104, %v2170
          %v2240 = vmul.f32 %v2105, %v2170
          %v2241 = vmul.f32 %v2106, %v2170
          %v2242 = vmul.f32 %v2107, %v2170
          %v2243 = vmul.f32 %v2108, %v2170
          %v2244 = vmul.f32 %v2109, %v2170
          %v2245 = vmul.f32 %v2110, %v2170
          %v2246 = vmul.f32 %v2111, %v2170
          %v2247 = vmul.f32 %v2112, %v2170
          %v2248 = vmul.f32 %v2113, %v2170
          %v2249 = vmul.f32 %v2114, %v2170
          %v2250 = vmul.f32 %v2115, %v2170
          %v2251 = vmul.f32 %v2116, %v2170
          %v2252 = vmul.f32 %v2117, %v2170
          %v2253 = vmul.f32 %v2118, %v2170
          %v2254 = vmul.f32 %v2119, %v2170
          %v2255 = vmul.f32 %v2120, %v2170
          %v2256 = vmul.f32 %v2121, %v2170
          %v2257 = vmul.f32 %v2122, %v2170
          %v2258 = vmul.f32 %v2123, %v2170
          %v2259 = vmul.f32 %v2124, %v2170
          %v2260 = vmul.f32 %v2125, %v2170
          %v2261 = vmul.f32 %v2126, %v2170
          %v2262 = vmul.f32 %v2127, %v2170
          %v2263 = vmul.f32 %v2128, %v2170
          %v2264 = vmul.f32 %v2129, %v2170
          %v2265 = vmul.f32 %v2130, %v2170
          %v2266 = vmul.f32 %v2131, %v2170
          %v2267 = vmul.f32 %v2132, %v2170
          %v2268 = vmul.f32 %v2133, %v2170
          %v2269 = vmul.f32 %v2134, %v2170
          %v2270 = vmul.f32 %v2135, %v2170
          %v2271 = vmul.f32 %v2136, %v2170
          %v2272 = vmul.f32 %v2137, %v2170
          %v2273 = vmul.f32 %v2138, %v2170
          %v2274 = vmul.f32 %v2139, %v2170
          %v2275 = vmul.f32 %v2140, %v2170
          %v2276 = vmul.f32 %v2141, %v2170
          %v2277 = vmul.f32 %v2142, %v2170
          %v2278 = vmul.f32 %v2143, %v2170
          %v2279 = vmul.f32 %v2144, %v2170
          %v2280 = vmul.f32 %v2145, %v2170
          %v2281 = vmul.f32 %v2146, %v2170
          %v2282 = vmul.f32 %v2147, %v2170
          %v2283 = vmul.f32 %v2148, %v2170
          %v2284 = vmul.f32 %v2149, %v2170
          %v2285 = vmul.f32 %v2150, %v2170
          %v2286 = vmul.f32 %v2151, %v2170
          %v2287 = vmul.f32 %v2152, %v2170
          %v2288 = vmul.f32 %v2153, %v2170
          %v2289 = vmul.f32 %v2154, %v2170
          %v2290 = vmul.f32 %v2155, %v2170
          %v2291 = vmul.f32 %v2156, %v2170
          %v2292 = vmul.f32 %v2157, %v2170
          %v2293 = vmul.f32 %v2158, %v2170
          %v2294 = vmul.f32 %v2159, %v2170
          %v2295 = vmul.f32 %v2160, %v2170
          %v2296 = vmul.f32 %v2161, %v2170
          %v2297 = vmul.f32 %v2162, %v2170
          %v2298 = vmul.f32 %v2163, %v2170
          %v2299 = vmul.f32 %v2164, %v2170
          %v2300 = vld [vmem:[%s313] sm:$0x1]
          %v2302 = vlaneseq
          %v2303 = vshrl.u32 %v2302, 7
          %v2304 = vsub.s32 0, %v2303
          %v2305 = vrot.slane %v2300, %v2304
          %v2307 = vadd.f32 %v2172, %v2305
          %v2308 = vadd.f32 %v2173, %v2305
          %v2309 = vadd.f32 %v2174, %v2305
          %v2310 = vadd.f32 %v2175, %v2305
          %v2311 = vadd.f32 %v2176, %v2305
          %v2312 = vadd.f32 %v2177, %v2305
          %v2313 = vadd.f32 %v2178, %v2305
          %v2314 = vadd.f32 %v2179, %v2305
          %v2315 = vadd.f32 %v2180, %v2305
          %v2316 = vadd.f32 %v2181, %v2305
          %v2317 = vadd.f32 %v2182, %v2305
          %v2318 = vadd.f32 %v2183, %v2305
          %v2319 = vadd.f32 %v2184, %v2305
          %v2320 = vadd.f32 %v2185, %v2305
          %v2321 = vadd.f32 %v2186, %v2305
          %v2322 = vadd.f32 %v2187, %v2305
          %v2323 = vadd.f32 %v2188, %v2305
          %v2324 = vadd.f32 %v2189, %v2305
          %v2325 = vadd.f32 %v2190, %v2305
          %v2326 = vadd.f32 %v2191, %v2305
          %v2327 = vadd.f32 %v2192, %v2305
          %v2328 = vadd.f32 %v2193, %v2305
          %v2329 = vadd.f32 %v2194, %v2305
          %v2330 = vadd.f32 %v2195, %v2305
          %v2331 = vadd.f32 %v2196, %v2305
          %v2332 = vadd.f32 %v2197, %v2305
          %v2333 = vadd.f32 %v2198, %v2305
          %v2334 = vadd.f32 %v2199, %v2305
          %v2335 = vadd.f32 %v2200, %v2305
          %v2336 = vadd.f32 %v2201, %v2305
          %v2337 = vadd.f32 %v2202, %v2305
          %v2338 = vadd.f32 %v2203, %v2305
          %v2339 = vadd.f32 %v2204, %v2305
          %v2340 = vadd.f32 %v2205, %v2305
          %v2341 = vadd.f32 %v2206, %v2305
          %v2342 = vadd.f32 %v2207, %v2305
          %v2343 = vadd.f32 %v2208, %v2305
          %v2344 = vadd.f32 %v2209, %v2305
          %v2345 = vadd.f32 %v2210, %v2305
          %v2346 = vadd.f32 %v2211, %v2305
          %v2347 = vadd.f32 %v2212, %v2305
          %v2348 = vadd.f32 %v2213, %v2305
          %v2349 = vadd.f32 %v2214, %v2305
          %v2350 = vadd.f32 %v2215, %v2305
          %v2351 = vadd.f32 %v2216, %v2305
          %v2352 = vadd.f32 %v2217, %v2305
          %v2353 = vadd.f32 %v2218, %v2305
          %v2354 = vadd.f32 %v2219, %v2305
          %v2355 = vadd.f32 %v2220, %v2305
          %v2356 = vadd.f32 %v2221, %v2305
          %v2357 = vadd.f32 %v2222, %v2305
          %v2358 = vadd.f32 %v2223, %v2305
          %v2359 = vadd.f32 %v2224, %v2305
          %v2360 = vadd.f32 %v2225, %v2305
          %v2361 = vadd.f32 %v2226, %v2305
          %v2362 = vadd.f32 %v2227, %v2305
          %v2363 = vadd.f32 %v2228, %v2305
          %v2364 = vadd.f32 %v2229, %v2305
          %v2365 = vadd.f32 %v2230, %v2305
          %v2366 = vadd.f32 %v2231, %v2305
          %v2367 = vadd.f32 %v2232, %v2305
          %v2368 = vadd.f32 %v2233, %v2305
          %v2369 = vadd.f32 %v2234, %v2305
          %v2370 = vadd.f32 %v2235, %v2305
          %v2371 = vadd.f32 %v2236, %v2305
          %v2372 = vadd.f32 %v2237, %v2305
          %v2373 = vadd.f32 %v2238, %v2305
          %v2374 = vadd.f32 %v2239, %v2305
          %v2375 = vadd.f32 %v2240, %v2305
          %v2376 = vadd.f32 %v2241, %v2305
          %v2377 = vadd.f32 %v2242, %v2305
          %v2378 = vadd.f32 %v2243, %v2305
          %v2379 = vadd.f32 %v2244, %v2305
          %v2380 = vadd.f32 %v2245, %v2305
          %v2381 = vadd.f32 %v2246, %v2305
          %v2382 = vadd.f32 %v2247, %v2305
          %v2383 = vadd.f32 %v2248, %v2305
          %v2384 = vadd.f32 %v2249, %v2305
          %v2385 = vadd.f32 %v2250, %v2305
          %v2386 = vadd.f32 %v2251, %v2305
          %v2387 = vadd.f32 %v2252, %v2305
          %v2388 = vadd.f32 %v2253, %v2305
          %v2389 = vadd.f32 %v2254, %v2305
          %v2390 = vadd.f32 %v2255, %v2305
          %v2391 = vadd.f32 %v2256, %v2305
          %v2392 = vadd.f32 %v2257, %v2305
          %v2393 = vadd.f32 %v2258, %v2305
          %v2394 = vadd.f32 %v2259, %v2305
          %v2395 = vadd.f32 %v2260, %v2305
          %v2396 = vadd.f32 %v2261, %v2305
          %v2397 = vadd.f32 %v2262, %v2305
          %v2398 = vadd.f32 %v2263, %v2305
          %v2399 = vadd.f32 %v2264, %v2305
          %v2400 = vadd.f32 %v2265, %v2305
          %v2401 = vadd.f32 %v2266, %v2305
          %v2402 = vadd.f32 %v2267, %v2305
          %v2403 = vadd.f32 %v2268, %v2305
          %v2404 = vadd.f32 %v2269, %v2305
          %v2405 = vadd.f32 %v2270, %v2305
          %v2406 = vadd.f32 %v2271, %v2305
          %v2407 = vadd.f32 %v2272, %v2305
          %v2408 = vadd.f32 %v2273, %v2305
          %v2409 = vadd.f32 %v2274, %v2305
          %v2410 = vadd.f32 %v2275, %v2305
          %v2411 = vadd.f32 %v2276, %v2305
          %v2412 = vadd.f32 %v2277, %v2305
          %v2413 = vadd.f32 %v2278, %v2305
          %v2414 = vadd.f32 %v2279, %v2305
          %v2415 = vadd.f32 %v2280, %v2305
          %v2416 = vadd.f32 %v2281, %v2305
          %v2417 = vadd.f32 %v2282, %v2305
          %v2418 = vadd.f32 %v2283, %v2305
          %v2419 = vadd.f32 %v2284, %v2305
          %v2420 = vadd.f32 %v2285, %v2305
          %v2421 = vadd.f32 %v2286, %v2305
          %v2422 = vadd.f32 %v2287, %v2305
          %v2423 = vadd.f32 %v2288, %v2305
          %v2424 = vadd.f32 %v2289, %v2305
          %v2425 = vadd.f32 %v2290, %v2305
          %v2426 = vadd.f32 %v2291, %v2305
          %v2427 = vadd.f32 %v2292, %v2305
          %v2428 = vadd.f32 %v2293, %v2305
          %v2429 = vadd.f32 %v2294, %v2305
          %v2430 = vadd.f32 %v2295, %v2305
          %v2431 = vadd.f32 %v2296, %v2305
          %v2432 = vadd.f32 %v2297, %v2305
          %v2433 = vadd.f32 %v2298, %v2305
          %v2434 = vadd.f32 %v2299, %v2305
          %v2435 = vsub.f32 0.0, %v2307
          %v2436 = vsub.f32 0.0, %v2308
          %v2437 = vsub.f32 0.0, %v2309
          %v2438 = vsub.f32 0.0, %v2310
          %v2439 = vsub.f32 0.0, %v2311
          %v2440 = vsub.f32 0.0, %v2312
          %v2441 = vsub.f32 0.0, %v2313
          %v2442 = vsub.f32 0.0, %v2314
          %v2443 = vsub.f32 0.0, %v2315
          %v2444 = vsub.f32 0.0, %v2316
          %v2445 = vsub.f32 0.0, %v2317
          %v2446 = vsub.f32 0.0, %v2318
          %v2447 = vsub.f32 0.0, %v2319
          %v2448 = vsub.f32 0.0, %v2320
          %v2449 = vsub.f32 0.0, %v2321
          %v2450 = vsub.f32 0.0, %v2322
          %v2451 = vsub.f32 0.0, %v2323
          %v2452 = vsub.f32 0.0, %v2324
          %v2453 = vsub.f32 0.0, %v2325
          %v2454 = vsub.f32 0.0, %v2326
          %v2455 = vsub.f32 0.0, %v2327
          %v2456 = vsub.f32 0.0, %v2328
          %v2457 = vsub.f32 0.0, %v2329
          %v2458 = vsub.f32 0.0, %v2330
          %v2459 = vsub.f32 0.0, %v2331
          %v2460 = vsub.f32 0.0, %v2332
          %v2461 = vsub.f32 0.0, %v2333
          %v2462 = vsub.f32 0.0, %v2334
          %v2463 = vsub.f32 0.0, %v2335
          %v2464 = vsub.f32 0.0, %v2336
          %v2465 = vsub.f32 0.0, %v2337
          %v2466 = vsub.f32 0.0, %v2338
          %v2467 = vsub.f32 0.0, %v2339
          %v2468 = vsub.f32 0.0, %v2340
          %v2469 = vsub.f32 0.0, %v2341
          %v2470 = vsub.f32 0.0, %v2342
          %v2471 = vsub.f32 0.0, %v2343
          %v2472 = vsub.f32 0.0, %v2344
          %v2473 = vsub.f32 0.0, %v2345
          %v2474 = vsub.f32 0.0, %v2346
          %v2475 = vsub.f32 0.0, %v2347
          %v2476 = vsub.f32 0.0, %v2348
          %v2477 = vsub.f32 0.0, %v2349
          %v2478 = vsub.f32 0.0, %v2350
          %v2479 = vsub.f32 0.0, %v2351
          %v2480 = vsub.f32 0.0, %v2352
          %v2481 = vsub.f32 0.0, %v2353
          %v2482 = vsub.f32 0.0, %v2354
          %v2483 = vsub.f32 0.0, %v2355
          %v2484 = vsub.f32 0.0, %v2356
          %v2485 = vsub.f32 0.0, %v2357
          %v2486 = vsub.f32 0.0, %v2358
          %v2487 = vsub.f32 0.0, %v2359
          %v2488 = vsub.f32 0.0, %v2360
          %v2489 = vsub.f32 0.0, %v2361
          %v2490 = vsub.f32 0.0, %v2362
          %v2491 = vsub.f32 0.0, %v2363
          %v2492 = vsub.f32 0.0, %v2364
          %v2493 = vsub.f32 0.0, %v2365
          %v2494 = vsub.f32 0.0, %v2366
          %v2495 = vsub.f32 0.0, %v2367
          %v2496 = vsub.f32 0.0, %v2368
          %v2497 = vsub.f32 0.0, %v2369
          %v2498 = vsub.f32 0.0, %v2370
          %v2499 = vsub.f32 0.0, %v2371
          %v2500 = vsub.f32 0.0, %v2372
          %v2501 = vsub.f32 0.0, %v2373
          %v2502 = vsub.f32 0.0, %v2374
          %v2503 = vsub.f32 0.0, %v2375
          %v2504 = vsub.f32 0.0, %v2376
          %v2505 = vsub.f32 0.0, %v2377
          %v2506 = vsub.f32 0.0, %v2378
          %v2507 = vsub.f32 0.0, %v2379
          %v2508 = vsub.f32 0.0, %v2380
          %v2509 = vsub.f32 0.0, %v2381
          %v2510 = vsub.f32 0.0, %v2382
          %v2511 = vsub.f32 0.0, %v2383
          %v2512 = vsub.f32 0.0, %v2384
          %v2513 = vsub.f32 0.0, %v2385
          %v2514 = vsub.f32 0.0, %v2386
          %v2515 = vsub.f32 0.0, %v2387
          %v2516 = vsub.f32 0.0, %v2388
          %v2517 = vsub.f32 0.0, %v2389
          %v2518 = vsub.f32 0.0, %v2390
          %v2519 = vsub.f32 0.0, %v2391
          %v2520 = vsub.f32 0.0, %v2392
          %v2521 = vsub.f32 0.0, %v2393
          %v2522 = vsub.f32 0.0, %v2394
          %v2523 = vsub.f32 0.0, %v2395
          %v2524 = vsub.f32 0.0, %v2396
          %v2525 = vsub.f32 0.0, %v2397
          %v2526 = vsub.f32 0.0, %v2398
          %v2527 = vsub.f32 0.0, %v2399
          %v2528 = vsub.f32 0.0, %v2400
          %v2529 = vsub.f32 0.0, %v2401
          %v2530 = vsub.f32 0.0, %v2402
          %v2531 = vsub.f32 0.0, %v2403
          %v2532 = vsub.f32 0.0, %v2404
          %v2533 = vsub.f32 0.0, %v2405
          %v2534 = vsub.f32 0.0, %v2406
          %v2535 = vsub.f32 0.0, %v2407
          %v2536 = vsub.f32 0.0, %v2408
          %v2537 = vsub.f32 0.0, %v2409
          %v2538 = vsub.f32 0.0, %v2410
          %v2539 = vsub.f32 0.0, %v2411
          %v2540 = vsub.f32 0.0, %v2412
          %v2541 = vsub.f32 0.0, %v2413
          %v2542 = vsub.f32 0.0, %v2414
          %v2543 = vsub.f32 0.0, %v2415
          %v2544 = vsub.f32 0.0, %v2416
          %v2545 = vsub.f32 0.0, %v2417
          %v2546 = vsub.f32 0.0, %v2418
          %v2547 = vsub.f32 0.0, %v2419
          %v2548 = vsub.f32 0.0, %v2420
          %v2549 = vsub.f32 0.0, %v2421
          %v2550 = vsub.f32 0.0, %v2422
          %v2551 = vsub.f32 0.0, %v2423
          %v2552 = vsub.f32 0.0, %v2424
          %v2553 = vsub.f32 0.0, %v2425
          %v2554 = vsub.f32 0.0, %v2426
          %v2555 = vsub.f32 0.0, %v2427
          %v2556 = vsub.f32 0.0, %v2428
          %v2557 = vsub.f32 0.0, %v2429
          %v2558 = vsub.f32 0.0, %v2430
          %v2559 = vsub.f32 0.0, %v2431
          %v2560 = vsub.f32 0.0, %v2432
          %v2561 = vsub.f32 0.0, %v2433
          %v2562 = vsub.f32 0.0, %v2434
          %v2563 = vmul.f32 %v2435, 1.442695
          %v2564 = vpow.pop %v2563
          %v2565 = vmul.f32 %v2436, 1.442695
          %v2566 = vpow.pop %v2565
          %v2567 = vmul.f32 %v2437, 1.442695
          %v2568 = vpow.pop %v2567
          %v2569 = vmul.f32 %v2438, 1.442695
          %v2570 = vpow.pop %v2569
          %v2571 = vmul.f32 %v2439, 1.442695
          %v2572 = vpow.pop %v2571
          %v2573 = vmul.f32 %v2440, 1.442695
          %v2574 = vpow.pop %v2573
          %v2575 = vmul.f32 %v2441, 1.442695
          %v2576 = vpow.pop %v2575
          %v2577 = vmul.f32 %v2442, 1.442695
          %v2578 = vpow.pop %v2577
          %v2579 = vmul.f32 %v2443, 1.442695
          %v2580 = vpow.pop %v2579
          %v2581 = vmul.f32 %v2444, 1.442695
          %v2582 = vpow.pop %v2581
          %v2583 = vmul.f32 %v2445, 1.442695
          %v2584 = vpow.pop %v2583
          %v2585 = vmul.f32 %v2446, 1.442695
          %v2586 = vpow.pop %v2585
          %v2587 = vmul.f32 %v2447, 1.442695
          %v2588 = vpow.pop %v2587
          %v2589 = vmul.f32 %v2448, 1.442695
          %v2590 = vpow.pop %v2589
          %v2591 = vmul.f32 %v2449, 1.442695
          %v2592 = vpow.pop %v2591
          %v2593 = vmul.f32 %v2450, 1.442695
          %v2594 = vpow.pop %v2593
          %v2595 = vmul.f32 %v2451, 1.442695
          %v2596 = vpow.pop %v2595
          %v2597 = vmul.f32 %v2452, 1.442695
          %v2598 = vpow.pop %v2597
          %v2599 = vmul.f32 %v2453, 1.442695
          %v2600 = vpow.pop %v2599
          %v2601 = vmul.f32 %v2454, 1.442695
          %v2602 = vpow.pop %v2601
          %v2603 = vmul.f32 %v2455, 1.442695
          %v2604 = vpow.pop %v2603
          %v2605 = vmul.f32 %v2456, 1.442695
          %v2606 = vpow.pop %v2605
          %v2607 = vmul.f32 %v2457, 1.442695
          %v2608 = vpow.pop %v2607
          %v2609 = vmul.f32 %v2458, 1.442695
          %v2610 = vpow.pop %v2609
          %v2611 = vmul.f32 %v2459, 1.442695
          %v2612 = vpow.pop %v2611
          %v2613 = vmul.f32 %v2460, 1.442695
          %v2614 = vpow.pop %v2613
          %v2615 = vmul.f32 %v2461, 1.442695
          %v2616 = vpow.pop %v2615
          %v2617 = vmul.f32 %v2462, 1.442695
          %v2618 = vpow.pop %v2617
          %v2619 = vmul.f32 %v2463, 1.442695
          %v2620 = vpow.pop %v2619
          %v2621 = vmul.f32 %v2464, 1.442695
          %v2622 = vpow.pop %v2621
          %v2623 = vmul.f32 %v2465, 1.442695
          %v2624 = vpow.pop %v2623
          %v2625 = vmul.f32 %v2466, 1.442695
          %v2626 = vpow.pop %v2625
          %v2627 = vmul.f32 %v2467, 1.442695
          %v2628 = vpow.pop %v2627
          %v2629 = vmul.f32 %v2468, 1.442695
          %v2630 = vpow.pop %v2629
          %v2631 = vmul.f32 %v2469, 1.442695
          %v2632 = vpow.pop %v2631
          %v2633 = vmul.f32 %v2470, 1.442695
          %v2634 = vpow.pop %v2633
          %v2635 = vmul.f32 %v2471, 1.442695
          %v2636 = vpow.pop %v2635
          %v2637 = vmul.f32 %v2472, 1.442695
          %v2638 = vpow.pop %v2637
          %v2639 = vmul.f32 %v2473, 1.442695
          %v2640 = vpow.pop %v2639
          %v2641 = vmul.f32 %v2474, 1.442695
          %v2642 = vpow.pop %v2641
          %v2643 = vmul.f32 %v2475, 1.442695
          %v2644 = vpow.pop %v2643
          %v2645 = vmul.f32 %v2476, 1.442695
          %v2646 = vpow.pop %v2645
          %v2647 = vmul.f32 %v2477, 1.442695
          %v2648 = vpow.pop %v2647
          %v2649 = vmul.f32 %v2478, 1.442695
          %v2650 = vpow.pop %v2649
          %v2651 = vmul.f32 %v2479, 1.442695
          %v2652 = vpow.pop %v2651
          %v2653 = vmul.f32 %v2480, 1.442695
          %v2654 = vpow.pop %v2653
          %v2655 = vmul.f32 %v2481, 1.442695
          %v2656 = vpow.pop %v2655
          %v2657 = vmul.f32 %v2482, 1.442695
          %v2658 = vpow.pop %v2657
          %v2659 = vmul.f32 %v2483, 1.442695
          %v2660 = vpow.pop %v2659
          %v2661 = vmul.f32 %v2484, 1.442695
          %v2662 = vpow.pop %v2661
          %v2663 = vmul.f32 %v2485, 1.442695
          %v2664 = vpow.pop %v2663
          %v2665 = vmul.f32 %v2486, 1.442695
          %v2666 = vpow.pop %v2665
          %v2667 = vmul.f32 %v2487, 1.442695
          %v2668 = vpow.pop %v2667
          %v2669 = vmul.f32 %v2488, 1.442695
          %v2670 = vpow.pop %v2669
          %v2671 = vmul.f32 %v2489, 1.442695
          %v2672 = vpow.pop %v2671
          %v2673 = vmul.f32 %v2490, 1.442695
          %v2674 = vpow.pop %v2673
          %v2675 = vmul.f32 %v2491, 1.442695
          %v2676 = vpow.pop %v2675
          %v2677 = vmul.f32 %v2492, 1.442695
          %v2678 = vpow.pop %v2677
          %v2679 = vmul.f32 %v2493, 1.442695
          %v2680 = vpow.pop %v2679
          %v2681 = vmul.f32 %v2494, 1.442695
          %v2682 = vpow.pop %v2681
          %v2683 = vmul.f32 %v2495, 1.442695
          %v2684 = vpow.pop %v2683
          %v2685 = vmul.f32 %v2496, 1.442695
          %v2686 = vpow.pop %v2685
          %v2687 = vmul.f32 %v2497, 1.442695
          %v2688 = vpow.pop %v2687
          %v2689 = vmul.f32 %v2498, 1.442695
          %v2690 = vpow.pop %v2689
          %v2691 = vmul.f32 %v2499, 1.442695
          %v2692 = vpow.pop %v2691
          %v2693 = vmul.f32 %v2500, 1.442695
          %v2694 = vpow.pop %v2693
          %v2695 = vmul.f32 %v2501, 1.442695
          %v2696 = vpow.pop %v2695
          %v2697 = vmul.f32 %v2502, 1.442695
          %v2698 = vpow.pop %v2697
          %v2699 = vmul.f32 %v2503, 1.442695
          %v2700 = vpow.pop %v2699
          %v2701 = vmul.f32 %v2504, 1.442695
          %v2702 = vpow.pop %v2701
          %v2703 = vmul.f32 %v2505, 1.442695
          %v2704 = vpow.pop %v2703
          %v2705 = vmul.f32 %v2506, 1.442695
          %v2706 = vpow.pop %v2705
          %v2707 = vmul.f32 %v2507, 1.442695
          %v2708 = vpow.pop %v2707
          %v2709 = vmul.f32 %v2508, 1.442695
          %v2710 = vpow.pop %v2709
          %v2711 = vmul.f32 %v2509, 1.442695
          %v2712 = vpow.pop %v2711
          %v2713 = vmul.f32 %v2510, 1.442695
          %v2714 = vpow.pop %v2713
          %v2715 = vmul.f32 %v2511, 1.442695
          %v2716 = vpow.pop %v2715
          %v2717 = vmul.f32 %v2512, 1.442695
          %v2718 = vpow.pop %v2717
          %v2719 = vmul.f32 %v2513, 1.442695
          %v2720 = vpow.pop %v2719
          %v2721 = vmul.f32 %v2514, 1.442695
          %v2722 = vpow.pop %v2721
          %v2723 = vmul.f32 %v2515, 1.442695
          %v2724 = vpow.pop %v2723
          %v2725 = vmul.f32 %v2516, 1.442695
          %v2726 = vpow.pop %v2725
          %v2727 = vmul.f32 %v2517, 1.442695
          %v2728 = vpow.pop %v2727
          %v2729 = vmul.f32 %v2518, 1.442695
          %v2730 = vpow.pop %v2729
          %v2731 = vmul.f32 %v2519, 1.442695
          %v2732 = vpow.pop %v2731
          %v2733 = vmul.f32 %v2520, 1.442695
          %v2734 = vpow.pop %v2733
          %v2735 = vmul.f32 %v2521, 1.442695
          %v2736 = vpow.pop %v2735
          %v2737 = vmul.f32 %v2522, 1.442695
          %v2738 = vpow.pop %v2737
          %v2739 = vmul.f32 %v2523, 1.442695
          %v2740 = vpow.pop %v2739
          %v2741 = vmul.f32 %v2524, 1.442695
          %v2742 = vpow.pop %v2741
          %v2743 = vmul.f32 %v2525, 1.442695
          %v2744 = vpow.pop %v2743
          %v2745 = vmul.f32 %v2526, 1.442695
          %v2746 = vpow.pop %v2745
          %v2747 = vmul.f32 %v2527, 1.442695
          %v2748 = vpow.pop %v2747
          %v2749 = vmul.f32 %v2528, 1.442695
          %v2750 = vpow.pop %v2749
          %v2751 = vmul.f32 %v2529, 1.442695
          %v2752 = vpow.pop %v2751
          %v2753 = vmul.f32 %v2530, 1.442695
          %v2754 = vpow.pop %v2753
          %v2755 = vmul.f32 %v2531, 1.442695
          %v2756 = vpow.pop %v2755
          %v2757 = vmul.f32 %v2532, 1.442695
          %v2758 = vpow.pop %v2757
          %v2759 = vmul.f32 %v2533, 1.442695
          %v2760 = vpow.pop %v2759
          %v2761 = vmul.f32 %v2534, 1.442695
          %v2762 = vpow.pop %v2761
          %v2763 = vmul.f32 %v2535, 1.442695
          %v2764 = vpow.pop %v2763
          %v2765 = vmul.f32 %v2536, 1.442695
          %v2766 = vpow.pop %v2765
          %v2767 = vmul.f32 %v2537, 1.442695
          %v2768 = vpow.pop %v2767
          %v2769 = vmul.f32 %v2538, 1.442695
          %v2770 = vpow.pop %v2769
          %v2771 = vmul.f32 %v2539, 1.442695
          %v2772 = vpow.pop %v2771
          %v2773 = vmul.f32 %v2540, 1.442695
          %v2774 = vpow.pop %v2773
          %v2775 = vmul.f32 %v2541, 1.442695
          %v2776 = vpow.pop %v2775
          %v2777 = vmul.f32 %v2542, 1.442695
          %v2778 = vpow.pop %v2777
          %v2779 = vmul.f32 %v2543, 1.442695
          %v2780 = vpow.pop %v2779
          %v2781 = vmul.f32 %v2544, 1.442695
          %v2782 = vpow.pop %v2781
          %v2783 = vmul.f32 %v2545, 1.442695
          %v2784 = vpow.pop %v2783
          %v2785 = vmul.f32 %v2546, 1.442695
          %v2786 = vpow.pop %v2785
          %v2787 = vmul.f32 %v2547, 1.442695
          %v2788 = vpow.pop %v2787
          %v2789 = vmul.f32 %v2548, 1.442695
          %v2790 = vpow.pop %v2789
          %v2791 = vmul.f32 %v2549, 1.442695
          %v2792 = vpow.pop %v2791
          %v2793 = vmul.f32 %v2550, 1.442695
          %v2794 = vpow.pop %v2793
          %v2795 = vmul.f32 %v2551, 1.442695
          %v2796 = vpow.pop %v2795
          %v2797 = vmul.f32 %v2552, 1.442695
          %v2798 = vpow.pop %v2797
          %v2799 = vmul.f32 %v2553, 1.442695
          %v2800 = vpow.pop %v2799
          %v2801 = vmul.f32 %v2554, 1.442695
          %v2802 = vpow.pop %v2801
          %v2803 = vmul.f32 %v2555, 1.442695
          %v2804 = vpow.pop %v2803
          %v2805 = vmul.f32 %v2556, 1.442695
          %v2806 = vpow.pop %v2805
          %v2807 = vmul.f32 %v2557, 1.442695
          %v2808 = vpow.pop %v2807
          %v2809 = vmul.f32 %v2558, 1.442695
          %v2810 = vpow.pop %v2809
          %v2811 = vmul.f32 %v2559, 1.442695
          %v2812 = vpow.pop %v2811
          %v2813 = vmul.f32 %v2560, 1.442695
          %v2814 = vpow.pop %v2813
          %v2815 = vmul.f32 %v2561, 1.442695
          %v2816 = vpow.pop %v2815
          %v2817 = vmul.f32 %v2562, 1.442695
          %v2818 = vpow.pop %v2817
          %v2819 = vadd.f32 %v2564, 1.0
          %v2820 = vadd.f32 %v2566, 1.0
          %v2821 = vadd.f32 %v2568, 1.0
          %v2822 = vadd.f32 %v2570, 1.0
          %v2823 = vadd.f32 %v2572, 1.0
          %v2824 = vadd.f32 %v2574, 1.0
          %v2825 = vadd.f32 %v2576, 1.0
          %v2826 = vadd.f32 %v2578, 1.0
          %v2827 = vadd.f32 %v2580, 1.0
          %v2828 = vadd.f32 %v2582, 1.0
          %v2829 = vadd.f32 %v2584, 1.0
          %v2830 = vadd.f32 %v2586, 1.0
          %v2831 = vadd.f32 %v2588, 1.0
          %v2832 = vadd.f32 %v2590, 1.0
          %v2833 = vadd.f32 %v2592, 1.0
          %v2834 = vadd.f32 %v2594, 1.0
          %v2835 = vadd.f32 %v2596, 1.0
          %v2836 = vadd.f32 %v2598, 1.0
          %v2837 = vadd.f32 %v2600, 1.0
          %v2838 = vadd.f32 %v2602, 1.0
          %v2839 = vadd.f32 %v2604, 1.0
          %v2840 = vadd.f32 %v2606, 1.0
          %v2841 = vadd.f32 %v2608, 1.0
          %v2842 = vadd.f32 %v2610, 1.0
          %v2843 = vadd.f32 %v2612, 1.0
          %v2844 = vadd.f32 %v2614, 1.0
          %v2845 = vadd.f32 %v2616, 1.0
          %v2846 = vadd.f32 %v2618, 1.0
          %v2847 = vadd.f32 %v2620, 1.0
          %v2848 = vadd.f32 %v2622, 1.0
          %v2849 = vadd.f32 %v2624, 1.0
          %v2850 = vadd.f32 %v2626, 1.0
          %v2851 = vadd.f32 %v2628, 1.0
          %v2852 = vadd.f32 %v2630, 1.0
          %v2853 = vadd.f32 %v2632, 1.0
          %v2854 = vadd.f32 %v2634, 1.0
          %v2855 = vadd.f32 %v2636, 1.0
          %v2856 = vadd.f32 %v2638, 1.0
          %v2857 = vadd.f32 %v2640, 1.0
          %v2858 = vadd.f32 %v2642, 1.0
          %v2859 = vadd.f32 %v2644, 1.0
          %v2860 = vadd.f32 %v2646, 1.0
          %v2861 = vadd.f32 %v2648, 1.0
          %v2862 = vadd.f32 %v2650, 1.0
          %v2863 = vadd.f32 %v2652, 1.0
          %v2864 = vadd.f32 %v2654, 1.0
          %v2865 = vadd.f32 %v2656, 1.0
          %v2866 = vadd.f32 %v2658, 1.0
          %v2867 = vadd.f32 %v2660, 1.0
          %v2868 = vadd.f32 %v2662, 1.0
          %v2869 = vadd.f32 %v2664, 1.0
          %v2870 = vadd.f32 %v2666, 1.0
          %v2871 = vadd.f32 %v2668, 1.0
          %v2872 = vadd.f32 %v2670, 1.0
          %v2873 = vadd.f32 %v2672, 1.0
          %v2874 = vadd.f32 %v2674, 1.0
          %v2875 = vadd.f32 %v2676, 1.0
          %v2876 = vadd.f32 %v2678, 1.0
          %v2877 = vadd.f32 %v2680, 1.0
          %v2878 = vadd.f32 %v2682, 1.0
          %v2879 = vadd.f32 %v2684, 1.0
          %v2880 = vadd.f32 %v2686, 1.0
          %v2881 = vadd.f32 %v2688, 1.0
          %v2882 = vadd.f32 %v2690, 1.0
          %v2883 = vadd.f32 %v2692, 1.0
          %v2884 = vadd.f32 %v2694, 1.0
          %v2885 = vadd.f32 %v2696, 1.0
          %v2886 = vadd.f32 %v2698, 1.0
          %v2887 = vadd.f32 %v2700, 1.0
          %v2888 = vadd.f32 %v2702, 1.0
          %v2889 = vadd.f32 %v2704, 1.0
          %v2890 = vadd.f32 %v2706, 1.0
          %v2891 = vadd.f32 %v2708, 1.0
          %v2892 = vadd.f32 %v2710, 1.0
          %v2893 = vadd.f32 %v2712, 1.0
          %v2894 = vadd.f32 %v2714, 1.0
          %v2895 = vadd.f32 %v2716, 1.0
          %v2896 = vadd.f32 %v2718, 1.0
          %v2897 = vadd.f32 %v2720, 1.0
          %v2898 = vadd.f32 %v2722, 1.0
          %v2899 = vadd.f32 %v2724, 1.0
          %v2900 = vadd.f32 %v2726, 1.0
          %v2901 = vadd.f32 %v2728, 1.0
          %v2902 = vadd.f32 %v2730, 1.0
          %v2903 = vadd.f32 %v2732, 1.0
          %v2904 = vadd.f32 %v2734, 1.0
          %v2905 = vadd.f32 %v2736, 1.0
          %v2906 = vadd.f32 %v2738, 1.0
          %v2907 = vadd.f32 %v2740, 1.0
          %v2908 = vadd.f32 %v2742, 1.0
          %v2909 = vadd.f32 %v2744, 1.0
          %v2910 = vadd.f32 %v2746, 1.0
          %v2911 = vadd.f32 %v2748, 1.0
          %v2912 = vadd.f32 %v2750, 1.0
          %v2913 = vadd.f32 %v2752, 1.0
          %v2914 = vadd.f32 %v2754, 1.0
          %v2915 = vadd.f32 %v2756, 1.0
          %v2916 = vadd.f32 %v2758, 1.0
          %v2917 = vadd.f32 %v2760, 1.0
          %v2918 = vadd.f32 %v2762, 1.0
          %v2919 = vadd.f32 %v2764, 1.0
          %v2920 = vadd.f32 %v2766, 1.0
          %v2921 = vadd.f32 %v2768, 1.0
          %v2922 = vadd.f32 %v2770, 1.0
          %v2923 = vadd.f32 %v2772, 1.0
          %v2924 = vadd.f32 %v2774, 1.0
          %v2925 = vadd.f32 %v2776, 1.0
          %v2926 = vadd.f32 %v2778, 1.0
          %v2927 = vadd.f32 %v2780, 1.0
          %v2928 = vadd.f32 %v2782, 1.0
          %v2929 = vadd.f32 %v2784, 1.0
          %v2930 = vadd.f32 %v2786, 1.0
          %v2931 = vadd.f32 %v2788, 1.0
          %v2932 = vadd.f32 %v2790, 1.0
          %v2933 = vadd.f32 %v2792, 1.0
          %v2934 = vadd.f32 %v2794, 1.0
          %v2935 = vadd.f32 %v2796, 1.0
          %v2936 = vadd.f32 %v2798, 1.0
          %v2937 = vadd.f32 %v2800, 1.0
          %v2938 = vadd.f32 %v2802, 1.0
          %v2939 = vadd.f32 %v2804, 1.0
          %v2940 = vadd.f32 %v2806, 1.0
          %v2941 = vadd.f32 %v2808, 1.0
          %v2942 = vadd.f32 %v2810, 1.0
          %v2943 = vadd.f32 %v2812, 1.0
          %v2944 = vadd.f32 %v2814, 1.0
          %v2945 = vadd.f32 %v2816, 1.0
          %v2946 = vadd.f32 %v2818, 1.0
          %v2947 = vrcp.pop %v2819
          %v2948 = vrcp.pop %v2820
          %v2949 = vrcp.pop %v2821
          %v2950 = vrcp.pop %v2822
          %v2951 = vrcp.pop %v2823
          %v2952 = vrcp.pop %v2824
          %v2953 = vrcp.pop %v2825
          %v2954 = vrcp.pop %v2826
          %v2955 = vrcp.pop %v2827
          %v2956 = vrcp.pop %v2828
          %v2957 = vrcp.pop %v2829
          %v2958 = vrcp.pop %v2830
          %v2959 = vrcp.pop %v2831
          %v2960 = vrcp.pop %v2832
          %v2961 = vrcp.pop %v2833
          %v2962 = vrcp.pop %v2834
          %v2963 = vrcp.pop %v2835
          %v2964 = vrcp.pop %v2836
          %v2965 = vrcp.pop %v2837
          %v2966 = vrcp.pop %v2838
          %v2967 = vrcp.pop %v2839
          %v2968 = vrcp.pop %v2840
          %v2969 = vrcp.pop %v2841
          %v2970 = vrcp.pop %v2842
          %v2971 = vrcp.pop %v2843
          %v2972 = vrcp.pop %v2844
          %v2973 = vrcp.pop %v2845
          %v2974 = vrcp.pop %v2846
          %v2975 = vrcp.pop %v2847
          %v2976 = vrcp.pop %v2848
          %v2977 = vrcp.pop %v2849
          %v2978 = vrcp.pop %v2850
          %v2979 = vrcp.pop %v2851
          %v2980 = vrcp.pop %v2852
          %v2981 = vrcp.pop %v2853
          %v2982 = vrcp.pop %v2854
          %v2983 = vrcp.pop %v2855
          %v2984 = vrcp.pop %v2856
          %v2985 = vrcp.pop %v2857
          %v2986 = vrcp.pop %v2858
          %v2987 = vrcp.pop %v2859
          %v2988 = vrcp.pop %v2860
          %v2989 = vrcp.pop %v2861
          %v2990 = vrcp.pop %v2862
          %v2991 = vrcp.pop %v2863
          %v2992 = vrcp.pop %v2864
          %v2993 = vrcp.pop %v2865
          %v2994 = vrcp.pop %v2866
          %v2995 = vrcp.pop %v2867
          %v2996 = vrcp.pop %v2868
          %v2997 = vrcp.pop %v2869
          %v2998 = vrcp.pop %v2870
          %v2999 = vrcp.pop %v2871
          %v3000 = vrcp.pop %v2872
          %v3001 = vrcp.pop %v2873
          %v3002 = vrcp.pop %v2874
          %v3003 = vrcp.pop %v2875
          %v3004 = vrcp.pop %v2876
          %v3005 = vrcp.pop %v2877
          %v3006 = vrcp.pop %v2878
          %v3007 = vrcp.pop %v2879
          %v3008 = vrcp.pop %v2880
          %v3009 = vrcp.pop %v2881
          %v3010 = vrcp.pop %v2882
          %v3011 = vrcp.pop %v2883
          %v3012 = vrcp.pop %v2884
          %v3013 = vrcp.pop %v2885
          %v3014 = vrcp.pop %v2886
          %v3015 = vrcp.pop %v2887
          %v3016 = vrcp.pop %v2888
          %v3017 = vrcp.pop %v2889
          %v3018 = vrcp.pop %v2890
          %v3019 = vrcp.pop %v2891
          %v3020 = vrcp.pop %v2892
          %v3021 = vrcp.pop %v2893
          %v3022 = vrcp.pop %v2894
          %v3023 = vrcp.pop %v2895
          %v3024 = vrcp.pop %v2896
          %v3025 = vrcp.pop %v2897
          %v3026 = vrcp.pop %v2898
          %v3027 = vrcp.pop %v2899
          %v3028 = vrcp.pop %v2900
          %v3029 = vrcp.pop %v2901
          %v3030 = vrcp.pop %v2902
          %v3031 = vrcp.pop %v2903
          %v3032 = vrcp.pop %v2904
          %v3033 = vrcp.pop %v2905
          %v3034 = vrcp.pop %v2906
          %v3035 = vrcp.pop %v2907
          %v3036 = vrcp.pop %v2908
          %v3037 = vrcp.pop %v2909
          %v3038 = vrcp.pop %v2910
          %v3039 = vrcp.pop %v2911
          %v3040 = vrcp.pop %v2912
          %v3041 = vrcp.pop %v2913
          %v3042 = vrcp.pop %v2914
          %v3043 = vrcp.pop %v2915
          %v3044 = vrcp.pop %v2916
          %v3045 = vrcp.pop %v2917
          %v3046 = vrcp.pop %v2918
          %v3047 = vrcp.pop %v2919
          %v3048 = vrcp.pop %v2920
          %v3049 = vrcp.pop %v2921
          %v3050 = vrcp.pop %v2922
          %v3051 = vrcp.pop %v2923
          %v3052 = vrcp.pop %v2924
          %v3053 = vrcp.pop %v2925
          %v3054 = vrcp.pop %v2926
          %v3055 = vrcp.pop %v2927
          %v3056 = vrcp.pop %v2928
          %v3057 = vrcp.pop %v2929
          %v3058 = vrcp.pop %v2930
          %v3059 = vrcp.pop %v2931
          %v3060 = vrcp.pop %v2932
          %v3061 = vrcp.pop %v2933
          %v3062 = vrcp.pop %v2934
          %v3063 = vrcp.pop %v2935
          %v3064 = vrcp.pop %v2936
          %v3065 = vrcp.pop %v2937
          %v3066 = vrcp.pop %v2938
          %v3067 = vrcp.pop %v2939
          %v3068 = vrcp.pop %v2940
          %v3069 = vrcp.pop %v2941
          %v3070 = vrcp.pop %v2942
          %v3071 = vrcp.pop %v2943
          %v3072 = vrcp.pop %v2944
          %v3073 = vrcp.pop %v2945
          %v3074 = vrcp.pop %v2946
          %v3075 = vmul.f32 %v2307, %v2947
          %v3076 = vmul.f32 %v2308, %v2948
          %v3077 = vmul.f32 %v2309, %v2949
          %v3078 = vmul.f32 %v2310, %v2950
          %v3079 = vmul.f32 %v2311, %v2951
          %v3080 = vmul.f32 %v2312, %v2952
          %v3081 = vmul.f32 %v2313, %v2953
          %v3082 = vmul.f32 %v2314, %v2954
          %v3083 = vmul.f32 %v2315, %v2955
          %v3084 = vmul.f32 %v2316, %v2956
          %v3085 = vmul.f32 %v2317, %v2957
          %v3086 = vmul.f32 %v2318, %v2958
          %v3087 = vmul.f32 %v2319, %v2959
          %v3088 = vmul.f32 %v2320, %v2960
          %v3089 = vmul.f32 %v2321, %v2961
          %v3090 = vmul.f32 %v2322, %v2962
          %v3091 = vmul.f32 %v2323, %v2963
          %v3092 = vmul.f32 %v2324, %v2964
          %v3093 = vmul.f32 %v2325, %v2965
          %v3094 = vmul.f32 %v2326, %v2966
          %v3095 = vmul.f32 %v2327, %v2967
          %v3096 = vmul.f32 %v2328, %v2968
          %v3097 = vmul.f32 %v2329, %v2969
          %v3098 = vmul.f32 %v2330, %v2970
          %v3099 = vmul.f32 %v2331, %v2971
          %v3100 = vmul.f32 %v2332, %v2972
          %v3101 = vmul.f32 %v2333, %v2973
          %v3102 = vmul.f32 %v2334, %v2974
          %v3103 = vmul.f32 %v2335, %v2975
          %v3104 = vmul.f32 %v2336, %v2976
          %v3105 = vmul.f32 %v2337, %v2977
          %v3106 = vmul.f32 %v2338, %v2978
          %v3107 = vmul.f32 %v2339, %v2979
          %v3108 = vmul.f32 %v2340, %v2980
          %v3109 = vmul.f32 %v2341, %v2981
          %v3110 = vmul.f32 %v2342, %v2982
          %v3111 = vmul.f32 %v2343, %v2983
          %v3112 = vmul.f32 %v2344, %v2984
          %v3113 = vmul.f32 %v2345, %v2985
          %v3114 = vmul.f32 %v2346, %v2986
          %v3115 = vmul.f32 %v2347, %v2987
          %v3116 = vmul.f32 %v2348, %v2988
          %v3117 = vmul.f32 %v2349, %v2989
          %v3118 = vmul.f32 %v2350, %v2990
          %v3119 = vmul.f32 %v2351, %v2991
          %v3120 = vmul.f32 %v2352, %v2992
          %v3121 = vmul.f32 %v2353, %v2993
          %v3122 = vmul.f32 %v2354, %v2994
          %v3123 = vmul.f32 %v2355, %v2995
          %v3124 = vmul.f32 %v2356, %v2996
          %v3125 = vmul.f32 %v2357, %v2997
          %v3126 = vmul.f32 %v2358, %v2998
          %v3127 = vmul.f32 %v2359, %v2999
          %v3128 = vmul.f32 %v2360, %v3000
          %v3129 = vmul.f32 %v2361, %v3001
          %v3130 = vmul.f32 %v2362, %v3002
          %v3131 = vmul.f32 %v2363, %v3003
          %v3132 = vmul.f32 %v2364, %v3004
          %v3133 = vmul.f32 %v2365, %v3005
          %v3134 = vmul.f32 %v2366, %v3006
          %v3135 = vmul.f32 %v2367, %v3007
          %v3136 = vmul.f32 %v2368, %v3008
          %v3137 = vmul.f32 %v2369, %v3009
          %v3138 = vmul.f32 %v2370, %v3010
          %v3139 = vmul.f32 %v2371, %v3011
          %v3140 = vmul.f32 %v2372, %v3012
          %v3141 = vmul.f32 %v2373, %v3013
          %v3142 = vmul.f32 %v2374, %v3014
          %v3143 = vmul.f32 %v2375, %v3015
          %v3144 = vmul.f32 %v2376, %v3016
          %v3145 = vmul.f32 %v2377, %v3017
          %v3146 = vmul.f32 %v2378, %v3018
          %v3147 = vmul.f32 %v2379, %v3019
          %v3148 = vmul.f32 %v2380, %v3020
          %v3149 = vmul.f32 %v2381, %v3021
          %v3150 = vmul.f32 %v2382, %v3022
          %v3151 = vmul.f32 %v2383, %v3023
          %v3152 = vmul.f32 %v2384, %v3024
          %v3153 = vmul.f32 %v2385, %v3025
          %v3154 = vmul.f32 %v2386, %v3026
          %v3155 = vmul.f32 %v2387, %v3027
          %v3156 = vmul.f32 %v2388, %v3028
          %v3157 = vmul.f32 %v2389, %v3029
          %v3158 = vmul.f32 %v2390, %v3030
          %v3159 = vmul.f32 %v2391, %v3031
          %v3160 = vmul.f32 %v2392, %v3032
          %v3161 = vmul.f32 %v2393, %v3033
          %v3162 = vmul.f32 %v2394, %v3034
          %v3163 = vmul.f32 %v2395, %v3035
          %v3164 = vmul.f32 %v2396, %v3036
          %v3165 = vmul.f32 %v2397, %v3037
          %v3166 = vmul.f32 %v2398, %v3038
          %v3167 = vmul.f32 %v2399, %v3039
          %v3168 = vmul.f32 %v2400, %v3040
          %v3169 = vmul.f32 %v2401, %v3041
          %v3170 = vmul.f32 %v2402, %v3042
          %v3171 = vmul.f32 %v2403, %v3043
          %v3172 = vmul.f32 %v2404, %v3044
          %v3173 = vmul.f32 %v2405, %v3045
          %v3174 = vmul.f32 %v2406, %v3046
          %v3175 = vmul.f32 %v2407, %v3047
          %v3176 = vmul.f32 %v2408, %v3048
          %v3177 = vmul.f32 %v2409, %v3049
          %v3178 = vmul.f32 %v2410, %v3050
          %v3179 = vmul.f32 %v2411, %v3051
          %v3180 = vmul.f32 %v2412, %v3052
          %v3181 = vmul.f32 %v2413, %v3053
          %v3182 = vmul.f32 %v2414, %v3054
          %v3183 = vmul.f32 %v2415, %v3055
          %v3184 = vmul.f32 %v2416, %v3056
          %v3185 = vmul.f32 %v2417, %v3057
          %v3186 = vmul.f32 %v2418, %v3058
          %v3187 = vmul.f32 %v2419, %v3059
          %v3188 = vmul.f32 %v2420, %v3060
          %v3189 = vmul.f32 %v2421, %v3061
          %v3190 = vmul.f32 %v2422, %v3062
          %v3191 = vmul.f32 %v2423, %v3063
          %v3192 = vmul.f32 %v2424, %v3064
          %v3193 = vmul.f32 %v2425, %v3065
          %v3194 = vmul.f32 %v2426, %v3066
          %v3195 = vmul.f32 %v2427, %v3067
          %v3196 = vmul.f32 %v2428, %v3068
          %v3197 = vmul.f32 %v2429, %v3069
          %v3198 = vmul.f32 %v2430, %v3070
          %v3199 = vmul.f32 %v2431, %v3071
          %v3200 = vmul.f32 %v2432, %v3072
          %v3201 = vmul.f32 %v2433, %v3073
          %v3202 = vmul.f32 %v2434, %v3074
          %v3203 = vpack.c.bf16 %v3076, %v3075
          %v3204 = vpack.c.bf16 %v3078, %v3077
          %v3205 = vpack.c.bf16 %v3080, %v3079
          %v3206 = vpack.c.bf16 %v3082, %v3081
          %v3207 = vpack.c.bf16 %v3084, %v3083
          %v3208 = vpack.c.bf16 %v3086, %v3085
          %v3209 = vpack.c.bf16 %v3088, %v3087
          %v3210 = vpack.c.bf16 %v3090, %v3089
          %v3211 = vpack.c.bf16 %v3092, %v3091
          %v3212 = vpack.c.bf16 %v3094, %v3093
          %v3213 = vpack.c.bf16 %v3096, %v3095
          %v3214 = vpack.c.bf16 %v3098, %v3097
          %v3215 = vpack.c.bf16 %v3100, %v3099
          %v3216 = vpack.c.bf16 %v3102, %v3101
          %v3217 = vpack.c.bf16 %v3104, %v3103
          %v3218 = vpack.c.bf16 %v3106, %v3105
          %v3219 = vpack.c.bf16 %v3108, %v3107
          %v3220 = vpack.c.bf16 %v3110, %v3109
          %v3221 = vpack.c.bf16 %v3112, %v3111
          %v3222 = vpack.c.bf16 %v3114, %v3113
          %v3223 = vpack.c.bf16 %v3116, %v3115
          %v3224 = vpack.c.bf16 %v3118, %v3117
          %v3225 = vpack.c.bf16 %v3120, %v3119
          %v3226 = vpack.c.bf16 %v3122, %v3121
          %v3227 = vpack.c.bf16 %v3124, %v3123
          %v3228 = vpack.c.bf16 %v3126, %v3125
          %v3229 = vpack.c.bf16 %v3128, %v3127
          %v3230 = vpack.c.bf16 %v3130, %v3129
          %v3231 = vpack.c.bf16 %v3132, %v3131
          %v3232 = vpack.c.bf16 %v3134, %v3133
          %v3233 = vpack.c.bf16 %v3136, %v3135
          %v3234 = vpack.c.bf16 %v3138, %v3137
          %v3235 = vpack.c.bf16 %v3140, %v3139
          %v3236 = vpack.c.bf16 %v3142, %v3141
          %v3237 = vpack.c.bf16 %v3144, %v3143
          %v3238 = vpack.c.bf16 %v3146, %v3145
          %v3239 = vpack.c.bf16 %v3148, %v3147
          %v3240 = vpack.c.bf16 %v3150, %v3149
          %v3241 = vpack.c.bf16 %v3152, %v3151
          %v3242 = vpack.c.bf16 %v3154, %v3153
          %v3243 = vpack.c.bf16 %v3156, %v3155
          %v3244 = vpack.c.bf16 %v3158, %v3157
          %v3245 = vpack.c.bf16 %v3160, %v3159
          %v3246 = vpack.c.bf16 %v3162, %v3161
          %v3247 = vpack.c.bf16 %v3164, %v3163
          %v3248 = vpack.c.bf16 %v3166, %v3165
          %v3249 = vpack.c.bf16 %v3168, %v3167
          %v3250 = vpack.c.bf16 %v3170, %v3169
          %v3251 = vpack.c.bf16 %v3172, %v3171
          %v3252 = vpack.c.bf16 %v3174, %v3173
          %v3253 = vpack.c.bf16 %v3176, %v3175
          %v3254 = vpack.c.bf16 %v3178, %v3177
          %v3255 = vpack.c.bf16 %v3180, %v3179
          %v3256 = vpack.c.bf16 %v3182, %v3181
          %v3257 = vpack.c.bf16 %v3184, %v3183
          %v3258 = vpack.c.bf16 %v3186, %v3185
          %v3259 = vpack.c.bf16 %v3188, %v3187
          %v3260 = vpack.c.bf16 %v3190, %v3189
          %v3261 = vpack.c.bf16 %v3192, %v3191
          %v3262 = vpack.c.bf16 %v3194, %v3193
          %v3263 = vpack.c.bf16 %v3196, %v3195
          %v3264 = vpack.c.bf16 %v3198, %v3197
          %v3265 = vpack.c.bf16 %v3200, %v3199
          %v3266 = vpack.c.bf16 %v3202, %v3201
          %v3331 = vunpack.c.l.b16 %v3203
          %v3332 = vunpack.c.h.b16 %v3203
          %v3333 = vunpack.c.l.b16 %v3204
          %v3334 = vunpack.c.h.b16 %v3204
          %v3335 = vunpack.c.l.b16 %v3205
          %v3336 = vunpack.c.h.b16 %v3205
          %v3337 = vunpack.c.l.b16 %v3206
          %v3338 = vunpack.c.h.b16 %v3206
          %v3339 = vunpack.c.l.b16 %v3207
          %v3340 = vunpack.c.h.b16 %v3207
          %v3341 = vunpack.c.l.b16 %v3208
          %v3342 = vunpack.c.h.b16 %v3208
          %v3343 = vunpack.c.l.b16 %v3209
          %v3344 = vunpack.c.h.b16 %v3209
          %v3345 = vunpack.c.l.b16 %v3210
          %v3346 = vunpack.c.h.b16 %v3210
          %v3347 = vunpack.c.l.b16 %v3211
          %v3348 = vunpack.c.h.b16 %v3211
          %v3349 = vunpack.c.l.b16 %v3212
          %v3350 = vunpack.c.h.b16 %v3212
          %v3351 = vunpack.c.l.b16 %v3213
          %v3352 = vunpack.c.h.b16 %v3213
          %v3353 = vunpack.c.l.b16 %v3214
          %v3354 = vunpack.c.h.b16 %v3214
          %v3355 = vunpack.c.l.b16 %v3215
          %v3356 = vunpack.c.h.b16 %v3215
          %v3357 = vunpack.c.l.b16 %v3216
          %v3358 = vunpack.c.h.b16 %v3216
          %v3359 = vunpack.c.l.b16 %v3217
          %v3360 = vunpack.c.h.b16 %v3217
          %v3361 = vunpack.c.l.b16 %v3218
          %v3362 = vunpack.c.h.b16 %v3218
          %v3363 = vunpack.c.l.b16 %v3219
          %v3364 = vunpack.c.h.b16 %v3219
          %v3365 = vunpack.c.l.b16 %v3220
          %v3366 = vunpack.c.h.b16 %v3220
          %v3367 = vunpack.c.l.b16 %v3221
          %v3368 = vunpack.c.h.b16 %v3221
          %v3369 = vunpack.c.l.b16 %v3222
          %v3370 = vunpack.c.h.b16 %v3222
          %v3371 = vunpack.c.l.b16 %v3223
          %v3372 = vunpack.c.h.b16 %v3223
          %v3373 = vunpack.c.l.b16 %v3224
          %v3374 = vunpack.c.h.b16 %v3224
          %v3375 = vunpack.c.l.b16 %v3225
          %v3376 = vunpack.c.h.b16 %v3225
          %v3377 = vunpack.c.l.b16 %v3226
          %v3378 = vunpack.c.h.b16 %v3226
          %v3379 = vunpack.c.l.b16 %v3227
          %v3380 = vunpack.c.h.b16 %v3227
          %v3381 = vunpack.c.l.b16 %v3228
          %v3382 = vunpack.c.h.b16 %v3228
          %v3383 = vunpack.c.l.b16 %v3229
          %v3384 = vunpack.c.h.b16 %v3229
          %v3385 = vunpack.c.l.b16 %v3230
          %v3386 = vunpack.c.h.b16 %v3230
          %v3387 = vunpack.c.l.b16 %v3231
          %v3388 = vunpack.c.h.b16 %v3231
          %v3389 = vunpack.c.l.b16 %v3232
          %v3390 = vunpack.c.h.b16 %v3232
          %v3391 = vunpack.c.l.b16 %v3233
          %v3392 = vunpack.c.h.b16 %v3233
          %v3393 = vunpack.c.l.b16 %v3234
          %v3394 = vunpack.c.h.b16 %v3234
          %v3395 = vunpack.c.l.b16 %v3235
          %v3396 = vunpack.c.h.b16 %v3235
          %v3397 = vunpack.c.l.b16 %v3236
          %v3398 = vunpack.c.h.b16 %v3236
          %v3399 = vunpack.c.l.b16 %v3237
          %v3400 = vunpack.c.h.b16 %v3237
          %v3401 = vunpack.c.l.b16 %v3238
          %v3402 = vunpack.c.h.b16 %v3238
          %v3403 = vunpack.c.l.b16 %v3239
          %v3404 = vunpack.c.h.b16 %v3239
          %v3405 = vunpack.c.l.b16 %v3240
          %v3406 = vunpack.c.h.b16 %v3240
          %v3407 = vunpack.c.l.b16 %v3241
          %v3408 = vunpack.c.h.b16 %v3241
          %v3409 = vunpack.c.l.b16 %v3242
          %v3410 = vunpack.c.h.b16 %v3242
          %v3411 = vunpack.c.l.b16 %v3243
          %v3412 = vunpack.c.h.b16 %v3243
          %v3413 = vunpack.c.l.b16 %v3244
          %v3414 = vunpack.c.h.b16 %v3244
          %v3415 = vunpack.c.l.b16 %v3245
          %v3416 = vunpack.c.h.b16 %v3245
          %v3417 = vunpack.c.l.b16 %v3246
          %v3418 = vunpack.c.h.b16 %v3246
          %v3419 = vunpack.c.l.b16 %v3247
          %v3420 = vunpack.c.h.b16 %v3247
          %v3421 = vunpack.c.l.b16 %v3248
          %v3422 = vunpack.c.h.b16 %v3248
          %v3423 = vunpack.c.l.b16 %v3249
          %v3424 = vunpack.c.h.b16 %v3249
          %v3425 = vunpack.c.l.b16 %v3250
          %v3426 = vunpack.c.h.b16 %v3250
          %v3427 = vunpack.c.l.b16 %v3251
          %v3428 = vunpack.c.h.b16 %v3251
          %v3429 = vunpack.c.l.b16 %v3252
          %v3430 = vunpack.c.h.b16 %v3252
          %v3431 = vunpack.c.l.b16 %v3253
          %v3432 = vunpack.c.h.b16 %v3253
          %v3433 = vunpack.c.l.b16 %v3254
          %v3434 = vunpack.c.h.b16 %v3254
          %v3435 = vunpack.c.l.b16 %v3255
          %v3436 = vunpack.c.h.b16 %v3255
          %v3437 = vunpack.c.l.b16 %v3256
          %v3438 = vunpack.c.h.b16 %v3256
          %v3439 = vunpack.c.l.b16 %v3257
          %v3440 = vunpack.c.h.b16 %v3257
          %v3441 = vunpack.c.l.b16 %v3258
          %v3442 = vunpack.c.h.b16 %v3258
          %v3443 = vunpack.c.l.b16 %v3259
          %v3444 = vunpack.c.h.b16 %v3259
          %v3445 = vunpack.c.l.b16 %v3260
          %v3446 = vunpack.c.h.b16 %v3260
          %v3447 = vunpack.c.l.b16 %v3261
          %v3448 = vunpack.c.h.b16 %v3261
          %v3449 = vunpack.c.l.b16 %v3262
          %v3450 = vunpack.c.h.b16 %v3262
          %v3451 = vunpack.c.l.b16 %v3263
          %v3452 = vunpack.c.h.b16 %v3263
          %v3453 = vunpack.c.l.b16 %v3264
          %v3454 = vunpack.c.h.b16 %v3264
          %v3455 = vunpack.c.l.b16 %v3265
          %v3456 = vunpack.c.h.b16 %v3265
          %v3457 = vunpack.c.l.b16 %v3266
          %v3458 = vunpack.c.h.b16 %v3266
          %v3459 = vpack.c.b16 %v3331, %v3331
          %v3460 = vpack.c.b16 %v3332, %v3332
          %v3461 = vpack.c.b16 %v3333, %v3333
          %v3462 = vpack.c.b16 %v3334, %v3334
          %v3463 = vpack.c.b16 %v3335, %v3335
          %v3464 = vpack.c.b16 %v3336, %v3336
          %v3465 = vpack.c.b16 %v3337, %v3337
          %v3466 = vpack.c.b16 %v3338, %v3338
          %v3467 = vpack.c.b16 %v3339, %v3339
          %v3468 = vpack.c.b16 %v3340, %v3340
          %v3469 = vpack.c.b16 %v3341, %v3341
          %v3470 = vpack.c.b16 %v3342, %v3342
          %v3471 = vpack.c.b16 %v3343, %v3343
          %v3472 = vpack.c.b16 %v3344, %v3344
          %v3473 = vpack.c.b16 %v3345, %v3345
          %v3474 = vpack.c.b16 %v3346, %v3346
          %v3475 = vpack.c.b16 %v3347, %v3347
          %v3476 = vpack.c.b16 %v3348, %v3348
          %v3477 = vpack.c.b16 %v3349, %v3349
          %v3478 = vpack.c.b16 %v3350, %v3350
          %v3479 = vpack.c.b16 %v3351, %v3351
          %v3480 = vpack.c.b16 %v3352, %v3352
          %v3481 = vpack.c.b16 %v3353, %v3353
          %v3482 = vpack.c.b16 %v3354, %v3354
          %v3483 = vpack.c.b16 %v3355, %v3355
          %v3484 = vpack.c.b16 %v3356, %v3356
          %v3485 = vpack.c.b16 %v3357, %v3357
          %v3486 = vpack.c.b16 %v3358, %v3358
          %v3487 = vpack.c.b16 %v3359, %v3359
          %v3488 = vpack.c.b16 %v3360, %v3360
          %v3489 = vpack.c.b16 %v3361, %v3361
          %v3490 = vpack.c.b16 %v3362, %v3362
          %v3491 = vpack.c.b16 %v3363, %v3363
          %v3492 = vpack.c.b16 %v3364, %v3364
          %v3493 = vpack.c.b16 %v3365, %v3365
          %v3494 = vpack.c.b16 %v3366, %v3366
          %v3495 = vpack.c.b16 %v3367, %v3367
          %v3496 = vpack.c.b16 %v3368, %v3368
          %v3497 = vpack.c.b16 %v3369, %v3369
          %v3498 = vpack.c.b16 %v3370, %v3370
          %v3499 = vpack.c.b16 %v3371, %v3371
          %v3500 = vpack.c.b16 %v3372, %v3372
          %v3501 = vpack.c.b16 %v3373, %v3373
          %v3502 = vpack.c.b16 %v3374, %v3374
          %v3503 = vpack.c.b16 %v3375, %v3375
          %v3504 = vpack.c.b16 %v3376, %v3376
          %v3505 = vpack.c.b16 %v3377, %v3377
          %v3506 = vpack.c.b16 %v3378, %v3378
          %v3507 = vpack.c.b16 %v3379, %v3379
          %v3508 = vpack.c.b16 %v3380, %v3380
          %v3509 = vpack.c.b16 %v3381, %v3381
          %v3510 = vpack.c.b16 %v3382, %v3382
          %v3511 = vpack.c.b16 %v3383, %v3383
          %v3512 = vpack.c.b16 %v3384, %v3384
          %v3513 = vpack.c.b16 %v3385, %v3385
          %v3514 = vpack.c.b16 %v3386, %v3386
          %v3515 = vpack.c.b16 %v3387, %v3387
          %v3516 = vpack.c.b16 %v3388, %v3388
          %v3517 = vpack.c.b16 %v3389, %v3389
          %v3518 = vpack.c.b16 %v3390, %v3390
          %v3519 = vpack.c.b16 %v3391, %v3391
          %v3520 = vpack.c.b16 %v3392, %v3392
          %v3521 = vpack.c.b16 %v3393, %v3393
          %v3522 = vpack.c.b16 %v3394, %v3394
          %v3523 = vpack.c.b16 %v3395, %v3395
          %v3524 = vpack.c.b16 %v3396, %v3396
          %v3525 = vpack.c.b16 %v3397, %v3397
          %v3526 = vpack.c.b16 %v3398, %v3398
          %v3527 = vpack.c.b16 %v3399, %v3399
          %v3528 = vpack.c.b16 %v3400, %v3400
          %v3529 = vpack.c.b16 %v3401, %v3401
          %v3530 = vpack.c.b16 %v3402, %v3402
          %v3531 = vpack.c.b16 %v3403, %v3403
          %v3532 = vpack.c.b16 %v3404, %v3404
          %v3533 = vpack.c.b16 %v3405, %v3405
          %v3534 = vpack.c.b16 %v3406, %v3406
          %v3535 = vpack.c.b16 %v3407, %v3407
          %v3536 = vpack.c.b16 %v3408, %v3408
          %v3537 = vpack.c.b16 %v3409, %v3409
          %v3538 = vpack.c.b16 %v3410, %v3410
          %v3539 = vpack.c.b16 %v3411, %v3411
          %v3540 = vpack.c.b16 %v3412, %v3412
          %v3541 = vpack.c.b16 %v3413, %v3413
          %v3542 = vpack.c.b16 %v3414, %v3414
          %v3543 = vpack.c.b16 %v3415, %v3415
          %v3544 = vpack.c.b16 %v3416, %v3416
          %v3545 = vpack.c.b16 %v3417, %v3417
          %v3546 = vpack.c.b16 %v3418, %v3418
          %v3547 = vpack.c.b16 %v3419, %v3419
          %v3548 = vpack.c.b16 %v3420, %v3420
          %v3549 = vpack.c.b16 %v3421, %v3421
          %v3550 = vpack.c.b16 %v3422, %v3422
          %v3551 = vpack.c.b16 %v3423, %v3423
          %v3552 = vpack.c.b16 %v3424, %v3424
          %v3553 = vpack.c.b16 %v3425, %v3425
          %v3554 = vpack.c.b16 %v3426, %v3426
          %v3555 = vpack.c.b16 %v3427, %v3427
          %v3556 = vpack.c.b16 %v3428, %v3428
          %v3557 = vpack.c.b16 %v3429, %v3429
          %v3558 = vpack.c.b16 %v3430, %v3430
          %v3559 = vpack.c.b16 %v3431, %v3431
          %v3560 = vpack.c.b16 %v3432, %v3432
          %v3561 = vpack.c.b16 %v3433, %v3433
          %v3562 = vpack.c.b16 %v3434, %v3434
          %v3563 = vpack.c.b16 %v3435, %v3435
          %v3564 = vpack.c.b16 %v3436, %v3436
          %v3565 = vpack.c.b16 %v3437, %v3437
          %v3566 = vpack.c.b16 %v3438, %v3438
          %v3567 = vpack.c.b16 %v3439, %v3439
          %v3568 = vpack.c.b16 %v3440, %v3440
          %v3569 = vpack.c.b16 %v3441, %v3441
          %v3570 = vpack.c.b16 %v3442, %v3442
          %v3571 = vpack.c.b16 %v3443, %v3443
          %v3572 = vpack.c.b16 %v3444, %v3444
          %v3573 = vpack.c.b16 %v3445, %v3445
          %v3574 = vpack.c.b16 %v3446, %v3446
          %v3575 = vpack.c.b16 %v3447, %v3447
          %v3576 = vpack.c.b16 %v3448, %v3448
          %v3577 = vpack.c.b16 %v3449, %v3449
          %v3578 = vpack.c.b16 %v3450, %v3450
          %v3579 = vpack.c.b16 %v3451, %v3451
          %v3580 = vpack.c.b16 %v3452, %v3452
          %v3581 = vpack.c.b16 %v3453, %v3453
          %v3582 = vpack.c.b16 %v3454, %v3454
          %v3583 = vpack.c.b16 %v3455, %v3455
          %v3584 = vpack.c.b16 %v3456, %v3456
          %v3585 = vpack.c.b16 %v3457, %v3457
          %v3586 = vpack.c.b16 %v3458, %v3458
          %3715 = vst [vmem:[%s285] sm:$0xf] %v3459
          %3716 = vst [vmem:[%s285 + $0x4] sm:$0xf] %v3460
          %3717 = vst [vmem:[%s285 + $0x8] sm:$0xf] %v3461
          %3718 = vst [vmem:[%s285 + $0xc] sm:$0xf] %v3462
          %3719 = vst [vmem:[%s285 + $0x10] sm:$0xf] %v3463
          %3720 = vst [vmem:[%s285 + $0x14] sm:$0xf] %v3464
          %3721 = vst [vmem:[%s285 + $0x18] sm:$0xf] %v3465
          %3722 = vst [vmem:[%s285 + $0x1c] sm:$0xf] %v3466
          %3723 = vst [vmem:[%s285 + $0x20] sm:$0xf] %v3467
          %3724 = vst [vmem:[%s285 + $0x24] sm:$0xf] %v3468
          %3725 = vst [vmem:[%s285 + $0x28] sm:$0xf] %v3469
          %3726 = vst [vmem:[%s285 + $0x2c] sm:$0xf] %v3470
          %3727 = vst [vmem:[%s285 + $0x30] sm:$0xf] %v3471
          %3728 = vst [vmem:[%s285 + $0x34] sm:$0xf] %v3472
          %3729 = vst [vmem:[%s285 + $0x38] sm:$0xf] %v3473
          %3730 = vst [vmem:[%s285 + $0x3c] sm:$0xf] %v3474
          %3731 = vst [vmem:[%s285 + $0x40] sm:$0xf] %v3475
          %3732 = vst [vmem:[%s285 + $0x44] sm:$0xf] %v3476
          %3733 = vst [vmem:[%s285 + $0x48] sm:$0xf] %v3477
          %3734 = vst [vmem:[%s285 + $0x4c] sm:$0xf] %v3478
          %3735 = vst [vmem:[%s285 + $0x50] sm:$0xf] %v3479
          %3736 = vst [vmem:[%s285 + $0x54] sm:$0xf] %v3480
          %3737 = vst [vmem:[%s285 + $0x58] sm:$0xf] %v3481
          %3738 = vst [vmem:[%s285 + $0x5c] sm:$0xf] %v3482
          %3739 = vst [vmem:[%s285 + $0x60] sm:$0xf] %v3483
          %3740 = vst [vmem:[%s285 + $0x64] sm:$0xf] %v3484
          %3741 = vst [vmem:[%s285 + $0x68] sm:$0xf] %v3485
          %3742 = vst [vmem:[%s285 + $0x6c] sm:$0xf] %v3486
          %3743 = vst [vmem:[%s285 + $0x70] sm:$0xf] %v3487
          %3744 = vst [vmem:[%s285 + $0x74] sm:$0xf] %v3488
          %3745 = vst [vmem:[%s285 + $0x78] sm:$0xf] %v3489
          %3746 = vst [vmem:[%s285 + $0x7c] sm:$0xf] %v3490
          %3747 = vst [vmem:[%s285 + $0x80] sm:$0xf] %v3491
          %3748 = vst [vmem:[%s285 + $0x84] sm:$0xf] %v3492
          %3749 = vst [vmem:[%s285 + $0x88] sm:$0xf] %v3493
          %3750 = vst [vmem:[%s285 + $0x8c] sm:$0xf] %v3494
          %3751 = vst [vmem:[%s285 + $0x90] sm:$0xf] %v3495
          %3752 = vst [vmem:[%s285 + $0x94] sm:$0xf] %v3496
          %3753 = vst [vmem:[%s285 + $0x98] sm:$0xf] %v3497
          %3754 = vst [vmem:[%s285 + $0x9c] sm:$0xf] %v3498
          %3755 = vst [vmem:[%s285 + $0xa0] sm:$0xf] %v3499
          %3756 = vst [vmem:[%s285 + $0xa4] sm:$0xf] %v3500
          %3757 = vst [vmem:[%s285 + $0xa8] sm:$0xf] %v3501
          %3758 = vst [vmem:[%s285 + $0xac] sm:$0xf] %v3502
          %3759 = vst [vmem:[%s285 + $0xb0] sm:$0xf] %v3503
          %3760 = vst [vmem:[%s285 + $0xb4] sm:$0xf] %v3504
          %3761 = vst [vmem:[%s285 + $0xb8] sm:$0xf] %v3505
          %3762 = vst [vmem:[%s285 + $0xbc] sm:$0xf] %v3506
          %3763 = vst [vmem:[%s285 + $0xc0] sm:$0xf] %v3507
          %3764 = vst [vmem:[%s285 + $0xc4] sm:$0xf] %v3508
          %3765 = vst [vmem:[%s285 + $0xc8] sm:$0xf] %v3509
          %3766 = vst [vmem:[%s285 + $0xcc] sm:$0xf] %v3510
          %3767 = vst [vmem:[%s285 + $0xd0] sm:$0xf] %v3511
          %3768 = vst [vmem:[%s285 + $0xd4] sm:$0xf] %v3512
          %3769 = vst [vmem:[%s285 + $0xd8] sm:$0xf] %v3513
          %3770 = vst [vmem:[%s285 + $0xdc] sm:$0xf] %v3514
          %3771 = vst [vmem:[%s285 + $0xe0] sm:$0xf] %v3515
          %3772 = vst [vmem:[%s285 + $0xe4] sm:$0xf] %v3516
          %3773 = vst [vmem:[%s285 + $0xe8] sm:$0xf] %v3517
          %3774 = vst [vmem:[%s285 + $0xec] sm:$0xf] %v3518
          %3775 = vst [vmem:[%s285 + $0xf0] sm:$0xf] %v3519
          %3776 = vst [vmem:[%s285 + $0xf4] sm:$0xf] %v3520
          %3777 = vst [vmem:[%s285 + $0xf8] sm:$0xf] %v3521
          %3778 = vst [vmem:[%s285 + $0xfc] sm:$0xf] %v3522
          %3779 = vst [vmem:[%s285 + $0x100] sm:$0xf] %v3523
          %3780 = vst [vmem:[%s285 + $0x104] sm:$0xf] %v3524
          %3781 = vst [vmem:[%s285 + $0x108] sm:$0xf] %v3525
          %3782 = vst [vmem:[%s285 + $0x10c] sm:$0xf] %v3526
          %3783 = vst [vmem:[%s285 + $0x110] sm:$0xf] %v3527
          %3784 = vst [vmem:[%s285 + $0x114] sm:$0xf] %v3528
          %3785 = vst [vmem:[%s285 + $0x118] sm:$0xf] %v3529
          %3786 = vst [vmem:[%s285 + $0x11c] sm:$0xf] %v3530
          %3787 = vst [vmem:[%s285 + $0x120] sm:$0xf] %v3531
          %3788 = vst [vmem:[%s285 + $0x124] sm:$0xf] %v3532
          %3789 = vst [vmem:[%s285 + $0x128] sm:$0xf] %v3533
          %3790 = vst [vmem:[%s285 + $0x12c] sm:$0xf] %v3534
          %3791 = vst [vmem:[%s285 + $0x130] sm:$0xf] %v3535
          %3792 = vst [vmem:[%s285 + $0x134] sm:$0xf] %v3536
          %3793 = vst [vmem:[%s285 + $0x138] sm:$0xf] %v3537
          %3794 = vst [vmem:[%s285 + $0x13c] sm:$0xf] %v3538
          %3795 = vst [vmem:[%s285 + $0x140] sm:$0xf] %v3539
          %3796 = vst [vmem:[%s285 + $0x144] sm:$0xf] %v3540
          %3797 = vst [vmem:[%s285 + $0x148] sm:$0xf] %v3541
          %3798 = vst [vmem:[%s285 + $0x14c] sm:$0xf] %v3542
          %3799 = vst [vmem:[%s285 + $0x150] sm:$0xf] %v3543
          %3800 = vst [vmem:[%s285 + $0x154] sm:$0xf] %v3544
          %3801 = vst [vmem:[%s285 + $0x158] sm:$0xf] %v3545
          %3802 = vst [vmem:[%s285 + $0x15c] sm:$0xf] %v3546
          %3803 = vst [vmem:[%s285 + $0x160] sm:$0xf] %v3547
          %3804 = vst [vmem:[%s285 + $0x164] sm:$0xf] %v3548
          %3805 = vst [vmem:[%s285 + $0x168] sm:$0xf] %v3549
          %3806 = vst [vmem:[%s285 + $0x16c] sm:$0xf] %v3550
          %3807 = vst [vmem:[%s285 + $0x170] sm:$0xf] %v3551
          %3808 = vst [vmem:[%s285 + $0x174] sm:$0xf] %v3552
          %3809 = vst [vmem:[%s285 + $0x178] sm:$0xf] %v3553
          %3810 = vst [vmem:[%s285 + $0x17c] sm:$0xf] %v3554
          %3811 = vst [vmem:[%s285 + $0x180] sm:$0xf] %v3555
          %3812 = vst [vmem:[%s285 + $0x184] sm:$0xf] %v3556
          %3813 = vst [vmem:[%s285 + $0x188] sm:$0xf] %v3557
          %3814 = vst [vmem:[%s285 + $0x18c] sm:$0xf] %v3558
          %3815 = vst [vmem:[%s285 + $0x190] sm:$0xf] %v3559
          %3816 = vst [vmem:[%s285 + $0x194] sm:$0xf] %v3560
          %3817 = vst [vmem:[%s285 + $0x198] sm:$0xf] %v3561
          %3818 = vst [vmem:[%s285 + $0x19c] sm:$0xf] %v3562
          %3819 = vst [vmem:[%s285 + $0x1a0] sm:$0xf] %v3563
          %3820 = vst [vmem:[%s285 + $0x1a4] sm:$0xf] %v3564
          %3821 = vst [vmem:[%s285 + $0x1a8] sm:$0xf] %v3565
          %3822 = vst [vmem:[%s285 + $0x1ac] sm:$0xf] %v3566
          %3823 = vst [vmem:[%s285 + $0x1b0] sm:$0xf] %v3567
          %3824 = vst [vmem:[%s285 + $0x1b4] sm:$0xf] %v3568
          %3825 = vst [vmem:[%s285 + $0x1b8] sm:$0xf] %v3569
          %3826 = vst [vmem:[%s285 + $0x1bc] sm:$0xf] %v3570
          %3827 = vst [vmem:[%s285 + $0x1c0] sm:$0xf] %v3571
          %3828 = vst [vmem:[%s285 + $0x1c4] sm:$0xf] %v3572
          %3829 = vst [vmem:[%s285 + $0x1c8] sm:$0xf] %v3573
          %3830 = vst [vmem:[%s285 + $0x1cc] sm:$0xf] %v3574
          %3831 = vst [vmem:[%s285 + $0x1d0] sm:$0xf] %v3575
          %3832 = vst [vmem:[%s285 + $0x1d4] sm:$0xf] %v3576
          %3833 = vst [vmem:[%s285 + $0x1d8] sm:$0xf] %v3577
          %3834 = vst [vmem:[%s285 + $0x1dc] sm:$0xf] %v3578
          %3835 = vst [vmem:[%s285 + $0x1e0] sm:$0xf] %v3579
          %3836 = vst [vmem:[%s285 + $0x1e4] sm:$0xf] %v3580
          %3837 = vst [vmem:[%s285 + $0x1e8] sm:$0xf] %v3581
          %3838 = vst [vmem:[%s285 + $0x1ec] sm:$0xf] %v3582
          %3839 = vst [vmem:[%s285 + $0x1f0] sm:$0xf] %v3583
          %3840 = vst [vmem:[%s285 + $0x1f4] sm:$0xf] %v3584
          %3841 = vst [vmem:[%s285 + $0x1f8] sm:$0xf] %v3585
          %3842 = vst [vmem:[%s285 + $0x1fc] sm:$0xf] %v3586
        $region44: #{stem_conv.1} parent=35 // pred_fallthru
          _
        %s3843 = sand.u32 %s166, 1
        %s3844 = scalar_lea.sflag [#allocation4], %s3843
        %s3845 = sand.u32 %s166, 1
        %s3846 = smul.addr %s3845, 512
        %s3847 = scalar_lea.vmem [#allocation3], %s3846
        // Predicated region
        $region45: #{stem_conv.1} parent=35 // pred_check
          %p3848 = pneg %p176
        $region46: #{stem_conv.1} parent=35 // pred_check_branch
          %3850 = sbr.rel (%p3848) target = $region48
        $region47: #{stem_conv.1} parent=35 // pred_region
          %s3851 = smul.u32 128, %s25
          %s3853 = ssub.s32 8192, 8192
          %3854 = vsyncadd %s3844, %s3853
          %s3855 = sadd.s32 %s26, %s3851
          %s3856 = smul.addr %s24, 256
          %s3857 = sadd.s32 %s3855, %s3856
          %s3858 = smul.addr %s3857, 64
          %s3859 = scalar_lea.hbm %s4, %s3858
          %s3860 = sshll.u32 %s3847, 4
          %s3861 = int_to_ptr.vmem [resolvable:$true] %s3860
          %3866 = dma.vmem_to_hbm [thread:$0]  %s3861, 8192, %s3859, %s3844, 64, 64, 4
        $region48: #{stem_conv.1} parent=35 // pred_fallthru
          _
      $region36: #{stem_conv.1} parent=5 // pred_fallthru
        _
      %p3867 = scmp.le.s32.totalorder 2, %s13
      // Predicated region
      $region49: #{stem_conv.1} parent=5 // pred_check
        %p3868 = pneg %p3867
      $region50: #{stem_conv.1} parent=5 // pred_check_branch
        %3870 = sbr.rel (%p3868) target = $region52
      $region51: #{stem_conv.1} parent=5 // pred_region
        %s3871 = ssub.s32 %s13, 2
        // Predicated region
        $region53: #{stem_conv.1} parent=51 // pred_check
          %p3872 = pneg %p182
        $region54: #{stem_conv.1} parent=51 // pred_check_branch
          %3874 = sbr.rel (%p3872) target = $region56
        $region55: #{stem_conv.1} parent=51 // pred_region
          %s3875 = sand.u32 %s167, 1
          %s3876 = scalar_lea.sflag [#allocation4], %s3875
          %s3877 = sand.u32 %s167, 1
          %s3878 = smul.addr %s3877, 512
          %s3879 = scalar_lea.vmem [#allocation3], %s3878
          %3880 = dma.done %s3876, 8192
        $region56: #{stem_conv.1} parent=51 // pred_fallthru
          _
      $region52: #{stem_conv.1} parent=5 // pred_fallthru
        _
    $region6: #{stem_conv.1} parent=1 // loop_footer
      %s17 = sadd.s32 1, %s13
    $region7: #{stem_conv.1} parent=1 // loop_footer_branch
      %12 = sbr.rel target = $region3
    $region8: #{stem_conv.1} parent=1 // loop_exit
      _
    %3881 = vsyncpa [#allocation4], 1
    %s3882 = scalar_lea.sflag [#allocation4], 1
    %3883 = vsyncpa %s3882, 1

</llo_original>
